<compile_context>
chip_gen: v6e
topology: v6e:2x2x1
jax: 0.10.0
libtpu: 0.0.40
codegen_flags: <defaults>
</compile_context>

<pallas_src>
import jax
import jax.numpy as jnp
from jax.experimental import pallas as pl
from jax.experimental.pallas import tpu as pltpu

HIDDEN = 768
NUM_CLASSES = 3
CLS_PAD = 128          # lane-dense classifier width (real classes in cols 0:3)
MAX_TILE_N = 256       # rows per grid step for large batches


def _round_up(n, m):
    return ((n + m - 1) // m) * m


def tagger_lstm_kernel(x_ref, w_ih_ref, b_gates_ref, w_cls_ref, b_cls_ref, out_ref):
    # x tile in bf16 so both MXU operands are native bf16 (f32 accumulate).
    x = x_ref[...].astype(jnp.bfloat16)                                  # (TN, 768)

    # ---- LSTM single step, h0 = c0 = 0, f-gate already dropped from the packed weights ----
    gates = jnp.dot(x, w_ih_ref[...], preferred_element_type=jnp.float32)  # (TN, 2304)
    gates = gates + b_gates_ref[...]                                     # gate order: i | g | o

    i_g = jax.nn.sigmoid(gates[:, 0 * HIDDEN:1 * HIDDEN])
    g_g = jnp.tanh(      gates[:, 1 * HIDDEN:2 * HIDDEN])
    o_g = jax.nn.sigmoid(gates[:, 2 * HIDDEN:3 * HIDDEN])

    h = o_g * jnp.tanh(i_g * g_g)                                        # (TN, 768) f32

    # ---- classifier head (zero-padded to 128 lanes -> unmasked stores) ----
    out_ref[...] = (jnp.dot(h.astype(jnp.bfloat16), w_cls_ref[...],
                            preferred_element_type=jnp.float32)
                    + b_cls_ref[...])                                    # (TN, 128)


def init_params(key):
    """Deterministic init mirroring PyTorch default uniform(-1/sqrt(H), 1/sqrt(H))."""
    k = 1.0 / jnp.sqrt(jnp.float32(HIDDEN))
    keys = jax.random.split(key, 6)
    return {
        "w_ih":  jax.random.uniform(keys[0], (4 * HIDDEN, HIDDEN), jnp.float32, -k, k),
        "w_hh":  jax.random.uniform(keys[1], (4 * HIDDEN, HIDDEN), jnp.float32, -k, k),  # unused: h0 == 0
        "b_ih":  jax.random.uniform(keys[2], (4 * HIDDEN,), jnp.float32, -k, k),
        "b_hh":  jax.random.uniform(keys[3], (4 * HIDDEN,), jnp.float32, -k, k),
        "w_cls": jax.random.uniform(keys[4], (NUM_CLASSES, HIDDEN), jnp.float32, -k, k),
        "b_cls": jax.random.uniform(keys[5], (NUM_CLASSES,), jnp.float32, -k, k),
    }


def prepare_params(params):
    """One-time weight prep (transpose, drop f-gate, bf16 cast, lane-pad classifier)."""
    H = HIDDEN
    w_ih_t = params["w_ih"].T                                            # (768, 3072), cols i|f|g|o
    w_igo = jnp.concatenate(
        [w_ih_t[:, 0 * H:1 * H], w_ih_t[:, 2 * H:3 * H], w_ih_t[:, 3 * H:4 * H]], axis=1)
    b = params["b_ih"] + params["b_hh"]
    b_igo = jnp.concatenate([b[0 * H:1 * H], b[2 * H:3 * H], b[3 * H:4 * H]]).reshape(1, 3 * H)

    w_cls_pad = jnp.zeros((H, CLS_PAD), jnp.bfloat16)
    w_cls_pad = w_cls_pad.at[:, :NUM_CLASSES].set(params["w_cls"].T.astype(jnp.bfloat16))
    b_cls_pad = jnp.zeros((1, CLS_PAD), jnp.float32)
    b_cls_pad = b_cls_pad.at[0, :NUM_CLASSES].set(params["b_cls"])

    return {
        "w_ih":    w_igo.astype(jnp.bfloat16),     # (768, 2304) bf16  (~3.4 MiB)
        "b_gates": b_igo.astype(jnp.float32),      # (1, 2304)   f32
        "w_cls":   w_cls_pad,                      # (768, 128)  bf16
        "b_cls":   b_cls_pad,                      # (1, 128)    f32
    }


def tagger_lstm_forward(x, prepared):
    N = x.shape[0]
    tile_n = min(MAX_TILE_N, _round_up(N, 8))
    padded_n = _round_up(N, tile_n)
    if padded_n != N:
        x = jnp.pad(x, ((0, padded_n - N), (0, 0)))
    grid_n = padded_n // tile_n

    cost = pl.CostEstimate(
        flops=2 * padded_n * HIDDEN * (3 * HIDDEN + CLS_PAD),
        transcendentals=4 * padded_n * HIDDEN,
        bytes_accessed=(HIDDEN * 3 * HIDDEN * 2            # W_ih bf16
                        + HIDDEN * CLS_PAD * 2             # W_cls bf16
                        + padded_n * HIDDEN * 4            # x f32
                        + padded_n * CLS_PAD * 4),         # out f32
    )

    out = pl.pallas_call(
        tagger_lstm_kernel,
        out_shape=jax.ShapeDtypeStruct((padded_n, CLS_PAD), jnp.float32),
        grid=(grid_n,),
        in_specs=[
            pl.BlockSpec((tile_n, HIDDEN),          lambda i: (i, 0)),
            pl.BlockSpec((HIDDEN, 3 * HIDDEN),      lambda i: (0, 0)),   # VMEM-resident
            pl.BlockSpec((1, 3 * HIDDEN),           lambda i: (0, 0)),
            pl.BlockSpec((HIDDEN, CLS_PAD),         lambda i: (0, 0)),
            pl.BlockSpec((1, CLS_PAD),              lambda i: (0, 0)),
        ],
        out_specs=pl.BlockSpec((tile_n, CLS_PAD),   lambda i: (i, 0)),
        compiler_params=pltpu.CompilerParams(
            dimension_semantics=("parallel",),
            vmem_limit_bytes=32 << 20,
        ),
        cost_estimate=cost,
    )(x, prepared["w_ih"], prepared["b_gates"], prepared["w_cls"], prepared["b_cls"])

    return out[:N, :NUM_CLASSES]


def reference_forward(x, params):
    """Pure-JAX f32 reference of the PyTorch forward."""
    gates = x @ params["w_ih"].T + params["b_ih"] + params["b_hh"]
    i_g = jax.nn.sigmoid(gates[:, 0 * HIDDEN:1 * HIDDEN])
    g_g = jnp.tanh(gates[:, 2 * HIDDEN:3 * HIDDEN])
    o_g = jax.nn.sigmoid(gates[:, 3 * HIDDEN:4 * HIDDEN])
    h = o_g * jnp.tanh(i_g * g_g)
    return h @ params["w_cls"].T + params["b_cls"]


if __name__ == "__main__":
    key = jax.random.PRNGKey(0)
    k_params, k_x = jax.random.split(key)

    params = init_params(k_params)
    prepared = prepare_params(params)           # one-time prep, not per-call

    N = 8                                       # batch of 8 token vectors, each 768-d
    x = jax.random.normal(k_x, (N, HIDDEN), jnp.float32)

    out = tagger_lstm_forward(x, prepared)
    out = jax.block_until_ready(out)

    ref = reference_forward(x, params)
    assert out.shape == (N, NUM_CLASSES)
    # bf16 weights -> relaxed tolerance vs the f32 reference
    assert jnp.allclose(out, ref, rtol=2e-2, atol=2e-2), "mismatch vs pure-JAX reference"

    print("KERNEL_OK")
</pallas_src>

<mosaic_0001>
module attributes {stable_mosaic.version = 11 : i64} {
  func.func @tagger_lstm_kernel(%arg0: i32, %arg1: memref<8x768xf32, #tpu.memory_space<vmem>>, %arg2: memref<768x2304xbf16, #tpu.memory_space<vmem>>, %arg3: memref<1x2304xf32, #tpu.memory_space<vmem>>, %arg4: memref<768x128xbf16, #tpu.memory_space<vmem>>, %arg5: memref<1x128xf32, #tpu.memory_space<vmem>>, %arg6: memref<8x128xf32, #tpu.memory_space<vmem>>) attributes {dimension_semantics = [#tpu.dimension_semantics<parallel>], iteration_bounds = array<i64: 1>, scalar_prefetch = 0 : i64, scratch_operands = 0 : i64, tpu.core_type = #tpu.core_type<tc>, window_params = [{transform_indices = @transform_0, window_bounds = array<i64: 8, 768>}, {pipeline_mode = #tpu.pipeline_mode<synchronous>, transform_indices = @transform_1, window_bounds = array<i64: 768, 2304>}, {pipeline_mode = #tpu.pipeline_mode<synchronous>, transform_indices = @transform_2, window_bounds = array<i64: 1, 2304>}, {pipeline_mode = #tpu.pipeline_mode<synchronous>, transform_indices = @transform_3, window_bounds = array<i64: 768, 128>}, {pipeline_mode = #tpu.pipeline_mode<synchronous>, transform_indices = @transform_4, window_bounds = array<i64: 1, 128>}, {transform_indices = @transform_5, window_bounds = array<i64: 8, 128>}]} {
    %c0 = arith.constant 0 : index
    %c0_0 = arith.constant 0 : index
    %0 = vector.load %arg1[%c0, %c0_0] : memref<8x768xf32, #tpu.memory_space<vmem>>, vector<8x768xf32>
    %1 = arith.truncf %0 : vector<8x768xf32> to vector<8x768xbf16>
    %c0_1 = arith.constant 0 : index
    %c0_2 = arith.constant 0 : index
    %2 = vector.load %arg2[%c0_1, %c0_2] : memref<768x2304xbf16, #tpu.memory_space<vmem>>, vector<768x2304xbf16>
    %cst = arith.constant dense<0.000000e+00> : vector<8x2304xf32>
    %3 = tpu.matmul %1, %2, %cst {dimension_numbers = #tpu.dot_dimension_numbers<[1], [0], [0], [1], [0, 0, 1, 1], [], []>} : vector<8x768xbf16>, vector<768x2304xbf16>, vector<8x2304xf32> -> vector<8x2304xf32>
    %c0_3 = arith.constant 0 : index
    %c0_4 = arith.constant 0 : index
    %4 = vector.load %arg3[%c0_3, %c0_4] : memref<1x2304xf32, #tpu.memory_space<vmem>>, vector<1x2304xf32>
    %5 = vector.broadcast %4 : vector<1x2304xf32> to vector<8x2304xf32>
    %6 = arith.addf %3, %5 : vector<8x2304xf32>
    %7 = vector.extract_strided_slice %6 {offsets = [0, 0], sizes = [8, 768], strides = [1, 1]} : vector<8x2304xf32> to vector<8x768xf32>
    %8 = arith.negf %7 : vector<8x768xf32>
    %9 = math.exp %8 : vector<8x768xf32>
    %cst_5 = arith.constant 1.000000e+00 : f32
    %10 = vector.broadcast %cst_5 : f32 to vector<8x768xf32>
    %11 = arith.addf %10, %9 : vector<8x768xf32>
    %12 = arith.divf %10, %11 : vector<8x768xf32>
    %13 = vector.extract_strided_slice %6 {offsets = [0, 768], sizes = [8, 768], strides = [1, 1]} : vector<8x2304xf32> to vector<8x768xf32>
    %14 = math.tanh %13 : vector<8x768xf32>
    %15 = vector.extract_strided_slice %6 {offsets = [0, 1536], sizes = [8, 768], strides = [1, 1]} : vector<8x2304xf32> to vector<8x768xf32>
    %16 = arith.negf %15 : vector<8x768xf32>
    %17 = math.exp %16 : vector<8x768xf32>
    %cst_6 = arith.constant 1.000000e+00 : f32
    %18 = vector.broadcast %cst_6 : f32 to vector<8x768xf32>
    %19 = arith.addf %18, %17 : vector<8x768xf32>
    %20 = arith.divf %18, %19 : vector<8x768xf32>
    %21 = arith.mulf %12, %14 : vector<8x768xf32>
    %22 = math.tanh %21 : vector<8x768xf32>
    %23 = arith.mulf %20, %22 : vector<8x768xf32>
    %24 = arith.truncf %23 : vector<8x768xf32> to vector<8x768xbf16>
    %c0_7 = arith.constant 0 : index
    %c0_8 = arith.constant 0 : index
    %25 = vector.load %arg4[%c0_7, %c0_8] : memref<768x128xbf16, #tpu.memory_space<vmem>>, vector<768x128xbf16>
    %cst_9 = arith.constant dense<0.000000e+00> : vector<8x128xf32>
    %26 = tpu.matmul %24, %25, %cst_9 {dimension_numbers = #tpu.dot_dimension_numbers<[1], [0], [0], [1], [0, 0, 1, 1], [], []>} : vector<8x768xbf16>, vector<768x128xbf16>, vector<8x128xf32> -> vector<8x128xf32>
    %c0_10 = arith.constant 0 : index
    %c0_11 = arith.constant 0 : index
    %27 = vector.load %arg5[%c0_10, %c0_11] : memref<1x128xf32, #tpu.memory_space<vmem>>, vector<1x128xf32>
    %28 = vector.broadcast %27 : vector<1x128xf32> to vector<8x128xf32>
    %29 = arith.addf %26, %28 : vector<8x128xf32>
    %c0_12 = arith.constant 0 : index
    %c0_13 = arith.constant 0 : index
    %30 = vector.load %arg6[%c0_12, %c0_13] : memref<8x128xf32, #tpu.memory_space<vmem>>, vector<8x128xf32>
    tpu.vector_store %arg6[%c0_12, %c0_13], %29 {strides = array<i32>} : memref<8x128xf32, #tpu.memory_space<vmem>>, vector<8x128xf32>,
    return
  }
  func.func @transform_0(%arg0: i32) -> (i32, i32) {
    %c0_i32 = arith.constant 0 : i32
    %c0_i32_0 = arith.constant 0 : i32
    return %arg0, %c0_i32 : i32, i32
  }
  func.func @transform_1(%arg0: i32) -> (i32, i32) {
    %c0_i32 = arith.constant 0 : i32
    %c0_i32_0 = arith.constant 0 : i32
    %c0_i32_1 = arith.constant 0 : i32
    return %c0_i32, %c0_i32_0 : i32, i32
  }
  func.func @transform_2(%arg0: i32) -> (i32, i32) {
    %c0_i32 = arith.constant 0 : i32
    %c0_i32_0 = arith.constant 0 : i32
    %c0_i32_1 = arith.constant 0 : i32
    return %c0_i32, %c0_i32_0 : i32, i32
  }
  func.func @transform_3(%arg0: i32) -> (i32, i32) {
    %c0_i32 = arith.constant 0 : i32
    %c0_i32_0 = arith.constant 0 : i32
    %c0_i32_1 = arith.constant 0 : i32
    return %c0_i32, %c0_i32_0 : i32, i32
  }
  func.func @transform_4(%arg0: i32) -> (i32, i32) {
    %c0_i32 = arith.constant 0 : i32
    %c0_i32_0 = arith.constant 0 : i32
    %c0_i32_1 = arith.constant 0 : i32
    return %c0_i32, %c0_i32_0 : i32, i32
  }
  func.func @transform_5(%arg0: i32) -> (i32, i32) {
    %c0_i32 = arith.constant 0 : i32
    %c0_i32_0 = arith.constant 0 : i32
    return %arg0, %c0_i32 : i32, i32
  }
}

</mosaic_0001>

<llo_original>
// kernel: tpu_custom_call.1
$region0: #{tpu_custom_call.1}
  #allocation0 [shape = 'u32[]', space=smem, size = 0x4, offset = 0x4, fixed_abs, tag = 'smem constant byte address 0x4 - core index']
  #allocation1 [shape = 'u32[144,128]{1,0:T(1,128)}', space=vmem, size = 0x12000, scoped, tag = 'internal scratch']
  %s0 = inlined_call_operand.hbm [shape: f32[8,768], index: 0, kind: input, shape index: {}]
  %s1 = inlined_call_operand.hbm [shape: bf16[768,2304], index: 1, kind: input, shape index: {}]
  %s2 = inlined_call_operand.hbm [shape: f32[1,2304], index: 2, kind: input, shape index: {}]
  %s3 = inlined_call_operand.hbm [shape: bf16[768,128], index: 3, kind: input, shape index: {}]
  %s4 = inlined_call_operand.hbm [shape: f32[1,128], index: 4, kind: input, shape index: {}]
  %s5 = inlined_call_operand.hbm [shape: f32[8,128], index: 5, kind: output, shape index: {}]
  %s6 = sld [smem:[#allocation0]]
  $region50: #{tpu_custom_call.1} parent=0
    _
  %s8 = ssub.s32 1, %s6
  %s9 = scalar_select 0, %s8, %s6
  $region1: #{tpu_custom_call.1} parent=0
    #allocation2 [shape = 'u8[24576]{0}', space=vmem, size = 0x6000, scoped, tag = 'input window, operand 0, single buffered']
    #allocation3 [shape = 's32[1]{0}', space=sflag, size = 0x4, scoped, tag = 'scoped memory for tpu_custom_call.1']
    #allocation4 [shape = 's32[1]{0}', space=sflag, size = 0x4, scoped, tag = 'scoped memory for tpu_custom_call.1']
    #allocation5 [shape = 'u8[3538944]{0}', space=vmem, size = 0x360000, scoped, tag = 'input window, operand 1, single buffered']
    #allocation6 [shape = 's32[1]{0}', space=sflag, size = 0x4, scoped, tag = 'scoped memory for tpu_custom_call.1']
    #allocation7 [shape = 'u8[9216]{0}', space=vmem, size = 0x2400, scoped, tag = 'input window, operand 2, single buffered']
    #allocation8 [shape = 'u8[196608]{0}', space=vmem, size = 0x30000, scoped, tag = 'input window, operand 3, single buffered']
    #allocation9 [shape = 's32[1]{0}', space=sflag, size = 0x4, scoped, tag = 'scoped memory for tpu_custom_call.1']
    #allocation10 [shape = 'u8[512]{0}', space=vmem, size = 0x400, scoped, tag = 'input window, operand 4, single buffered']
    #allocation11 [shape = 'u8[4096]{0}', space=vmem, size = 0x1000, scoped, tag = 'output window, operand 0, single buffered']
    %10 = vsyncpa [#allocation3], 0
    %11 = vsyncpa [#allocation6], 0
    %12 = vsyncpa [#allocation9], 0
    %13 = vsyncpa [#allocation4], 0
    // Predicated region
    $region2: #{tpu_custom_call.1} parent=1 // pred_check
      _
    $region3: #{tpu_custom_call.1} parent=1 // pred_check_branch
      %15 = sbr.rel (0) target = $region5
    $region4: #{tpu_custom_call.1} parent=1 // pred_region
      %s17 = ssub.s32 768, 768
      %18 = vsyncadd [#allocation3], %s17
      %s20 = sshll.u32 [#allocation2], 4
      %s21 = int_to_ptr.vmem [resolvable:$true] %s20
      %23 = dma.hbm_to_vmem [thread:$0]  %s0, 768, %s21, [#allocation3]
    $region5: #{tpu_custom_call.1} parent=1 // pred_fallthru
      _
    // Predicated region
    $region6: #{tpu_custom_call.1} parent=1 // pred_check
      _
    $region7: #{tpu_custom_call.1} parent=1 // pred_check_branch
      %25 = sbr.rel (0) target = $region9
    $region8: #{tpu_custom_call.1} parent=1 // pred_region
      %s27 = ssub.s32 110592, 110592
      %28 = vsyncadd [#allocation6], %s27
      %s29 = sshll.u32 [#allocation5], 4
      %s30 = int_to_ptr.vmem [resolvable:$true] %s29
      %35 = dma.hbm_to_vmem [thread:$0]  %s1, 110592, %s30, [#allocation6], 1152, 1152, 72
    $region9: #{tpu_custom_call.1} parent=1 // pred_fallthru
      _
    // Predicated region
    $region10: #{tpu_custom_call.1} parent=1 // pred_check
      _
    $region11: #{tpu_custom_call.1} parent=1 // pred_check_branch
      %37 = sbr.rel (0) target = $region13
    $region12: #{tpu_custom_call.1} parent=1 // pred_region
      %s39 = ssub.s32 288, 288
      %40 = vsyncadd [#allocation6], %s39
      %s42 = sshll.u32 [#allocation7], 4
      %s43 = int_to_ptr.vmem [resolvable:$true] %s42
      %45 = dma.hbm_to_vmem [thread:$0]  %s2, 288, %s43, [#allocation6]
    $region13: #{tpu_custom_call.1} parent=1 // pred_fallthru
      _
    // Predicated region
    $region14: #{tpu_custom_call.1} parent=1 // pred_check
      _
    $region15: #{tpu_custom_call.1} parent=1 // pred_check_branch
      %47 = sbr.rel (0) target = $region17
    $region16: #{tpu_custom_call.1} parent=1 // pred_region
      %s49 = ssub.s32 6144, 6144
      %50 = vsyncadd [#allocation9], %s49
      %s51 = sshll.u32 [#allocation8], 4
      %s52 = int_to_ptr.vmem [resolvable:$true] %s51
      %57 = dma.hbm_to_vmem [thread:$0]  %s3, 6144, %s52, [#allocation9], 64, 64, 4
    $region17: #{tpu_custom_call.1} parent=1 // pred_fallthru
      _
    // Predicated region
    $region18: #{tpu_custom_call.1} parent=1 // pred_check
      _
    $region19: #{tpu_custom_call.1} parent=1 // pred_check_branch
      %59 = sbr.rel (0) target = $region21
    $region20: #{tpu_custom_call.1} parent=1 // pred_region
      %s61 = ssub.s32 16, 16
      %62 = vsyncadd [#allocation9], %s61
      %s64 = sshll.u32 [#allocation10], 4
      %s65 = int_to_ptr.vmem [resolvable:$true] %s64
      %67 = dma.hbm_to_vmem [thread:$0]  %s4, 16, %s65, [#allocation9]
    $region21: #{tpu_custom_call.1} parent=1 // pred_fallthru
      _
    // Predicated region
    $region22: #{tpu_custom_call.1} parent=1 // pred_check
      _
    $region23: #{tpu_custom_call.1} parent=1 // pred_check_branch
      %69 = sbr.rel (0) target = $region25
    $region24: #{tpu_custom_call.1} parent=1 // pred_region
      %70 = dma.done [#allocation3], 768
    $region25: #{tpu_custom_call.1} parent=1 // pred_fallthru
      _
    // Predicated region
    $region26: #{tpu_custom_call.1} parent=1 // pred_check
      _
    $region27: #{tpu_custom_call.1} parent=1 // pred_check_branch
      %72 = sbr.rel (0) target = $region29
    $region28: #{tpu_custom_call.1} parent=1 // pred_region
      %73 = dma.done [#allocation6], 110592
    $region29: #{tpu_custom_call.1} parent=1 // pred_fallthru
      _
    // Predicated region
    $region30: #{tpu_custom_call.1} parent=1 // pred_check
      _
    $region31: #{tpu_custom_call.1} parent=1 // pred_check_branch
      %75 = sbr.rel (0) target = $region33
    $region32: #{tpu_custom_call.1} parent=1 // pred_region
      %76 = dma.done [#allocation6], 288
    $region33: #{tpu_custom_call.1} parent=1 // pred_fallthru
      _
    // Predicated region
    $region34: #{tpu_custom_call.1} parent=1 // pred_check
      _
    $region35: #{tpu_custom_call.1} parent=1 // pred_check_branch
      %78 = sbr.rel (0) target = $region37
    $region36: #{tpu_custom_call.1} parent=1 // pred_region
      %79 = dma.done [#allocation9], 6144
    $region37: #{tpu_custom_call.1} parent=1 // pred_fallthru
      _
    // Predicated region
    $region38: #{tpu_custom_call.1} parent=1 // pred_check
      _
    $region39: #{tpu_custom_call.1} parent=1 // pred_check_branch
      %81 = sbr.rel (0) target = $region41
    $region40: #{tpu_custom_call.1} parent=1 // pred_region
      %82 = dma.done [#allocation9], 16
    $region41: #{tpu_custom_call.1} parent=1 // pred_fallthru
      _
    %v84 = vld [vmem:[#allocation2] sm:$0xff]
    %v85 = vld [vmem:[#allocation2 + $0x8] sm:$0xff]
    %v86 = vld [vmem:[#allocation2 + $0x10] sm:$0xff]
    %v87 = vld [vmem:[#allocation2 + $0x18] sm:$0xff]
    %v88 = vld [vmem:[#allocation2 + $0x20] sm:$0xff]
    %v89 = vld [vmem:[#allocation2 + $0x28] sm:$0xff]
    %v90 = vpack.c.bf16 %v84, %v84
    %v91 = vpack.c.bf16 %v85, %v85
    %v92 = vpack.c.bf16 %v86, %v86
    %v93 = vpack.c.bf16 %v87, %v87
    %v94 = vpack.c.bf16 %v88, %v88
    %v95 = vpack.c.bf16 %v89, %v89
    %v96 = vld [vmem:[#allocation5] sm:$0xff]
    %v97 = vld [vmem:[#allocation5 + $0x8] sm:$0xff]
    %v98 = vld [vmem:[#allocation5 + $0x10] sm:$0xff]
    %v99 = vld [vmem:[#allocation5 + $0x18] sm:$0xff]
    %v100 = vld [vmem:[#allocation5 + $0x20] sm:$0xff]
    %v101 = vld [vmem:[#allocation5 + $0x28] sm:$0xff]
    %v102 = vld [vmem:[#allocation5 + $0x30] sm:$0xff]
    %v103 = vld [vmem:[#allocation5 + $0x38] sm:$0xff]
    %v104 = vld [vmem:[#allocation5 + $0x40] sm:$0xff]
    %v105 = vld [vmem:[#allocation5 + $0x48] sm:$0xff]
    %v106 = vld [vmem:[#allocation5 + $0x50] sm:$0xff]
    %v107 = vld [vmem:[#allocation5 + $0x58] sm:$0xff]
    %v108 = vld [vmem:[#allocation5 + $0x60] sm:$0xff]
    %v109 = vld [vmem:[#allocation5 + $0x68] sm:$0xff]
    %v110 = vld [vmem:[#allocation5 + $0x70] sm:$0xff]
    %v111 = vld [vmem:[#allocation5 + $0x78] sm:$0xff]
    %v112 = vld [vmem:[#allocation5 + $0x80] sm:$0xff]
    %v113 = vld [vmem:[#allocation5 + $0x88] sm:$0xff]
    %v114 = vld [vmem:[#allocation5 + $0x90] sm:$0xff]
    %v115 = vld [vmem:[#allocation5 + $0x98] sm:$0xff]
    %v116 = vld [vmem:[#allocation5 + $0xa0] sm:$0xff]
    %v117 = vld [vmem:[#allocation5 + $0xa8] sm:$0xff]
    %v118 = vld [vmem:[#allocation5 + $0xb0] sm:$0xff]
    %v119 = vld [vmem:[#allocation5 + $0xb8] sm:$0xff]
    %v120 = vld [vmem:[#allocation5 + $0xc0] sm:$0xff]
    %v121 = vld [vmem:[#allocation5 + $0xc8] sm:$0xff]
    %v122 = vld [vmem:[#allocation5 + $0xd0] sm:$0xff]
    %v123 = vld [vmem:[#allocation5 + $0xd8] sm:$0xff]
    %v124 = vld [vmem:[#allocation5 + $0xe0] sm:$0xff]
    %v125 = vld [vmem:[#allocation5 + $0xe8] sm:$0xff]
    %v126 = vld [vmem:[#allocation5 + $0xf0] sm:$0xff]
    %v127 = vld [vmem:[#allocation5 + $0xf8] sm:$0xff]
    %v128 = vld [vmem:[#allocation5 + $0x100] sm:$0xff]
    %v129 = vld [vmem:[#allocation5 + $0x108] sm:$0xff]
    %v130 = vld [vmem:[#allocation5 + $0x110] sm:$0xff]
    %v131 = vld [vmem:[#allocation5 + $0x118] sm:$0xff]
    %v132 = vld [vmem:[#allocation5 + $0x120] sm:$0xff]
    %v133 = vld [vmem:[#allocation5 + $0x128] sm:$0xff]
    %v134 = vld [vmem:[#allocation5 + $0x130] sm:$0xff]
    %v135 = vld [vmem:[#allocation5 + $0x138] sm:$0xff]
    %v136 = vld [vmem:[#allocation5 + $0x140] sm:$0xff]
    %v137 = vld [vmem:[#allocation5 + $0x148] sm:$0xff]
    %v138 = vld [vmem:[#allocation5 + $0x150] sm:$0xff]
    %v139 = vld [vmem:[#allocation5 + $0x158] sm:$0xff]
    %v140 = vld [vmem:[#allocation5 + $0x160] sm:$0xff]
    %v141 = vld [vmem:[#allocation5 + $0x168] sm:$0xff]
    %v142 = vld [vmem:[#allocation5 + $0x170] sm:$0xff]
    %v143 = vld [vmem:[#allocation5 + $0x178] sm:$0xff]
    %v144 = vld [vmem:[#allocation5 + $0x180] sm:$0xff]
    %v145 = vld [vmem:[#allocation5 + $0x188] sm:$0xff]
    %v146 = vld [vmem:[#allocation5 + $0x190] sm:$0xff]
    %v147 = vld [vmem:[#allocation5 + $0x198] sm:$0xff]
    %v148 = vld [vmem:[#allocation5 + $0x1a0] sm:$0xff]
    %v149 = vld [vmem:[#allocation5 + $0x1a8] sm:$0xff]
    %v150 = vld [vmem:[#allocation5 + $0x1b0] sm:$0xff]
    %v151 = vld [vmem:[#allocation5 + $0x1b8] sm:$0xff]
    %v152 = vld [vmem:[#allocation5 + $0x1c0] sm:$0xff]
    %v153 = vld [vmem:[#allocation5 + $0x1c8] sm:$0xff]
    %v154 = vld [vmem:[#allocation5 + $0x1d0] sm:$0xff]
    %v155 = vld [vmem:[#allocation5 + $0x1d8] sm:$0xff]
    %v156 = vld [vmem:[#allocation5 + $0x1e0] sm:$0xff]
    %v157 = vld [vmem:[#allocation5 + $0x1e8] sm:$0xff]
    %v158 = vld [vmem:[#allocation5 + $0x1f0] sm:$0xff]
    %v159 = vld [vmem:[#allocation5 + $0x1f8] sm:$0xff]
    %v160 = vld [vmem:[#allocation5 + $0x200] sm:$0xff]
    %v161 = vld [vmem:[#allocation5 + $0x208] sm:$0xff]
    %v162 = vld [vmem:[#allocation5 + $0x210] sm:$0xff]
    %v163 = vld [vmem:[#allocation5 + $0x218] sm:$0xff]
    %v164 = vld [vmem:[#allocation5 + $0x220] sm:$0xff]
    %v165 = vld [vmem:[#allocation5 + $0x228] sm:$0xff]
    %v166 = vld [vmem:[#allocation5 + $0x230] sm:$0xff]
    %v167 = vld [vmem:[#allocation5 + $0x238] sm:$0xff]
    %v168 = vld [vmem:[#allocation5 + $0x240] sm:$0xff]
    %v169 = vld [vmem:[#allocation5 + $0x248] sm:$0xff]
    %v170 = vld [vmem:[#allocation5 + $0x250] sm:$0xff]
    %v171 = vld [vmem:[#allocation5 + $0x258] sm:$0xff]
    %v172 = vld [vmem:[#allocation5 + $0x260] sm:$0xff]
    %v173 = vld [vmem:[#allocation5 + $0x268] sm:$0xff]
    %v174 = vld [vmem:[#allocation5 + $0x270] sm:$0xff]
    %v175 = vld [vmem:[#allocation5 + $0x278] sm:$0xff]
    %v176 = vld [vmem:[#allocation5 + $0x280] sm:$0xff]
    %v177 = vld [vmem:[#allocation5 + $0x288] sm:$0xff]
    %v178 = vld [vmem:[#allocation5 + $0x290] sm:$0xff]
    %v179 = vld [vmem:[#allocation5 + $0x298] sm:$0xff]
    %v180 = vld [vmem:[#allocation5 + $0x2a0] sm:$0xff]
    %v181 = vld [vmem:[#allocation5 + $0x2a8] sm:$0xff]
    %v182 = vld [vmem:[#allocation5 + $0x2b0] sm:$0xff]
    %v183 = vld [vmem:[#allocation5 + $0x2b8] sm:$0xff]
    %v184 = vld [vmem:[#allocation5 + $0x2c0] sm:$0xff]
    %v185 = vld [vmem:[#allocation5 + $0x2c8] sm:$0xff]
    %v186 = vld [vmem:[#allocation5 + $0x2d0] sm:$0xff]
    %v187 = vld [vmem:[#allocation5 + $0x2d8] sm:$0xff]
    %v188 = vld [vmem:[#allocation5 + $0x2e0] sm:$0xff]
    %v189 = vld [vmem:[#allocation5 + $0x2e8] sm:$0xff]
    %v190 = vld [vmem:[#allocation5 + $0x2f0] sm:$0xff]
    %v191 = vld [vmem:[#allocation5 + $0x2f8] sm:$0xff]
    %v192 = vld [vmem:[#allocation5 + $0x300] sm:$0xff]
    %v193 = vld [vmem:[#allocation5 + $0x308] sm:$0xff]
    %v194 = vld [vmem:[#allocation5 + $0x310] sm:$0xff]
    %v195 = vld [vmem:[#allocation5 + $0x318] sm:$0xff]
    %v196 = vld [vmem:[#allocation5 + $0x320] sm:$0xff]
    %v197 = vld [vmem:[#allocation5 + $0x328] sm:$0xff]
    %v198 = vld [vmem:[#allocation5 + $0x330] sm:$0xff]
    %v199 = vld [vmem:[#allocation5 + $0x338] sm:$0xff]
    %v200 = vld [vmem:[#allocation5 + $0x340] sm:$0xff]
    %v201 = vld [vmem:[#allocation5 + $0x348] sm:$0xff]
    %v202 = vld [vmem:[#allocation5 + $0x350] sm:$0xff]
    %v203 = vld [vmem:[#allocation5 + $0x358] sm:$0xff]
    %v204 = vld [vmem:[#allocation5 + $0x360] sm:$0xff]
    %v205 = vld [vmem:[#allocation5 + $0x368] sm:$0xff]
    %v206 = vld [vmem:[#allocation5 + $0x370] sm:$0xff]
    %v207 = vld [vmem:[#allocation5 + $0x378] sm:$0xff]
    %v208 = vld [vmem:[#allocation5 + $0x380] sm:$0xff]
    %v209 = vld [vmem:[#allocation5 + $0x388] sm:$0xff]
    %v210 = vld [vmem:[#allocation5 + $0x390] sm:$0xff]
    %v211 = vld [vmem:[#allocation5 + $0x398] sm:$0xff]
    %v212 = vld [vmem:[#allocation5 + $0x3a0] sm:$0xff]
    %v213 = vld [vmem:[#allocation5 + $0x3a8] sm:$0xff]
    %v214 = vld [vmem:[#allocation5 + $0x3b0] sm:$0xff]
    %v215 = vld [vmem:[#allocation5 + $0x3b8] sm:$0xff]
    %v216 = vld [vmem:[#allocation5 + $0x3c0] sm:$0xff]
    %v217 = vld [vmem:[#allocation5 + $0x3c8] sm:$0xff]
    %v218 = vld [vmem:[#allocation5 + $0x3d0] sm:$0xff]
    %v219 = vld [vmem:[#allocation5 + $0x3d8] sm:$0xff]
    %v220 = vld [vmem:[#allocation5 + $0x3e0] sm:$0xff]
    %v221 = vld [vmem:[#allocation5 + $0x3e8] sm:$0xff]
    %v222 = vld [vmem:[#allocation5 + $0x3f0] sm:$0xff]
    %v223 = vld [vmem:[#allocation5 + $0x3f8] sm:$0xff]
    %v224 = vld [vmem:[#allocation5 + $0x400] sm:$0xff]
    %v225 = vld [vmem:[#allocation5 + $0x408] sm:$0xff]
    %v226 = vld [vmem:[#allocation5 + $0x410] sm:$0xff]
    %v227 = vld [vmem:[#allocation5 + $0x418] sm:$0xff]
    %v228 = vld [vmem:[#allocation5 + $0x420] sm:$0xff]
    %v229 = vld [vmem:[#allocation5 + $0x428] sm:$0xff]
    %v230 = vld [vmem:[#allocation5 + $0x430] sm:$0xff]
    %v231 = vld [vmem:[#allocation5 + $0x438] sm:$0xff]
    %v232 = vld [vmem:[#allocation5 + $0x440] sm:$0xff]
    %v233 = vld [vmem:[#allocation5 + $0x448] sm:$0xff]
    %v234 = vld [vmem:[#allocation5 + $0x450] sm:$0xff]
    %v235 = vld [vmem:[#allocation5 + $0x458] sm:$0xff]
    %v236 = vld [vmem:[#allocation5 + $0x460] sm:$0xff]
    %v237 = vld [vmem:[#allocation5 + $0x468] sm:$0xff]
    %v238 = vld [vmem:[#allocation5 + $0x470] sm:$0xff]
    %v239 = vld [vmem:[#allocation5 + $0x478] sm:$0xff]
    %v240 = vld [vmem:[#allocation5 + $0x480] sm:$0xff]
    %v241 = vld [vmem:[#allocation5 + $0x488] sm:$0xff]
    %v242 = vld [vmem:[#allocation5 + $0x490] sm:$0xff]
    %v243 = vld [vmem:[#allocation5 + $0x498] sm:$0xff]
    %v244 = vld [vmem:[#allocation5 + $0x4a0] sm:$0xff]
    %v245 = vld [vmem:[#allocation5 + $0x4a8] sm:$0xff]
    %v246 = vld [vmem:[#allocation5 + $0x4b0] sm:$0xff]
    %v247 = vld [vmem:[#allocation5 + $0x4b8] sm:$0xff]
    %v248 = vld [vmem:[#allocation5 + $0x4c0] sm:$0xff]
    %v249 = vld [vmem:[#allocation5 + $0x4c8] sm:$0xff]
    %v250 = vld [vmem:[#allocation5 + $0x4d0] sm:$0xff]
    %v251 = vld [vmem:[#allocation5 + $0x4d8] sm:$0xff]
    %v252 = vld [vmem:[#allocation5 + $0x4e0] sm:$0xff]
    %v253 = vld [vmem:[#allocation5 + $0x4e8] sm:$0xff]
    %v254 = vld [vmem:[#allocation5 + $0x4f0] sm:$0xff]
    %v255 = vld [vmem:[#allocation5 + $0x4f8] sm:$0xff]
    %v256 = vld [vmem:[#allocation5 + $0x500] sm:$0xff]
    %v257 = vld [vmem:[#allocation5 + $0x508] sm:$0xff]
    %v258 = vld [vmem:[#allocation5 + $0x510] sm:$0xff]
    %v259 = vld [vmem:[#allocation5 + $0x518] sm:$0xff]
    %v260 = vld [vmem:[#allocation5 + $0x520] sm:$0xff]
    %v261 = vld [vmem:[#allocation5 + $0x528] sm:$0xff]
    %v262 = vld [vmem:[#allocation5 + $0x530] sm:$0xff]
    %v263 = vld [vmem:[#allocation5 + $0x538] sm:$0xff]
    %v264 = vld [vmem:[#allocation5 + $0x540] sm:$0xff]
    %v265 = vld [vmem:[#allocation5 + $0x548] sm:$0xff]
    %v266 = vld [vmem:[#allocation5 + $0x550] sm:$0xff]
    %v267 = vld [vmem:[#allocation5 + $0x558] sm:$0xff]
    %v268 = vld [vmem:[#allocation5 + $0x560] sm:$0xff]
    %v269 = vld [vmem:[#allocation5 + $0x568] sm:$0xff]
    %v270 = vld [vmem:[#allocation5 + $0x570] sm:$0xff]
    %v271 = vld [vmem:[#allocation5 + $0x578] sm:$0xff]
    %v272 = vld [vmem:[#allocation5 + $0x580] sm:$0xff]
    %v273 = vld [vmem:[#allocation5 + $0x588] sm:$0xff]
    %v274 = vld [vmem:[#allocation5 + $0x590] sm:$0xff]
    %v275 = vld [vmem:[#allocation5 + $0x598] sm:$0xff]
    %v276 = vld [vmem:[#allocation5 + $0x5a0] sm:$0xff]
    %v277 = vld [vmem:[#allocation5 + $0x5a8] sm:$0xff]
    %v278 = vld [vmem:[#allocation5 + $0x5b0] sm:$0xff]
    %v279 = vld [vmem:[#allocation5 + $0x5b8] sm:$0xff]
    %v280 = vld [vmem:[#allocation5 + $0x5c0] sm:$0xff]
    %v281 = vld [vmem:[#allocation5 + $0x5c8] sm:$0xff]
    %v282 = vld [vmem:[#allocation5 + $0x5d0] sm:$0xff]
    %v283 = vld [vmem:[#allocation5 + $0x5d8] sm:$0xff]
    %v284 = vld [vmem:[#allocation5 + $0x5e0] sm:$0xff]
    %v285 = vld [vmem:[#allocation5 + $0x5e8] sm:$0xff]
    %v286 = vld [vmem:[#allocation5 + $0x5f0] sm:$0xff]
    %v287 = vld [vmem:[#allocation5 + $0x5f8] sm:$0xff]
    %v288 = vld [vmem:[#allocation5 + $0x600] sm:$0xff]
    %v289 = vld [vmem:[#allocation5 + $0x608] sm:$0xff]
    %v290 = vld [vmem:[#allocation5 + $0x610] sm:$0xff]
    %v291 = vld [vmem:[#allocation5 + $0x618] sm:$0xff]
    %v292 = vld [vmem:[#allocation5 + $0x620] sm:$0xff]
    %v293 = vld [vmem:[#allocation5 + $0x628] sm:$0xff]
    %v294 = vld [vmem:[#allocation5 + $0x630] sm:$0xff]
    %v295 = vld [vmem:[#allocation5 + $0x638] sm:$0xff]
    %v296 = vld [vmem:[#allocation5 + $0x640] sm:$0xff]
    %v297 = vld [vmem:[#allocation5 + $0x648] sm:$0xff]
    %v298 = vld [vmem:[#allocation5 + $0x650] sm:$0xff]
    %v299 = vld [vmem:[#allocation5 + $0x658] sm:$0xff]
    %v300 = vld [vmem:[#allocation5 + $0x660] sm:$0xff]
    %v301 = vld [vmem:[#allocation5 + $0x668] sm:$0xff]
    %v302 = vld [vmem:[#allocation5 + $0x670] sm:$0xff]
    %v303 = vld [vmem:[#allocation5 + $0x678] sm:$0xff]
    %v304 = vld [vmem:[#allocation5 + $0x680] sm:$0xff]
    %v305 = vld [vmem:[#allocation5 + $0x688] sm:$0xff]
    %v306 = vld [vmem:[#allocation5 + $0x690] sm:$0xff]
    %v307 = vld [vmem:[#allocation5 + $0x698] sm:$0xff]
    %v308 = vld [vmem:[#allocation5 + $0x6a0] sm:$0xff]
    %v309 = vld [vmem:[#allocation5 + $0x6a8] sm:$0xff]
    %v310 = vld [vmem:[#allocation5 + $0x6b0] sm:$0xff]
    %v311 = vld [vmem:[#allocation5 + $0x6b8] sm:$0xff]
    %v312 = vld [vmem:[#allocation5 + $0x6c0] sm:$0xff]
    %v313 = vld [vmem:[#allocation5 + $0x6c8] sm:$0xff]
    %v314 = vld [vmem:[#allocation5 + $0x6d0] sm:$0xff]
    %v315 = vld [vmem:[#allocation5 + $0x6d8] sm:$0xff]
    %v316 = vld [vmem:[#allocation5 + $0x6e0] sm:$0xff]
    %v317 = vld [vmem:[#allocation5 + $0x6e8] sm:$0xff]
    %v318 = vld [vmem:[#allocation5 + $0x6f0] sm:$0xff]
    %v319 = vld [vmem:[#allocation5 + $0x6f8] sm:$0xff]
    %v320 = vld [vmem:[#allocation5 + $0x700] sm:$0xff]
    %v321 = vld [vmem:[#allocation5 + $0x708] sm:$0xff]
    %v322 = vld [vmem:[#allocation5 + $0x710] sm:$0xff]
    %v323 = vld [vmem:[#allocation5 + $0x718] sm:$0xff]
    %v324 = vld [vmem:[#allocation5 + $0x720] sm:$0xff]
    %v325 = vld [vmem:[#allocation5 + $0x728] sm:$0xff]
    %v326 = vld [vmem:[#allocation5 + $0x730] sm:$0xff]
    %v327 = vld [vmem:[#allocation5 + $0x738] sm:$0xff]
    %v328 = vld [vmem:[#allocation5 + $0x740] sm:$0xff]
    %v329 = vld [vmem:[#allocation5 + $0x748] sm:$0xff]
    %v330 = vld [vmem:[#allocation5 + $0x750] sm:$0xff]
    %v331 = vld [vmem:[#allocation5 + $0x758] sm:$0xff]
    %v332 = vld [vmem:[#allocation5 + $0x760] sm:$0xff]
    %v333 = vld [vmem:[#allocation5 + $0x768] sm:$0xff]
    %v334 = vld [vmem:[#allocation5 + $0x770] sm:$0xff]
    %v335 = vld [vmem:[#allocation5 + $0x778] sm:$0xff]
    %v336 = vld [vmem:[#allocation5 + $0x780] sm:$0xff]
    %v337 = vld [vmem:[#allocation5 + $0x788] sm:$0xff]
    %v338 = vld [vmem:[#allocation5 + $0x790] sm:$0xff]
    %v339 = vld [vmem:[#allocation5 + $0x798] sm:$0xff]
    %v340 = vld [vmem:[#allocation5 + $0x7a0] sm:$0xff]
    %v341 = vld [vmem:[#allocation5 + $0x7a8] sm:$0xff]
    %v342 = vld [vmem:[#allocation5 + $0x7b0] sm:$0xff]
    %v343 = vld [vmem:[#allocation5 + $0x7b8] sm:$0xff]
    %v344 = vld [vmem:[#allocation5 + $0x7c0] sm:$0xff]
    %v345 = vld [vmem:[#allocation5 + $0x7c8] sm:$0xff]
    %v346 = vld [vmem:[#allocation5 + $0x7d0] sm:$0xff]
    %v347 = vld [vmem:[#allocation5 + $0x7d8] sm:$0xff]
    %v348 = vld [vmem:[#allocation5 + $0x7e0] sm:$0xff]
    %v349 = vld [vmem:[#allocation5 + $0x7e8] sm:$0xff]
    %v350 = vld [vmem:[#allocation5 + $0x7f0] sm:$0xff]
    %v351 = vld [vmem:[#allocation5 + $0x7f8] sm:$0xff]
    %v352 = vld [vmem:[#allocation5 + $0x800] sm:$0xff]
    %v353 = vld [vmem:[#allocation5 + $0x808] sm:$0xff]
    %v354 = vld [vmem:[#allocation5 + $0x810] sm:$0xff]
    %v355 = vld [vmem:[#allocation5 + $0x818] sm:$0xff]
    %v356 = vld [vmem:[#allocation5 + $0x820] sm:$0xff]
    %v357 = vld [vmem:[#allocation5 + $0x828] sm:$0xff]
    %v358 = vld [vmem:[#allocation5 + $0x830] sm:$0xff]
    %v359 = vld [vmem:[#allocation5 + $0x838] sm:$0xff]
    %v360 = vld [vmem:[#allocation5 + $0x840] sm:$0xff]
    %v361 = vld [vmem:[#allocation5 + $0x848] sm:$0xff]
    %v362 = vld [vmem:[#allocation5 + $0x850] sm:$0xff]
    %v363 = vld [vmem:[#allocation5 + $0x858] sm:$0xff]
    %v364 = vld [vmem:[#allocation5 + $0x860] sm:$0xff]
    %v365 = vld [vmem:[#allocation5 + $0x868] sm:$0xff]
    %v366 = vld [vmem:[#allocation5 + $0x870] sm:$0xff]
    %v367 = vld [vmem:[#allocation5 + $0x878] sm:$0xff]
    %v368 = vld [vmem:[#allocation5 + $0x880] sm:$0xff]
    %v369 = vld [vmem:[#allocation5 + $0x888] sm:$0xff]
    %v370 = vld [vmem:[#allocation5 + $0x890] sm:$0xff]
    %v371 = vld [vmem:[#allocation5 + $0x898] sm:$0xff]
    %v372 = vld [vmem:[#allocation5 + $0x8a0] sm:$0xff]
    %v373 = vld [vmem:[#allocation5 + $0x8a8] sm:$0xff]
    %v374 = vld [vmem:[#allocation5 + $0x8b0] sm:$0xff]
    %v375 = vld [vmem:[#allocation5 + $0x8b8] sm:$0xff]
    %v376 = vld [vmem:[#allocation5 + $0x8c0] sm:$0xff]
    %v377 = vld [vmem:[#allocation5 + $0x8c8] sm:$0xff]
    %v378 = vld [vmem:[#allocation5 + $0x8d0] sm:$0xff]
    %v379 = vld [vmem:[#allocation5 + $0x8d8] sm:$0xff]
    %v380 = vld [vmem:[#allocation5 + $0x8e0] sm:$0xff]
    %v381 = vld [vmem:[#allocation5 + $0x8e8] sm:$0xff]
    %v382 = vld [vmem:[#allocation5 + $0x8f0] sm:$0xff]
    %v383 = vld [vmem:[#allocation5 + $0x8f8] sm:$0xff]
    %v384 = vld [vmem:[#allocation5 + $0x900] sm:$0xff]
    %v385 = vld [vmem:[#allocation5 + $0x908] sm:$0xff]
    %v386 = vld [vmem:[#allocation5 + $0x910] sm:$0xff]
    %v387 = vld [vmem:[#allocation5 + $0x918] sm:$0xff]
    %v388 = vld [vmem:[#allocation5 + $0x920] sm:$0xff]
    %v389 = vld [vmem:[#allocation5 + $0x928] sm:$0xff]
    %v390 = vld [vmem:[#allocation5 + $0x930] sm:$0xff]
    %v391 = vld [vmem:[#allocation5 + $0x938] sm:$0xff]
    %v392 = vld [vmem:[#allocation5 + $0x940] sm:$0xff]
    %v393 = vld [vmem:[#allocation5 + $0x948] sm:$0xff]
    %v394 = vld [vmem:[#allocation5 + $0x950] sm:$0xff]
    %v395 = vld [vmem:[#allocation5 + $0x958] sm:$0xff]
    %v396 = vld [vmem:[#allocation5 + $0x960] sm:$0xff]
    %v397 = vld [vmem:[#allocation5 + $0x968] sm:$0xff]
    %v398 = vld [vmem:[#allocation5 + $0x970] sm:$0xff]
    %v399 = vld [vmem:[#allocation5 + $0x978] sm:$0xff]
    %v400 = vld [vmem:[#allocation5 + $0x980] sm:$0xff]
    %v401 = vld [vmem:[#allocation5 + $0x988] sm:$0xff]
    %v402 = vld [vmem:[#allocation5 + $0x990] sm:$0xff]
    %v403 = vld [vmem:[#allocation5 + $0x998] sm:$0xff]
    %v404 = vld [vmem:[#allocation5 + $0x9a0] sm:$0xff]
    %v405 = vld [vmem:[#allocation5 + $0x9a8] sm:$0xff]
    %v406 = vld [vmem:[#allocation5 + $0x9b0] sm:$0xff]
    %v407 = vld [vmem:[#allocation5 + $0x9b8] sm:$0xff]
    %v408 = vld [vmem:[#allocation5 + $0x9c0] sm:$0xff]
    %v409 = vld [vmem:[#allocation5 + $0x9c8] sm:$0xff]
    %v410 = vld [vmem:[#allocation5 + $0x9d0] sm:$0xff]
    %v411 = vld [vmem:[#allocation5 + $0x9d8] sm:$0xff]
    %v412 = vld [vmem:[#allocation5 + $0x9e0] sm:$0xff]
    %v413 = vld [vmem:[#allocation5 + $0x9e8] sm:$0xff]
    %v414 = vld [vmem:[#allocation5 + $0x9f0] sm:$0xff]
    %v415 = vld [vmem:[#allocation5 + $0x9f8] sm:$0xff]
    %v416 = vld [vmem:[#allocation5 + $0xa00] sm:$0xff]
    %v417 = vld [vmem:[#allocation5 + $0xa08] sm:$0xff]
    %v418 = vld [vmem:[#allocation5 + $0xa10] sm:$0xff]
    %v419 = vld [vmem:[#allocation5 + $0xa18] sm:$0xff]
    %v420 = vld [vmem:[#allocation5 + $0xa20] sm:$0xff]
    %v421 = vld [vmem:[#allocation5 + $0xa28] sm:$0xff]
    %v422 = vld [vmem:[#allocation5 + $0xa30] sm:$0xff]
    %v423 = vld [vmem:[#allocation5 + $0xa38] sm:$0xff]
    %v424 = vld [vmem:[#allocation5 + $0xa40] sm:$0xff]
    %v425 = vld [vmem:[#allocation5 + $0xa48] sm:$0xff]
    %v426 = vld [vmem:[#allocation5 + $0xa50] sm:$0xff]
    %v427 = vld [vmem:[#allocation5 + $0xa58] sm:$0xff]
    %v428 = vld [vmem:[#allocation5 + $0xa60] sm:$0xff]
    %v429 = vld [vmem:[#allocation5 + $0xa68] sm:$0xff]
    %v430 = vld [vmem:[#allocation5 + $0xa70] sm:$0xff]
    %v431 = vld [vmem:[#allocation5 + $0xa78] sm:$0xff]
    %v432 = vld [vmem:[#allocation5 + $0xa80] sm:$0xff]
    %v433 = vld [vmem:[#allocation5 + $0xa88] sm:$0xff]
    %v434 = vld [vmem:[#allocation5 + $0xa90] sm:$0xff]
    %v435 = vld [vmem:[#allocation5 + $0xa98] sm:$0xff]
    %v436 = vld [vmem:[#allocation5 + $0xaa0] sm:$0xff]
    %v437 = vld [vmem:[#allocation5 + $0xaa8] sm:$0xff]
    %v438 = vld [vmem:[#allocation5 + $0xab0] sm:$0xff]
    %v439 = vld [vmem:[#allocation5 + $0xab8] sm:$0xff]
    %v440 = vld [vmem:[#allocation5 + $0xac0] sm:$0xff]
    %v441 = vld [vmem:[#allocation5 + $0xac8] sm:$0xff]
    %v442 = vld [vmem:[#allocation5 + $0xad0] sm:$0xff]
    %v443 = vld [vmem:[#allocation5 + $0xad8] sm:$0xff]
    %v444 = vld [vmem:[#allocation5 + $0xae0] sm:$0xff]
    %v445 = vld [vmem:[#allocation5 + $0xae8] sm:$0xff]
    %v446 = vld [vmem:[#allocation5 + $0xaf0] sm:$0xff]
    %v447 = vld [vmem:[#allocation5 + $0xaf8] sm:$0xff]
    %v448 = vld [vmem:[#allocation5 + $0xb00] sm:$0xff]
    %v449 = vld [vmem:[#allocation5 + $0xb08] sm:$0xff]
    %v450 = vld [vmem:[#allocation5 + $0xb10] sm:$0xff]
    %v451 = vld [vmem:[#allocation5 + $0xb18] sm:$0xff]
    %v452 = vld [vmem:[#allocation5 + $0xb20] sm:$0xff]
    %v453 = vld [vmem:[#allocation5 + $0xb28] sm:$0xff]
    %v454 = vld [vmem:[#allocation5 + $0xb30] sm:$0xff]
    %v455 = vld [vmem:[#allocation5 + $0xb38] sm:$0xff]
    %v456 = vld [vmem:[#allocation5 + $0xb40] sm:$0xff]
    %v457 = vld [vmem:[#allocation5 + $0xb48] sm:$0xff]
    %v458 = vld [vmem:[#allocation5 + $0xb50] sm:$0xff]
    %v459 = vld [vmem:[#allocation5 + $0xb58] sm:$0xff]
    %v460 = vld [vmem:[#allocation5 + $0xb60] sm:$0xff]
    %v461 = vld [vmem:[#allocation5 + $0xb68] sm:$0xff]
    %v462 = vld [vmem:[#allocation5 + $0xb70] sm:$0xff]
    %v463 = vld [vmem:[#allocation5 + $0xb78] sm:$0xff]
    %v464 = vld [vmem:[#allocation5 + $0xb80] sm:$0xff]
    %v465 = vld [vmem:[#allocation5 + $0xb88] sm:$0xff]
    %v466 = vld [vmem:[#allocation5 + $0xb90] sm:$0xff]
    %v467 = vld [vmem:[#allocation5 + $0xb98] sm:$0xff]
    %v468 = vld [vmem:[#allocation5 + $0xba0] sm:$0xff]
    %v469 = vld [vmem:[#allocation5 + $0xba8] sm:$0xff]
    %v470 = vld [vmem:[#allocation5 + $0xbb0] sm:$0xff]
    %v471 = vld [vmem:[#allocation5 + $0xbb8] sm:$0xff]
    %v472 = vld [vmem:[#allocation5 + $0xbc0] sm:$0xff]
    %v473 = vld [vmem:[#allocation5 + $0xbc8] sm:$0xff]
    %v474 = vld [vmem:[#allocation5 + $0xbd0] sm:$0xff]
    %v475 = vld [vmem:[#allocation5 + $0xbd8] sm:$0xff]
    %v476 = vld [vmem:[#allocation5 + $0xbe0] sm:$0xff]
    %v477 = vld [vmem:[#allocation5 + $0xbe8] sm:$0xff]
    %v478 = vld [vmem:[#allocation5 + $0xbf0] sm:$0xff]
    %v479 = vld [vmem:[#allocation5 + $0xbf8] sm:$0xff]
    %v480 = vld [vmem:[#allocation5 + $0xc00] sm:$0xff]
    %v481 = vld [vmem:[#allocation5 + $0xc08] sm:$0xff]
    %v482 = vld [vmem:[#allocation5 + $0xc10] sm:$0xff]
    %v483 = vld [vmem:[#allocation5 + $0xc18] sm:$0xff]
    %v484 = vld [vmem:[#allocation5 + $0xc20] sm:$0xff]
    %v485 = vld [vmem:[#allocation5 + $0xc28] sm:$0xff]
    %v486 = vld [vmem:[#allocation5 + $0xc30] sm:$0xff]
    %v487 = vld [vmem:[#allocation5 + $0xc38] sm:$0xff]
    %v488 = vld [vmem:[#allocation5 + $0xc40] sm:$0xff]
    %v489 = vld [vmem:[#allocation5 + $0xc48] sm:$0xff]
    %v490 = vld [vmem:[#allocation5 + $0xc50] sm:$0xff]
    %v491 = vld [vmem:[#allocation5 + $0xc58] sm:$0xff]
    %v492 = vld [vmem:[#allocation5 + $0xc60] sm:$0xff]
    %v493 = vld [vmem:[#allocation5 + $0xc68] sm:$0xff]
    %v494 = vld [vmem:[#allocation5 + $0xc70] sm:$0xff]
    %v495 = vld [vmem:[#allocation5 + $0xc78] sm:$0xff]
    %v496 = vld [vmem:[#allocation5 + $0xc80] sm:$0xff]
    %v497 = vld [vmem:[#allocation5 + $0xc88] sm:$0xff]
    %v498 = vld [vmem:[#allocation5 + $0xc90] sm:$0xff]
    %v499 = vld [vmem:[#allocation5 + $0xc98] sm:$0xff]
    %v500 = vld [vmem:[#allocation5 + $0xca0] sm:$0xff]
    %v501 = vld [vmem:[#allocation5 + $0xca8] sm:$0xff]
    %v502 = vld [vmem:[#allocation5 + $0xcb0] sm:$0xff]
    %v503 = vld [vmem:[#allocation5 + $0xcb8] sm:$0xff]
    %v504 = vld [vmem:[#allocation5 + $0xcc0] sm:$0xff]
    %v505 = vld [vmem:[#allocation5 + $0xcc8] sm:$0xff]
    %v506 = vld [vmem:[#allocation5 + $0xcd0] sm:$0xff]
    %v507 = vld [vmem:[#allocation5 + $0xcd8] sm:$0xff]
    %v508 = vld [vmem:[#allocation5 + $0xce0] sm:$0xff]
    %v509 = vld [vmem:[#allocation5 + $0xce8] sm:$0xff]
    %v510 = vld [vmem:[#allocation5 + $0xcf0] sm:$0xff]
    %v511 = vld [vmem:[#allocation5 + $0xcf8] sm:$0xff]
    %v512 = vld [vmem:[#allocation5 + $0xd00] sm:$0xff]
    %v513 = vld [vmem:[#allocation5 + $0xd08] sm:$0xff]
    %v514 = vld [vmem:[#allocation5 + $0xd10] sm:$0xff]
    %v515 = vld [vmem:[#allocation5 + $0xd18] sm:$0xff]
    %v516 = vld [vmem:[#allocation5 + $0xd20] sm:$0xff]
    %v517 = vld [vmem:[#allocation5 + $0xd28] sm:$0xff]
    %v518 = vld [vmem:[#allocation5 + $0xd30] sm:$0xff]
    %v519 = vld [vmem:[#allocation5 + $0xd38] sm:$0xff]
    %v520 = vld [vmem:[#allocation5 + $0xd40] sm:$0xff]
    %v521 = vld [vmem:[#allocation5 + $0xd48] sm:$0xff]
    %v522 = vld [vmem:[#allocation5 + $0xd50] sm:$0xff]
    %v523 = vld [vmem:[#allocation5 + $0xd58] sm:$0xff]
    %v524 = vld [vmem:[#allocation5 + $0xd60] sm:$0xff]
    %v525 = vld [vmem:[#allocation5 + $0xd68] sm:$0xff]
    %v526 = vld [vmem:[#allocation5 + $0xd70] sm:$0xff]
    %v527 = vld [vmem:[#allocation5 + $0xd78] sm:$0xff]
    %v528 = vld [vmem:[#allocation5 + $0xd80] sm:$0xff]
    %v529 = vld [vmem:[#allocation5 + $0xd88] sm:$0xff]
    %v530 = vld [vmem:[#allocation5 + $0xd90] sm:$0xff]
    %v531 = vld [vmem:[#allocation5 + $0xd98] sm:$0xff]
    %v532 = vld [vmem:[#allocation5 + $0xda0] sm:$0xff]
    %v533 = vld [vmem:[#allocation5 + $0xda8] sm:$0xff]
    %v534 = vld [vmem:[#allocation5 + $0xdb0] sm:$0xff]
    %v535 = vld [vmem:[#allocation5 + $0xdb8] sm:$0xff]
    %v536 = vld [vmem:[#allocation5 + $0xdc0] sm:$0xff]
    %v537 = vld [vmem:[#allocation5 + $0xdc8] sm:$0xff]
    %v538 = vld [vmem:[#allocation5 + $0xdd0] sm:$0xff]
    %v539 = vld [vmem:[#allocation5 + $0xdd8] sm:$0xff]
    %v540 = vld [vmem:[#allocation5 + $0xde0] sm:$0xff]
    %v541 = vld [vmem:[#allocation5 + $0xde8] sm:$0xff]
    %v542 = vld [vmem:[#allocation5 + $0xdf0] sm:$0xff]
    %v543 = vld [vmem:[#allocation5 + $0xdf8] sm:$0xff]
    %v544 = vld [vmem:[#allocation5 + $0xe00] sm:$0xff]
    %v545 = vld [vmem:[#allocation5 + $0xe08] sm:$0xff]
    %v546 = vld [vmem:[#allocation5 + $0xe10] sm:$0xff]
    %v547 = vld [vmem:[#allocation5 + $0xe18] sm:$0xff]
    %v548 = vld [vmem:[#allocation5 + $0xe20] sm:$0xff]
    %v549 = vld [vmem:[#allocation5 + $0xe28] sm:$0xff]
    %v550 = vld [vmem:[#allocation5 + $0xe30] sm:$0xff]
    %v551 = vld [vmem:[#allocation5 + $0xe38] sm:$0xff]
    %v552 = vld [vmem:[#allocation5 + $0xe40] sm:$0xff]
    %v553 = vld [vmem:[#allocation5 + $0xe48] sm:$0xff]
    %v554 = vld [vmem:[#allocation5 + $0xe50] sm:$0xff]
    %v555 = vld [vmem:[#allocation5 + $0xe58] sm:$0xff]
    %v556 = vld [vmem:[#allocation5 + $0xe60] sm:$0xff]
    %v557 = vld [vmem:[#allocation5 + $0xe68] sm:$0xff]
    %v558 = vld [vmem:[#allocation5 + $0xe70] sm:$0xff]
    %v559 = vld [vmem:[#allocation5 + $0xe78] sm:$0xff]
    %v560 = vld [vmem:[#allocation5 + $0xe80] sm:$0xff]
    %v561 = vld [vmem:[#allocation5 + $0xe88] sm:$0xff]
    %v562 = vld [vmem:[#allocation5 + $0xe90] sm:$0xff]
    %v563 = vld [vmem:[#allocation5 + $0xe98] sm:$0xff]
    %v564 = vld [vmem:[#allocation5 + $0xea0] sm:$0xff]
    %v565 = vld [vmem:[#allocation5 + $0xea8] sm:$0xff]
    %v566 = vld [vmem:[#allocation5 + $0xeb0] sm:$0xff]
    %v567 = vld [vmem:[#allocation5 + $0xeb8] sm:$0xff]
    %v568 = vld [vmem:[#allocation5 + $0xec0] sm:$0xff]
    %v569 = vld [vmem:[#allocation5 + $0xec8] sm:$0xff]
    %v570 = vld [vmem:[#allocation5 + $0xed0] sm:$0xff]
    %v571 = vld [vmem:[#allocation5 + $0xed8] sm:$0xff]
    %v572 = vld [vmem:[#allocation5 + $0xee0] sm:$0xff]
    %v573 = vld [vmem:[#allocation5 + $0xee8] sm:$0xff]
    %v574 = vld [vmem:[#allocation5 + $0xef0] sm:$0xff]
    %v575 = vld [vmem:[#allocation5 + $0xef8] sm:$0xff]
    %v576 = vld [vmem:[#allocation5 + $0xf00] sm:$0xff]
    %v577 = vld [vmem:[#allocation5 + $0xf08] sm:$0xff]
    %v578 = vld [vmem:[#allocation5 + $0xf10] sm:$0xff]
    %v579 = vld [vmem:[#allocation5 + $0xf18] sm:$0xff]
    %v580 = vld [vmem:[#allocation5 + $0xf20] sm:$0xff]
    %v581 = vld [vmem:[#allocation5 + $0xf28] sm:$0xff]
    %v582 = vld [vmem:[#allocation5 + $0xf30] sm:$0xff]
    %v583 = vld [vmem:[#allocation5 + $0xf38] sm:$0xff]
    %v584 = vld [vmem:[#allocation5 + $0xf40] sm:$0xff]
    %v585 = vld [vmem:[#allocation5 + $0xf48] sm:$0xff]
    %v586 = vld [vmem:[#allocation5 + $0xf50] sm:$0xff]
    %v587 = vld [vmem:[#allocation5 + $0xf58] sm:$0xff]
    %v588 = vld [vmem:[#allocation5 + $0xf60] sm:$0xff]
    %v589 = vld [vmem:[#allocation5 + $0xf68] sm:$0xff]
    %v590 = vld [vmem:[#allocation5 + $0xf70] sm:$0xff]
    %v591 = vld [vmem:[#allocation5 + $0xf78] sm:$0xff]
    %v592 = vld [vmem:[#allocation5 + $0xf80] sm:$0xff]
    %v593 = vld [vmem:[#allocation5 + $0xf88] sm:$0xff]
    %v594 = vld [vmem:[#allocation5 + $0xf90] sm:$0xff]
    %v595 = vld [vmem:[#allocation5 + $0xf98] sm:$0xff]
    %v596 = vld [vmem:[#allocation5 + $0xfa0] sm:$0xff]
    %v597 = vld [vmem:[#allocation5 + $0xfa8] sm:$0xff]
    %v598 = vld [vmem:[#allocation5 + $0xfb0] sm:$0xff]
    %v599 = vld [vmem:[#allocation5 + $0xfb8] sm:$0xff]
    %v600 = vld [vmem:[#allocation5 + $0xfc0] sm:$0xff]
    %v601 = vld [vmem:[#allocation5 + $0xfc8] sm:$0xff]
    %v602 = vld [vmem:[#allocation5 + $0xfd0] sm:$0xff]
    %v603 = vld [vmem:[#allocation5 + $0xfd8] sm:$0xff]
    %v604 = vld [vmem:[#allocation5 + $0xfe0] sm:$0xff]
    %v605 = vld [vmem:[#allocation5 + $0xfe8] sm:$0xff]
    %v606 = vld [vmem:[#allocation5 + $0xff0] sm:$0xff]
    %v607 = vld [vmem:[#allocation5 + $0xff8] sm:$0xff]
    %v608 = vld [vmem:[#allocation5 + $0x1000] sm:$0xff]
    %v609 = vld [vmem:[#allocation5 + $0x1008] sm:$0xff]
    %v610 = vld [vmem:[#allocation5 + $0x1010] sm:$0xff]
    %v611 = vld [vmem:[#allocation5 + $0x1018] sm:$0xff]
    %v612 = vld [vmem:[#allocation5 + $0x1020] sm:$0xff]
    %v613 = vld [vmem:[#allocation5 + $0x1028] sm:$0xff]
    %v614 = vld [vmem:[#allocation5 + $0x1030] sm:$0xff]
    %v615 = vld [vmem:[#allocation5 + $0x1038] sm:$0xff]
    %v616 = vld [vmem:[#allocation5 + $0x1040] sm:$0xff]
    %v617 = vld [vmem:[#allocation5 + $0x1048] sm:$0xff]
    %v618 = vld [vmem:[#allocation5 + $0x1050] sm:$0xff]
    %v619 = vld [vmem:[#allocation5 + $0x1058] sm:$0xff]
    %v620 = vld [vmem:[#allocation5 + $0x1060] sm:$0xff]
    %v621 = vld [vmem:[#allocation5 + $0x1068] sm:$0xff]
    %v622 = vld [vmem:[#allocation5 + $0x1070] sm:$0xff]
    %v623 = vld [vmem:[#allocation5 + $0x1078] sm:$0xff]
    %v624 = vld [vmem:[#allocation5 + $0x1080] sm:$0xff]
    %v625 = vld [vmem:[#allocation5 + $0x1088] sm:$0xff]
    %v626 = vld [vmem:[#allocation5 + $0x1090] sm:$0xff]
    %v627 = vld [vmem:[#allocation5 + $0x1098] sm:$0xff]
    %v628 = vld [vmem:[#allocation5 + $0x10a0] sm:$0xff]
    %v629 = vld [vmem:[#allocation5 + $0x10a8] sm:$0xff]
    %v630 = vld [vmem:[#allocation5 + $0x10b0] sm:$0xff]
    %v631 = vld [vmem:[#allocation5 + $0x10b8] sm:$0xff]
    %v632 = vld [vmem:[#allocation5 + $0x10c0] sm:$0xff]
    %v633 = vld [vmem:[#allocation5 + $0x10c8] sm:$0xff]
    %v634 = vld [vmem:[#allocation5 + $0x10d0] sm:$0xff]
    %v635 = vld [vmem:[#allocation5 + $0x10d8] sm:$0xff]
    %v636 = vld [vmem:[#allocation5 + $0x10e0] sm:$0xff]
    %v637 = vld [vmem:[#allocation5 + $0x10e8] sm:$0xff]
    %v638 = vld [vmem:[#allocation5 + $0x10f0] sm:$0xff]
    %v639 = vld [vmem:[#allocation5 + $0x10f8] sm:$0xff]
    %v640 = vld [vmem:[#allocation5 + $0x1100] sm:$0xff]
    %v641 = vld [vmem:[#allocation5 + $0x1108] sm:$0xff]
    %v642 = vld [vmem:[#allocation5 + $0x1110] sm:$0xff]
    %v643 = vld [vmem:[#allocation5 + $0x1118] sm:$0xff]
    %v644 = vld [vmem:[#allocation5 + $0x1120] sm:$0xff]
    %v645 = vld [vmem:[#allocation5 + $0x1128] sm:$0xff]
    %v646 = vld [vmem:[#allocation5 + $0x1130] sm:$0xff]
    %v647 = vld [vmem:[#allocation5 + $0x1138] sm:$0xff]
    %v648 = vld [vmem:[#allocation5 + $0x1140] sm:$0xff]
    %v649 = vld [vmem:[#allocation5 + $0x1148] sm:$0xff]
    %v650 = vld [vmem:[#allocation5 + $0x1150] sm:$0xff]
    %v651 = vld [vmem:[#allocation5 + $0x1158] sm:$0xff]
    %v652 = vld [vmem:[#allocation5 + $0x1160] sm:$0xff]
    %v653 = vld [vmem:[#allocation5 + $0x1168] sm:$0xff]
    %v654 = vld [vmem:[#allocation5 + $0x1170] sm:$0xff]
    %v655 = vld [vmem:[#allocation5 + $0x1178] sm:$0xff]
    %v656 = vld [vmem:[#allocation5 + $0x1180] sm:$0xff]
    %v657 = vld [vmem:[#allocation5 + $0x1188] sm:$0xff]
    %v658 = vld [vmem:[#allocation5 + $0x1190] sm:$0xff]
    %v659 = vld [vmem:[#allocation5 + $0x1198] sm:$0xff]
    %v660 = vld [vmem:[#allocation5 + $0x11a0] sm:$0xff]
    %v661 = vld [vmem:[#allocation5 + $0x11a8] sm:$0xff]
    %v662 = vld [vmem:[#allocation5 + $0x11b0] sm:$0xff]
    %v663 = vld [vmem:[#allocation5 + $0x11b8] sm:$0xff]
    %v664 = vld [vmem:[#allocation5 + $0x11c0] sm:$0xff]
    %v665 = vld [vmem:[#allocation5 + $0x11c8] sm:$0xff]
    %v666 = vld [vmem:[#allocation5 + $0x11d0] sm:$0xff]
    %v667 = vld [vmem:[#allocation5 + $0x11d8] sm:$0xff]
    %v668 = vld [vmem:[#allocation5 + $0x11e0] sm:$0xff]
    %v669 = vld [vmem:[#allocation5 + $0x11e8] sm:$0xff]
    %v670 = vld [vmem:[#allocation5 + $0x11f0] sm:$0xff]
    %v671 = vld [vmem:[#allocation5 + $0x11f8] sm:$0xff]
    %v672 = vld [vmem:[#allocation5 + $0x1200] sm:$0xff]
    %v673 = vld [vmem:[#allocation5 + $0x1208] sm:$0xff]
    %v674 = vld [vmem:[#allocation5 + $0x1210] sm:$0xff]
    %v675 = vld [vmem:[#allocation5 + $0x1218] sm:$0xff]
    %v676 = vld [vmem:[#allocation5 + $0x1220] sm:$0xff]
    %v677 = vld [vmem:[#allocation5 + $0x1228] sm:$0xff]
    %v678 = vld [vmem:[#allocation5 + $0x1230] sm:$0xff]
    %v679 = vld [vmem:[#allocation5 + $0x1238] sm:$0xff]
    %v680 = vld [vmem:[#allocation5 + $0x1240] sm:$0xff]
    %v681 = vld [vmem:[#allocation5 + $0x1248] sm:$0xff]
    %v682 = vld [vmem:[#allocation5 + $0x1250] sm:$0xff]
    %v683 = vld [vmem:[#allocation5 + $0x1258] sm:$0xff]
    %v684 = vld [vmem:[#allocation5 + $0x1260] sm:$0xff]
    %v685 = vld [vmem:[#allocation5 + $0x1268] sm:$0xff]
    %v686 = vld [vmem:[#allocation5 + $0x1270] sm:$0xff]
    %v687 = vld [vmem:[#allocation5 + $0x1278] sm:$0xff]
    %v688 = vld [vmem:[#allocation5 + $0x1280] sm:$0xff]
    %v689 = vld [vmem:[#allocation5 + $0x1288] sm:$0xff]
    %v690 = vld [vmem:[#allocation5 + $0x1290] sm:$0xff]
    %v691 = vld [vmem:[#allocation5 + $0x1298] sm:$0xff]
    %v692 = vld [vmem:[#allocation5 + $0x12a0] sm:$0xff]
    %v693 = vld [vmem:[#allocation5 + $0x12a8] sm:$0xff]
    %v694 = vld [vmem:[#allocation5 + $0x12b0] sm:$0xff]
    %v695 = vld [vmem:[#allocation5 + $0x12b8] sm:$0xff]
    %v696 = vld [vmem:[#allocation5 + $0x12c0] sm:$0xff]
    %v697 = vld [vmem:[#allocation5 + $0x12c8] sm:$0xff]
    %v698 = vld [vmem:[#allocation5 + $0x12d0] sm:$0xff]
    %v699 = vld [vmem:[#allocation5 + $0x12d8] sm:$0xff]
    %v700 = vld [vmem:[#allocation5 + $0x12e0] sm:$0xff]
    %v701 = vld [vmem:[#allocation5 + $0x12e8] sm:$0xff]
    %v702 = vld [vmem:[#allocation5 + $0x12f0] sm:$0xff]
    %v703 = vld [vmem:[#allocation5 + $0x12f8] sm:$0xff]
    %v704 = vld [vmem:[#allocation5 + $0x1300] sm:$0xff]
    %v705 = vld [vmem:[#allocation5 + $0x1308] sm:$0xff]
    %v706 = vld [vmem:[#allocation5 + $0x1310] sm:$0xff]
    %v707 = vld [vmem:[#allocation5 + $0x1318] sm:$0xff]
    %v708 = vld [vmem:[#allocation5 + $0x1320] sm:$0xff]
    %v709 = vld [vmem:[#allocation5 + $0x1328] sm:$0xff]
    %v710 = vld [vmem:[#allocation5 + $0x1330] sm:$0xff]
    %v711 = vld [vmem:[#allocation5 + $0x1338] sm:$0xff]
    %v712 = vld [vmem:[#allocation5 + $0x1340] sm:$0xff]
    %v713 = vld [vmem:[#allocation5 + $0x1348] sm:$0xff]
    %v714 = vld [vmem:[#allocation5 + $0x1350] sm:$0xff]
    %v715 = vld [vmem:[#allocation5 + $0x1358] sm:$0xff]
    %v716 = vld [vmem:[#allocation5 + $0x1360] sm:$0xff]
    %v717 = vld [vmem:[#allocation5 + $0x1368] sm:$0xff]
    %v718 = vld [vmem:[#allocation5 + $0x1370] sm:$0xff]
    %v719 = vld [vmem:[#allocation5 + $0x1378] sm:$0xff]
    %v720 = vld [vmem:[#allocation5 + $0x1380] sm:$0xff]
    %v721 = vld [vmem:[#allocation5 + $0x1388] sm:$0xff]
    %v722 = vld [vmem:[#allocation5 + $0x1390] sm:$0xff]
    %v723 = vld [vmem:[#allocation5 + $0x1398] sm:$0xff]
    %v724 = vld [vmem:[#allocation5 + $0x13a0] sm:$0xff]
    %v725 = vld [vmem:[#allocation5 + $0x13a8] sm:$0xff]
    %v726 = vld [vmem:[#allocation5 + $0x13b0] sm:$0xff]
    %v727 = vld [vmem:[#allocation5 + $0x13b8] sm:$0xff]
    %v728 = vld [vmem:[#allocation5 + $0x13c0] sm:$0xff]
    %v729 = vld [vmem:[#allocation5 + $0x13c8] sm:$0xff]
    %v730 = vld [vmem:[#allocation5 + $0x13d0] sm:$0xff]
    %v731 = vld [vmem:[#allocation5 + $0x13d8] sm:$0xff]
    %v732 = vld [vmem:[#allocation5 + $0x13e0] sm:$0xff]
    %v733 = vld [vmem:[#allocation5 + $0x13e8] sm:$0xff]
    %v734 = vld [vmem:[#allocation5 + $0x13f0] sm:$0xff]
    %v735 = vld [vmem:[#allocation5 + $0x13f8] sm:$0xff]
    %v736 = vld [vmem:[#allocation5 + $0x1400] sm:$0xff]
    %v737 = vld [vmem:[#allocation5 + $0x1408] sm:$0xff]
    %v738 = vld [vmem:[#allocation5 + $0x1410] sm:$0xff]
    %v739 = vld [vmem:[#allocation5 + $0x1418] sm:$0xff]
    %v740 = vld [vmem:[#allocation5 + $0x1420] sm:$0xff]
    %v741 = vld [vmem:[#allocation5 + $0x1428] sm:$0xff]
    %v742 = vld [vmem:[#allocation5 + $0x1430] sm:$0xff]
    %v743 = vld [vmem:[#allocation5 + $0x1438] sm:$0xff]
    %v744 = vld [vmem:[#allocation5 + $0x1440] sm:$0xff]
    %v745 = vld [vmem:[#allocation5 + $0x1448] sm:$0xff]
    %v746 = vld [vmem:[#allocation5 + $0x1450] sm:$0xff]
    %v747 = vld [vmem:[#allocation5 + $0x1458] sm:$0xff]
    %v748 = vld [vmem:[#allocation5 + $0x1460] sm:$0xff]
    %v749 = vld [vmem:[#allocation5 + $0x1468] sm:$0xff]
    %v750 = vld [vmem:[#allocation5 + $0x1470] sm:$0xff]
    %v751 = vld [vmem:[#allocation5 + $0x1478] sm:$0xff]
    %v752 = vld [vmem:[#allocation5 + $0x1480] sm:$0xff]
    %v753 = vld [vmem:[#allocation5 + $0x1488] sm:$0xff]
    %v754 = vld [vmem:[#allocation5 + $0x1490] sm:$0xff]
    %v755 = vld [vmem:[#allocation5 + $0x1498] sm:$0xff]
    %v756 = vld [vmem:[#allocation5 + $0x14a0] sm:$0xff]
    %v757 = vld [vmem:[#allocation5 + $0x14a8] sm:$0xff]
    %v758 = vld [vmem:[#allocation5 + $0x14b0] sm:$0xff]
    %v759 = vld [vmem:[#allocation5 + $0x14b8] sm:$0xff]
    %v760 = vld [vmem:[#allocation5 + $0x14c0] sm:$0xff]
    %v761 = vld [vmem:[#allocation5 + $0x14c8] sm:$0xff]
    %v762 = vld [vmem:[#allocation5 + $0x14d0] sm:$0xff]
    %v763 = vld [vmem:[#allocation5 + $0x14d8] sm:$0xff]
    %v764 = vld [vmem:[#allocation5 + $0x14e0] sm:$0xff]
    %v765 = vld [vmem:[#allocation5 + $0x14e8] sm:$0xff]
    %v766 = vld [vmem:[#allocation5 + $0x14f0] sm:$0xff]
    %v767 = vld [vmem:[#allocation5 + $0x14f8] sm:$0xff]
    %v768 = vld [vmem:[#allocation5 + $0x1500] sm:$0xff]
    %v769 = vld [vmem:[#allocation5 + $0x1508] sm:$0xff]
    %v770 = vld [vmem:[#allocation5 + $0x1510] sm:$0xff]
    %v771 = vld [vmem:[#allocation5 + $0x1518] sm:$0xff]
    %v772 = vld [vmem:[#allocation5 + $0x1520] sm:$0xff]
    %v773 = vld [vmem:[#allocation5 + $0x1528] sm:$0xff]
    %v774 = vld [vmem:[#allocation5 + $0x1530] sm:$0xff]
    %v775 = vld [vmem:[#allocation5 + $0x1538] sm:$0xff]
    %v776 = vld [vmem:[#allocation5 + $0x1540] sm:$0xff]
    %v777 = vld [vmem:[#allocation5 + $0x1548] sm:$0xff]
    %v778 = vld [vmem:[#allocation5 + $0x1550] sm:$0xff]
    %v779 = vld [vmem:[#allocation5 + $0x1558] sm:$0xff]
    %v780 = vld [vmem:[#allocation5 + $0x1560] sm:$0xff]
    %v781 = vld [vmem:[#allocation5 + $0x1568] sm:$0xff]
    %v782 = vld [vmem:[#allocation5 + $0x1570] sm:$0xff]
    %v783 = vld [vmem:[#allocation5 + $0x1578] sm:$0xff]
    %v784 = vld [vmem:[#allocation5 + $0x1580] sm:$0xff]
    %v785 = vld [vmem:[#allocation5 + $0x1588] sm:$0xff]
    %v786 = vld [vmem:[#allocation5 + $0x1590] sm:$0xff]
    %v787 = vld [vmem:[#allocation5 + $0x1598] sm:$0xff]
    %v788 = vld [vmem:[#allocation5 + $0x15a0] sm:$0xff]
    %v789 = vld [vmem:[#allocation5 + $0x15a8] sm:$0xff]
    %v790 = vld [vmem:[#allocation5 + $0x15b0] sm:$0xff]
    %v791 = vld [vmem:[#allocation5 + $0x15b8] sm:$0xff]
    %v792 = vld [vmem:[#allocation5 + $0x15c0] sm:$0xff]
    %v793 = vld [vmem:[#allocation5 + $0x15c8] sm:$0xff]
    %v794 = vld [vmem:[#allocation5 + $0x15d0] sm:$0xff]
    %v795 = vld [vmem:[#allocation5 + $0x15d8] sm:$0xff]
    %v796 = vld [vmem:[#allocation5 + $0x15e0] sm:$0xff]
    %v797 = vld [vmem:[#allocation5 + $0x15e8] sm:$0xff]
    %v798 = vld [vmem:[#allocation5 + $0x15f0] sm:$0xff]
    %v799 = vld [vmem:[#allocation5 + $0x15f8] sm:$0xff]
    %v800 = vld [vmem:[#allocation5 + $0x1600] sm:$0xff]
    %v801 = vld [vmem:[#allocation5 + $0x1608] sm:$0xff]
    %v802 = vld [vmem:[#allocation5 + $0x1610] sm:$0xff]
    %v803 = vld [vmem:[#allocation5 + $0x1618] sm:$0xff]
    %v804 = vld [vmem:[#allocation5 + $0x1620] sm:$0xff]
    %v805 = vld [vmem:[#allocation5 + $0x1628] sm:$0xff]
    %v806 = vld [vmem:[#allocation5 + $0x1630] sm:$0xff]
    %v807 = vld [vmem:[#allocation5 + $0x1638] sm:$0xff]
    %v808 = vld [vmem:[#allocation5 + $0x1640] sm:$0xff]
    %v809 = vld [vmem:[#allocation5 + $0x1648] sm:$0xff]
    %v810 = vld [vmem:[#allocation5 + $0x1650] sm:$0xff]
    %v811 = vld [vmem:[#allocation5 + $0x1658] sm:$0xff]
    %v812 = vld [vmem:[#allocation5 + $0x1660] sm:$0xff]
    %v813 = vld [vmem:[#allocation5 + $0x1668] sm:$0xff]
    %v814 = vld [vmem:[#allocation5 + $0x1670] sm:$0xff]
    %v815 = vld [vmem:[#allocation5 + $0x1678] sm:$0xff]
    %v816 = vld [vmem:[#allocation5 + $0x1680] sm:$0xff]
    %v817 = vld [vmem:[#allocation5 + $0x1688] sm:$0xff]
    %v818 = vld [vmem:[#allocation5 + $0x1690] sm:$0xff]
    %v819 = vld [vmem:[#allocation5 + $0x1698] sm:$0xff]
    %v820 = vld [vmem:[#allocation5 + $0x16a0] sm:$0xff]
    %v821 = vld [vmem:[#allocation5 + $0x16a8] sm:$0xff]
    %v822 = vld [vmem:[#allocation5 + $0x16b0] sm:$0xff]
    %v823 = vld [vmem:[#allocation5 + $0x16b8] sm:$0xff]
    %v824 = vld [vmem:[#allocation5 + $0x16c0] sm:$0xff]
    %v825 = vld [vmem:[#allocation5 + $0x16c8] sm:$0xff]
    %v826 = vld [vmem:[#allocation5 + $0x16d0] sm:$0xff]
    %v827 = vld [vmem:[#allocation5 + $0x16d8] sm:$0xff]
    %v828 = vld [vmem:[#allocation5 + $0x16e0] sm:$0xff]
    %v829 = vld [vmem:[#allocation5 + $0x16e8] sm:$0xff]
    %v830 = vld [vmem:[#allocation5 + $0x16f0] sm:$0xff]
    %v831 = vld [vmem:[#allocation5 + $0x16f8] sm:$0xff]
    %v832 = vld [vmem:[#allocation5 + $0x1700] sm:$0xff]
    %v833 = vld [vmem:[#allocation5 + $0x1708] sm:$0xff]
    %v834 = vld [vmem:[#allocation5 + $0x1710] sm:$0xff]
    %v835 = vld [vmem:[#allocation5 + $0x1718] sm:$0xff]
    %v836 = vld [vmem:[#allocation5 + $0x1720] sm:$0xff]
    %v837 = vld [vmem:[#allocation5 + $0x1728] sm:$0xff]
    %v838 = vld [vmem:[#allocation5 + $0x1730] sm:$0xff]
    %v839 = vld [vmem:[#allocation5 + $0x1738] sm:$0xff]
    %v840 = vld [vmem:[#allocation5 + $0x1740] sm:$0xff]
    %v841 = vld [vmem:[#allocation5 + $0x1748] sm:$0xff]
    %v842 = vld [vmem:[#allocation5 + $0x1750] sm:$0xff]
    %v843 = vld [vmem:[#allocation5 + $0x1758] sm:$0xff]
    %v844 = vld [vmem:[#allocation5 + $0x1760] sm:$0xff]
    %v845 = vld [vmem:[#allocation5 + $0x1768] sm:$0xff]
    %v846 = vld [vmem:[#allocation5 + $0x1770] sm:$0xff]
    %v847 = vld [vmem:[#allocation5 + $0x1778] sm:$0xff]
    %v848 = vld [vmem:[#allocation5 + $0x1780] sm:$0xff]
    %v849 = vld [vmem:[#allocation5 + $0x1788] sm:$0xff]
    %v850 = vld [vmem:[#allocation5 + $0x1790] sm:$0xff]
    %v851 = vld [vmem:[#allocation5 + $0x1798] sm:$0xff]
    %v852 = vld [vmem:[#allocation5 + $0x17a0] sm:$0xff]
    %v853 = vld [vmem:[#allocation5 + $0x17a8] sm:$0xff]
    %v854 = vld [vmem:[#allocation5 + $0x17b0] sm:$0xff]
    %v855 = vld [vmem:[#allocation5 + $0x17b8] sm:$0xff]
    %v856 = vld [vmem:[#allocation5 + $0x17c0] sm:$0xff]
    %v857 = vld [vmem:[#allocation5 + $0x17c8] sm:$0xff]
    %v858 = vld [vmem:[#allocation5 + $0x17d0] sm:$0xff]
    %v859 = vld [vmem:[#allocation5 + $0x17d8] sm:$0xff]
    %v860 = vld [vmem:[#allocation5 + $0x17e0] sm:$0xff]
    %v861 = vld [vmem:[#allocation5 + $0x17e8] sm:$0xff]
    %v862 = vld [vmem:[#allocation5 + $0x17f0] sm:$0xff]
    %v863 = vld [vmem:[#allocation5 + $0x17f8] sm:$0xff]
    %v864 = vld [vmem:[#allocation5 + $0x1800] sm:$0xff]
    %v865 = vld [vmem:[#allocation5 + $0x1808] sm:$0xff]
    %v866 = vld [vmem:[#allocation5 + $0x1810] sm:$0xff]
    %v867 = vld [vmem:[#allocation5 + $0x1818] sm:$0xff]
    %v868 = vld [vmem:[#allocation5 + $0x1820] sm:$0xff]
    %v869 = vld [vmem:[#allocation5 + $0x1828] sm:$0xff]
    %v870 = vld [vmem:[#allocation5 + $0x1830] sm:$0xff]
    %v871 = vld [vmem:[#allocation5 + $0x1838] sm:$0xff]
    %v872 = vld [vmem:[#allocation5 + $0x1840] sm:$0xff]
    %v873 = vld [vmem:[#allocation5 + $0x1848] sm:$0xff]
    %v874 = vld [vmem:[#allocation5 + $0x1850] sm:$0xff]
    %v875 = vld [vmem:[#allocation5 + $0x1858] sm:$0xff]
    %v876 = vld [vmem:[#allocation5 + $0x1860] sm:$0xff]
    %v877 = vld [vmem:[#allocation5 + $0x1868] sm:$0xff]
    %v878 = vld [vmem:[#allocation5 + $0x1870] sm:$0xff]
    %v879 = vld [vmem:[#allocation5 + $0x1878] sm:$0xff]
    %v880 = vld [vmem:[#allocation5 + $0x1880] sm:$0xff]
    %v881 = vld [vmem:[#allocation5 + $0x1888] sm:$0xff]
    %v882 = vld [vmem:[#allocation5 + $0x1890] sm:$0xff]
    %v883 = vld [vmem:[#allocation5 + $0x1898] sm:$0xff]
    %v884 = vld [vmem:[#allocation5 + $0x18a0] sm:$0xff]
    %v885 = vld [vmem:[#allocation5 + $0x18a8] sm:$0xff]
    %v886 = vld [vmem:[#allocation5 + $0x18b0] sm:$0xff]
    %v887 = vld [vmem:[#allocation5 + $0x18b8] sm:$0xff]
    %v888 = vld [vmem:[#allocation5 + $0x18c0] sm:$0xff]
    %v889 = vld [vmem:[#allocation5 + $0x18c8] sm:$0xff]
    %v890 = vld [vmem:[#allocation5 + $0x18d0] sm:$0xff]
    %v891 = vld [vmem:[#allocation5 + $0x18d8] sm:$0xff]
    %v892 = vld [vmem:[#allocation5 + $0x18e0] sm:$0xff]
    %v893 = vld [vmem:[#allocation5 + $0x18e8] sm:$0xff]
    %v894 = vld [vmem:[#allocation5 + $0x18f0] sm:$0xff]
    %v895 = vld [vmem:[#allocation5 + $0x18f8] sm:$0xff]
    %v896 = vld [vmem:[#allocation5 + $0x1900] sm:$0xff]
    %v897 = vld [vmem:[#allocation5 + $0x1908] sm:$0xff]
    %v898 = vld [vmem:[#allocation5 + $0x1910] sm:$0xff]
    %v899 = vld [vmem:[#allocation5 + $0x1918] sm:$0xff]
    %v900 = vld [vmem:[#allocation5 + $0x1920] sm:$0xff]
    %v901 = vld [vmem:[#allocation5 + $0x1928] sm:$0xff]
    %v902 = vld [vmem:[#allocation5 + $0x1930] sm:$0xff]
    %v903 = vld [vmem:[#allocation5 + $0x1938] sm:$0xff]
    %v904 = vld [vmem:[#allocation5 + $0x1940] sm:$0xff]
    %v905 = vld [vmem:[#allocation5 + $0x1948] sm:$0xff]
    %v906 = vld [vmem:[#allocation5 + $0x1950] sm:$0xff]
    %v907 = vld [vmem:[#allocation5 + $0x1958] sm:$0xff]
    %v908 = vld [vmem:[#allocation5 + $0x1960] sm:$0xff]
    %v909 = vld [vmem:[#allocation5 + $0x1968] sm:$0xff]
    %v910 = vld [vmem:[#allocation5 + $0x1970] sm:$0xff]
    %v911 = vld [vmem:[#allocation5 + $0x1978] sm:$0xff]
    %v912 = vld [vmem:[#allocation5 + $0x1980] sm:$0xff]
    %v913 = vld [vmem:[#allocation5 + $0x1988] sm:$0xff]
    %v914 = vld [vmem:[#allocation5 + $0x1990] sm:$0xff]
    %v915 = vld [vmem:[#allocation5 + $0x1998] sm:$0xff]
    %v916 = vld [vmem:[#allocation5 + $0x19a0] sm:$0xff]
    %v917 = vld [vmem:[#allocation5 + $0x19a8] sm:$0xff]
    %v918 = vld [vmem:[#allocation5 + $0x19b0] sm:$0xff]
    %v919 = vld [vmem:[#allocation5 + $0x19b8] sm:$0xff]
    %v920 = vld [vmem:[#allocation5 + $0x19c0] sm:$0xff]
    %v921 = vld [vmem:[#allocation5 + $0x19c8] sm:$0xff]
    %v922 = vld [vmem:[#allocation5 + $0x19d0] sm:$0xff]
    %v923 = vld [vmem:[#allocation5 + $0x19d8] sm:$0xff]
    %v924 = vld [vmem:[#allocation5 + $0x19e0] sm:$0xff]
    %v925 = vld [vmem:[#allocation5 + $0x19e8] sm:$0xff]
    %v926 = vld [vmem:[#allocation5 + $0x19f0] sm:$0xff]
    %v927 = vld [vmem:[#allocation5 + $0x19f8] sm:$0xff]
    %v928 = vld [vmem:[#allocation5 + $0x1a00] sm:$0xff]
    %v929 = vld [vmem:[#allocation5 + $0x1a08] sm:$0xff]
    %v930 = vld [vmem:[#allocation5 + $0x1a10] sm:$0xff]
    %v931 = vld [vmem:[#allocation5 + $0x1a18] sm:$0xff]
    %v932 = vld [vmem:[#allocation5 + $0x1a20] sm:$0xff]
    %v933 = vld [vmem:[#allocation5 + $0x1a28] sm:$0xff]
    %v934 = vld [vmem:[#allocation5 + $0x1a30] sm:$0xff]
    %v935 = vld [vmem:[#allocation5 + $0x1a38] sm:$0xff]
    %v936 = vld [vmem:[#allocation5 + $0x1a40] sm:$0xff]
    %v937 = vld [vmem:[#allocation5 + $0x1a48] sm:$0xff]
    %v938 = vld [vmem:[#allocation5 + $0x1a50] sm:$0xff]
    %v939 = vld [vmem:[#allocation5 + $0x1a58] sm:$0xff]
    %v940 = vld [vmem:[#allocation5 + $0x1a60] sm:$0xff]
    %v941 = vld [vmem:[#allocation5 + $0x1a68] sm:$0xff]
    %v942 = vld [vmem:[#allocation5 + $0x1a70] sm:$0xff]
    %v943 = vld [vmem:[#allocation5 + $0x1a78] sm:$0xff]
    %v944 = vld [vmem:[#allocation5 + $0x1a80] sm:$0xff]
    %v945 = vld [vmem:[#allocation5 + $0x1a88] sm:$0xff]
    %v946 = vld [vmem:[#allocation5 + $0x1a90] sm:$0xff]
    %v947 = vld [vmem:[#allocation5 + $0x1a98] sm:$0xff]
    %v948 = vld [vmem:[#allocation5 + $0x1aa0] sm:$0xff]
    %v949 = vld [vmem:[#allocation5 + $0x1aa8] sm:$0xff]
    %v950 = vld [vmem:[#allocation5 + $0x1ab0] sm:$0xff]
    %v951 = vld [vmem:[#allocation5 + $0x1ab8] sm:$0xff]
    %v952 = vld [vmem:[#allocation5 + $0x1ac0] sm:$0xff]
    %v953 = vld [vmem:[#allocation5 + $0x1ac8] sm:$0xff]
    %v954 = vld [vmem:[#allocation5 + $0x1ad0] sm:$0xff]
    %v955 = vld [vmem:[#allocation5 + $0x1ad8] sm:$0xff]
    %v956 = vld [vmem:[#allocation5 + $0x1ae0] sm:$0xff]
    %v957 = vld [vmem:[#allocation5 + $0x1ae8] sm:$0xff]
    %v958 = vld [vmem:[#allocation5 + $0x1af0] sm:$0xff]
    %v959 = vld [vmem:[#allocation5 + $0x1af8] sm:$0xff]
    %v960 = vld [vmem:[#allocation7] sm:$0xff]
    %v961 = vld [vmem:[#allocation7 + $0x8] sm:$0xff]
    %v962 = vld [vmem:[#allocation7 + $0x10] sm:$0x3]
    %v966 = vlaneseq
    %v967 = vshrl.u32 %v966, 7
    %v968 = vsub.s32 0, %v967
    %v969 = vrot.slane %v960, %v968
    %v970 = vlaneseq
    %v971 = vshrl.u32 %v970, 7
    %v972 = vsub.s32 1, %v971
    %v973 = vrot.slane %v960, %v972
    %v974 = vlaneseq
    %v975 = vshrl.u32 %v974, 7
    %v976 = vsub.s32 2, %v975
    %v977 = vrot.slane %v960, %v976
    %v978 = vlaneseq
    %v979 = vshrl.u32 %v978, 7
    %v980 = vsub.s32 3, %v979
    %v981 = vrot.slane %v960, %v980
    %v982 = vlaneseq
    %v983 = vshrl.u32 %v982, 7
    %v984 = vsub.s32 4, %v983
    %v985 = vrot.slane %v960, %v984
    %v986 = vlaneseq
    %v987 = vshrl.u32 %v986, 7
    %v988 = vsub.s32 5, %v987
    %v989 = vrot.slane %v960, %v988
    %v990 = vlaneseq
    %v991 = vshrl.u32 %v990, 7
    %v992 = vsub.s32 6, %v991
    %v993 = vrot.slane %v960, %v992
    %v994 = vlaneseq
    %v995 = vshrl.u32 %v994, 7
    %v996 = vsub.s32 7, %v995
    %v997 = vrot.slane %v960, %v996
    %v998 = vlaneseq
    %v999 = vshrl.u32 %v998, 7
    %v1000 = vsub.s32 0, %v999
    %v1001 = vrot.slane %v961, %v1000
    %v1002 = vlaneseq
    %v1003 = vshrl.u32 %v1002, 7
    %v1004 = vsub.s32 1, %v1003
    %v1005 = vrot.slane %v961, %v1004
    %v1006 = vlaneseq
    %v1007 = vshrl.u32 %v1006, 7
    %v1008 = vsub.s32 2, %v1007
    %v1009 = vrot.slane %v961, %v1008
    %v1010 = vlaneseq
    %v1011 = vshrl.u32 %v1010, 7
    %v1012 = vsub.s32 3, %v1011
    %v1013 = vrot.slane %v961, %v1012
    %v1014 = vlaneseq
    %v1015 = vshrl.u32 %v1014, 7
    %v1016 = vsub.s32 4, %v1015
    %v1017 = vrot.slane %v961, %v1016
    %v1018 = vlaneseq
    %v1019 = vshrl.u32 %v1018, 7
    %v1020 = vsub.s32 5, %v1019
    %v1021 = vrot.slane %v961, %v1020
    %v1022 = vlaneseq
    %v1023 = vshrl.u32 %v1022, 7
    %v1024 = vsub.s32 6, %v1023
    %v1025 = vrot.slane %v961, %v1024
    %v1026 = vlaneseq
    %v1027 = vshrl.u32 %v1026, 7
    %v1028 = vsub.s32 7, %v1027
    %v1029 = vrot.slane %v961, %v1028
    %v1030 = vlaneseq
    %v1031 = vshrl.u32 %v1030, 7
    %v1032 = vsub.s32 0, %v1031
    %v1033 = vrot.slane %v962, %v1032
    %v1034 = vlaneseq
    %v1035 = vshrl.u32 %v1034, 7
    %v1036 = vsub.s32 1, %v1035
    %v1037 = vrot.slane %v962, %v1036
    %v1920 = vunpack.c.l.b16 %v96
    %v1921 = vunpack.c.h.b16 %v96
    %v1922 = vunpack.c.l.b16 %v97
    %v1923 = vunpack.c.h.b16 %v97
    %v1924 = vunpack.c.l.b16 %v98
    %v1925 = vunpack.c.h.b16 %v98
    %v1926 = vunpack.c.l.b16 %v99
    %v1927 = vunpack.c.h.b16 %v99
    %v1928 = vunpack.c.l.b16 %v100
    %v1929 = vunpack.c.h.b16 %v100
    %v1930 = vunpack.c.l.b16 %v101
    %v1931 = vunpack.c.h.b16 %v101
    %v1932 = vunpack.c.l.b16 %v102
    %v1933 = vunpack.c.h.b16 %v102
    %v1934 = vunpack.c.l.b16 %v103
    %v1935 = vunpack.c.h.b16 %v103
    %v1936 = vunpack.c.l.b16 %v104
    %v1937 = vunpack.c.h.b16 %v104
    %v1938 = vunpack.c.l.b16 %v105
    %v1939 = vunpack.c.h.b16 %v105
    %v1940 = vunpack.c.l.b16 %v106
    %v1941 = vunpack.c.h.b16 %v106
    %v1942 = vunpack.c.l.b16 %v107
    %v1943 = vunpack.c.h.b16 %v107
    %v1944 = vunpack.c.l.b16 %v108
    %v1945 = vunpack.c.h.b16 %v108
    %v1946 = vunpack.c.l.b16 %v109
    %v1947 = vunpack.c.h.b16 %v109
    %v1948 = vunpack.c.l.b16 %v110
    %v1949 = vunpack.c.h.b16 %v110
    %v1950 = vunpack.c.l.b16 %v111
    %v1951 = vunpack.c.h.b16 %v111
    %v1952 = vunpack.c.l.b16 %v112
    %v1953 = vunpack.c.h.b16 %v112
    %v1954 = vunpack.c.l.b16 %v113
    %v1955 = vunpack.c.h.b16 %v113
    %v1956 = vunpack.c.l.b16 %v114
    %v1957 = vunpack.c.h.b16 %v114
    %v1958 = vunpack.c.l.b16 %v115
    %v1959 = vunpack.c.h.b16 %v115
    %v1960 = vunpack.c.l.b16 %v116
    %v1961 = vunpack.c.h.b16 %v116
    %v1962 = vunpack.c.l.b16 %v117
    %v1963 = vunpack.c.h.b16 %v117
    %v1964 = vunpack.c.l.b16 %v118
    %v1965 = vunpack.c.h.b16 %v118
    %v1966 = vunpack.c.l.b16 %v119
    %v1967 = vunpack.c.h.b16 %v119
    %v1968 = vunpack.c.l.b16 %v120
    %v1969 = vunpack.c.h.b16 %v120
    %v1970 = vunpack.c.l.b16 %v121
    %v1971 = vunpack.c.h.b16 %v121
    %v1972 = vunpack.c.l.b16 %v122
    %v1973 = vunpack.c.h.b16 %v122
    %v1974 = vunpack.c.l.b16 %v123
    %v1975 = vunpack.c.h.b16 %v123
    %v1976 = vunpack.c.l.b16 %v124
    %v1977 = vunpack.c.h.b16 %v124
    %v1978 = vunpack.c.l.b16 %v125
    %v1979 = vunpack.c.h.b16 %v125
    %v1980 = vunpack.c.l.b16 %v126
    %v1981 = vunpack.c.h.b16 %v126
    %v1982 = vunpack.c.l.b16 %v127
    %v1983 = vunpack.c.h.b16 %v127
    %v1984 = vunpack.c.l.b16 %v128
    %v1985 = vunpack.c.h.b16 %v128
    %v1986 = vunpack.c.l.b16 %v129
    %v1987 = vunpack.c.h.b16 %v129
    %v1988 = vunpack.c.l.b16 %v130
    %v1989 = vunpack.c.h.b16 %v130
    %v1990 = vunpack.c.l.b16 %v131
    %v1991 = vunpack.c.h.b16 %v131
    %v1992 = vunpack.c.l.b16 %v132
    %v1993 = vunpack.c.h.b16 %v132
    %v1994 = vunpack.c.l.b16 %v133
    %v1995 = vunpack.c.h.b16 %v133
    %v1996 = vunpack.c.l.b16 %v134
    %v1997 = vunpack.c.h.b16 %v134
    %v1998 = vunpack.c.l.b16 %v135
    %v1999 = vunpack.c.h.b16 %v135
    %v2000 = vunpack.c.l.b16 %v136
    %v2001 = vunpack.c.h.b16 %v136
    %v2002 = vunpack.c.l.b16 %v137
    %v2003 = vunpack.c.h.b16 %v137
    %v2004 = vunpack.c.l.b16 %v138
    %v2005 = vunpack.c.h.b16 %v138
    %v2006 = vunpack.c.l.b16 %v139
    %v2007 = vunpack.c.h.b16 %v139
    %v2008 = vunpack.c.l.b16 %v140
    %v2009 = vunpack.c.h.b16 %v140
    %v2010 = vunpack.c.l.b16 %v141
    %v2011 = vunpack.c.h.b16 %v141
    %v2012 = vunpack.c.l.b16 %v142
    %v2013 = vunpack.c.h.b16 %v142
    %v2014 = vunpack.c.l.b16 %v143
    %v2015 = vunpack.c.h.b16 %v143
    %v2016 = vunpack.c.l.b16 %v144
    %v2017 = vunpack.c.h.b16 %v144
    %v2018 = vunpack.c.l.b16 %v145
    %v2019 = vunpack.c.h.b16 %v145
    %v2020 = vunpack.c.l.b16 %v146
    %v2021 = vunpack.c.h.b16 %v146
    %v2022 = vunpack.c.l.b16 %v147
    %v2023 = vunpack.c.h.b16 %v147
    %v2024 = vunpack.c.l.b16 %v148
    %v2025 = vunpack.c.h.b16 %v148
    %v2026 = vunpack.c.l.b16 %v149
    %v2027 = vunpack.c.h.b16 %v149
    %v2028 = vunpack.c.l.b16 %v150
    %v2029 = vunpack.c.h.b16 %v150
    %v2030 = vunpack.c.l.b16 %v151
    %v2031 = vunpack.c.h.b16 %v151
    %v2032 = vunpack.c.l.b16 %v152
    %v2033 = vunpack.c.h.b16 %v152
    %v2034 = vunpack.c.l.b16 %v153
    %v2035 = vunpack.c.h.b16 %v153
    %v2036 = vunpack.c.l.b16 %v154
    %v2037 = vunpack.c.h.b16 %v154
    %v2038 = vunpack.c.l.b16 %v155
    %v2039 = vunpack.c.h.b16 %v155
    %v2040 = vunpack.c.l.b16 %v156
    %v2041 = vunpack.c.h.b16 %v156
    %v2042 = vunpack.c.l.b16 %v157
    %v2043 = vunpack.c.h.b16 %v157
    %v2044 = vunpack.c.l.b16 %v158
    %v2045 = vunpack.c.h.b16 %v158
    %v2046 = vunpack.c.l.b16 %v159
    %v2047 = vunpack.c.h.b16 %v159
    %v2048 = vunpack.c.l.b16 %v160
    %v2049 = vunpack.c.h.b16 %v160
    %v2050 = vunpack.c.l.b16 %v161
    %v2051 = vunpack.c.h.b16 %v161
    %v2052 = vunpack.c.l.b16 %v162
    %v2053 = vunpack.c.h.b16 %v162
    %v2054 = vunpack.c.l.b16 %v163
    %v2055 = vunpack.c.h.b16 %v163
    %v2056 = vunpack.c.l.b16 %v164
    %v2057 = vunpack.c.h.b16 %v164
    %v2058 = vunpack.c.l.b16 %v165
    %v2059 = vunpack.c.h.b16 %v165
    %v2060 = vunpack.c.l.b16 %v166
    %v2061 = vunpack.c.h.b16 %v166
    %v2062 = vunpack.c.l.b16 %v167
    %v2063 = vunpack.c.h.b16 %v167
    %v2064 = vunpack.c.l.b16 %v168
    %v2065 = vunpack.c.h.b16 %v168
    %v2066 = vunpack.c.l.b16 %v169
    %v2067 = vunpack.c.h.b16 %v169
    %v2068 = vunpack.c.l.b16 %v170
    %v2069 = vunpack.c.h.b16 %v170
    %v2070 = vunpack.c.l.b16 %v171
    %v2071 = vunpack.c.h.b16 %v171
    %v2072 = vunpack.c.l.b16 %v172
    %v2073 = vunpack.c.h.b16 %v172
    %v2074 = vunpack.c.l.b16 %v173
    %v2075 = vunpack.c.h.b16 %v173
    %v2076 = vunpack.c.l.b16 %v174
    %v2077 = vunpack.c.h.b16 %v174
    %v2078 = vunpack.c.l.b16 %v175
    %v2079 = vunpack.c.h.b16 %v175
    %v2080 = vunpack.c.l.b16 %v176
    %v2081 = vunpack.c.h.b16 %v176
    %v2082 = vunpack.c.l.b16 %v177
    %v2083 = vunpack.c.h.b16 %v177
    %v2084 = vunpack.c.l.b16 %v178
    %v2085 = vunpack.c.h.b16 %v178
    %v2086 = vunpack.c.l.b16 %v179
    %v2087 = vunpack.c.h.b16 %v179
    %v2088 = vunpack.c.l.b16 %v180
    %v2089 = vunpack.c.h.b16 %v180
    %v2090 = vunpack.c.l.b16 %v181
    %v2091 = vunpack.c.h.b16 %v181
    %v2092 = vunpack.c.l.b16 %v182
    %v2093 = vunpack.c.h.b16 %v182
    %v2094 = vunpack.c.l.b16 %v183
    %v2095 = vunpack.c.h.b16 %v183
    %v2096 = vunpack.c.l.b16 %v184
    %v2097 = vunpack.c.h.b16 %v184
    %v2098 = vunpack.c.l.b16 %v185
    %v2099 = vunpack.c.h.b16 %v185
    %v2100 = vunpack.c.l.b16 %v186
    %v2101 = vunpack.c.h.b16 %v186
    %v2102 = vunpack.c.l.b16 %v187
    %v2103 = vunpack.c.h.b16 %v187
    %v2104 = vunpack.c.l.b16 %v188
    %v2105 = vunpack.c.h.b16 %v188
    %v2106 = vunpack.c.l.b16 %v189
    %v2107 = vunpack.c.h.b16 %v189
    %v2108 = vunpack.c.l.b16 %v190
    %v2109 = vunpack.c.h.b16 %v190
    %v2110 = vunpack.c.l.b16 %v191
    %v2111 = vunpack.c.h.b16 %v191
    %v2112 = vunpack.c.l.b16 %v192
    %v2113 = vunpack.c.h.b16 %v192
    %v2114 = vunpack.c.l.b16 %v193
    %v2115 = vunpack.c.h.b16 %v193
    %v2116 = vunpack.c.l.b16 %v194
    %v2117 = vunpack.c.h.b16 %v194
    %v2118 = vunpack.c.l.b16 %v195
    %v2119 = vunpack.c.h.b16 %v195
    %v2120 = vunpack.c.l.b16 %v196
    %v2121 = vunpack.c.h.b16 %v196
    %v2122 = vunpack.c.l.b16 %v197
    %v2123 = vunpack.c.h.b16 %v197
    %v2124 = vunpack.c.l.b16 %v198
    %v2125 = vunpack.c.h.b16 %v198
    %v2126 = vunpack.c.l.b16 %v199
    %v2127 = vunpack.c.h.b16 %v199
    %v2128 = vunpack.c.l.b16 %v200
    %v2129 = vunpack.c.h.b16 %v200
    %v2130 = vunpack.c.l.b16 %v201
    %v2131 = vunpack.c.h.b16 %v201
    %v2132 = vunpack.c.l.b16 %v202
    %v2133 = vunpack.c.h.b16 %v202
    %v2134 = vunpack.c.l.b16 %v203
    %v2135 = vunpack.c.h.b16 %v203
    %v2136 = vunpack.c.l.b16 %v204
    %v2137 = vunpack.c.h.b16 %v204
    %v2138 = vunpack.c.l.b16 %v205
    %v2139 = vunpack.c.h.b16 %v205
    %v2140 = vunpack.c.l.b16 %v206
    %v2141 = vunpack.c.h.b16 %v206
    %v2142 = vunpack.c.l.b16 %v207
    %v2143 = vunpack.c.h.b16 %v207
    %v2144 = vunpack.c.l.b16 %v208
    %v2145 = vunpack.c.h.b16 %v208
    %v2146 = vunpack.c.l.b16 %v209
    %v2147 = vunpack.c.h.b16 %v209
    %v2148 = vunpack.c.l.b16 %v210
    %v2149 = vunpack.c.h.b16 %v210
    %v2150 = vunpack.c.l.b16 %v211
    %v2151 = vunpack.c.h.b16 %v211
    %v2152 = vunpack.c.l.b16 %v212
    %v2153 = vunpack.c.h.b16 %v212
    %v2154 = vunpack.c.l.b16 %v213
    %v2155 = vunpack.c.h.b16 %v213
    %v2156 = vunpack.c.l.b16 %v214
    %v2157 = vunpack.c.h.b16 %v214
    %v2158 = vunpack.c.l.b16 %v215
    %v2159 = vunpack.c.h.b16 %v215
    %v2160 = vunpack.c.l.b16 %v216
    %v2161 = vunpack.c.h.b16 %v216
    %v2162 = vunpack.c.l.b16 %v217
    %v2163 = vunpack.c.h.b16 %v217
    %v2164 = vunpack.c.l.b16 %v218
    %v2165 = vunpack.c.h.b16 %v218
    %v2166 = vunpack.c.l.b16 %v219
    %v2167 = vunpack.c.h.b16 %v219
    %v2168 = vunpack.c.l.b16 %v220
    %v2169 = vunpack.c.h.b16 %v220
    %v2170 = vunpack.c.l.b16 %v221
    %v2171 = vunpack.c.h.b16 %v221
    %v2172 = vunpack.c.l.b16 %v222
    %v2173 = vunpack.c.h.b16 %v222
    %v2174 = vunpack.c.l.b16 %v223
    %v2175 = vunpack.c.h.b16 %v223
    %v2176 = vunpack.c.l.b16 %v224
    %v2177 = vunpack.c.h.b16 %v224
    %v2178 = vunpack.c.l.b16 %v225
    %v2179 = vunpack.c.h.b16 %v225
    %v2180 = vunpack.c.l.b16 %v226
    %v2181 = vunpack.c.h.b16 %v226
    %v2182 = vunpack.c.l.b16 %v227
    %v2183 = vunpack.c.h.b16 %v227
    %v2184 = vunpack.c.l.b16 %v228
    %v2185 = vunpack.c.h.b16 %v228
    %v2186 = vunpack.c.l.b16 %v229
    %v2187 = vunpack.c.h.b16 %v229
    %v2188 = vunpack.c.l.b16 %v230
    %v2189 = vunpack.c.h.b16 %v230
    %v2190 = vunpack.c.l.b16 %v231
    %v2191 = vunpack.c.h.b16 %v231
    %v2192 = vunpack.c.l.b16 %v232
    %v2193 = vunpack.c.h.b16 %v232
    %v2194 = vunpack.c.l.b16 %v233
    %v2195 = vunpack.c.h.b16 %v233
    %v2196 = vunpack.c.l.b16 %v234
    %v2197 = vunpack.c.h.b16 %v234
    %v2198 = vunpack.c.l.b16 %v235
    %v2199 = vunpack.c.h.b16 %v235
    %v2200 = vunpack.c.l.b16 %v236
    %v2201 = vunpack.c.h.b16 %v236
    %v2202 = vunpack.c.l.b16 %v237
    %v2203 = vunpack.c.h.b16 %v237
    %v2204 = vunpack.c.l.b16 %v238
    %v2205 = vunpack.c.h.b16 %v238
    %v2206 = vunpack.c.l.b16 %v239
    %v2207 = vunpack.c.h.b16 %v239
    %v2208 = vunpack.c.l.b16 %v240
    %v2209 = vunpack.c.h.b16 %v240
    %v2210 = vunpack.c.l.b16 %v241
    %v2211 = vunpack.c.h.b16 %v241
    %v2212 = vunpack.c.l.b16 %v242
    %v2213 = vunpack.c.h.b16 %v242
    %v2214 = vunpack.c.l.b16 %v243
    %v2215 = vunpack.c.h.b16 %v243
    %v2216 = vunpack.c.l.b16 %v244
    %v2217 = vunpack.c.h.b16 %v244
    %v2218 = vunpack.c.l.b16 %v245
    %v2219 = vunpack.c.h.b16 %v245
    %v2220 = vunpack.c.l.b16 %v246
    %v2221 = vunpack.c.h.b16 %v246
    %v2222 = vunpack.c.l.b16 %v247
    %v2223 = vunpack.c.h.b16 %v247
    %v2224 = vunpack.c.l.b16 %v248
    %v2225 = vunpack.c.h.b16 %v248
    %v2226 = vunpack.c.l.b16 %v249
    %v2227 = vunpack.c.h.b16 %v249
    %v2228 = vunpack.c.l.b16 %v250
    %v2229 = vunpack.c.h.b16 %v250
    %v2230 = vunpack.c.l.b16 %v251
    %v2231 = vunpack.c.h.b16 %v251
    %v2232 = vunpack.c.l.b16 %v252
    %v2233 = vunpack.c.h.b16 %v252
    %v2234 = vunpack.c.l.b16 %v253
    %v2235 = vunpack.c.h.b16 %v253
    %v2236 = vunpack.c.l.b16 %v254
    %v2237 = vunpack.c.h.b16 %v254
    %v2238 = vunpack.c.l.b16 %v255
    %v2239 = vunpack.c.h.b16 %v255
    %v2240 = vunpack.c.l.b16 %v256
    %v2241 = vunpack.c.h.b16 %v256
    %v2242 = vunpack.c.l.b16 %v257
    %v2243 = vunpack.c.h.b16 %v257
    %v2244 = vunpack.c.l.b16 %v258
    %v2245 = vunpack.c.h.b16 %v258
    %v2246 = vunpack.c.l.b16 %v259
    %v2247 = vunpack.c.h.b16 %v259
    %v2248 = vunpack.c.l.b16 %v260
    %v2249 = vunpack.c.h.b16 %v260
    %v2250 = vunpack.c.l.b16 %v261
    %v2251 = vunpack.c.h.b16 %v261
    %v2252 = vunpack.c.l.b16 %v262
    %v2253 = vunpack.c.h.b16 %v262
    %v2254 = vunpack.c.l.b16 %v263
    %v2255 = vunpack.c.h.b16 %v263
    %v2256 = vunpack.c.l.b16 %v264
    %v2257 = vunpack.c.h.b16 %v264
    %v2258 = vunpack.c.l.b16 %v265
    %v2259 = vunpack.c.h.b16 %v265
    %v2260 = vunpack.c.l.b16 %v266
    %v2261 = vunpack.c.h.b16 %v266
    %v2262 = vunpack.c.l.b16 %v267
    %v2263 = vunpack.c.h.b16 %v267
    %v2264 = vunpack.c.l.b16 %v268
    %v2265 = vunpack.c.h.b16 %v268
    %v2266 = vunpack.c.l.b16 %v269
    %v2267 = vunpack.c.h.b16 %v269
    %v2268 = vunpack.c.l.b16 %v270
    %v2269 = vunpack.c.h.b16 %v270
    %v2270 = vunpack.c.l.b16 %v271
    %v2271 = vunpack.c.h.b16 %v271
    %v2272 = vunpack.c.l.b16 %v272
    %v2273 = vunpack.c.h.b16 %v272
    %v2274 = vunpack.c.l.b16 %v273
    %v2275 = vunpack.c.h.b16 %v273
    %v2276 = vunpack.c.l.b16 %v274
    %v2277 = vunpack.c.h.b16 %v274
    %v2278 = vunpack.c.l.b16 %v275
    %v2279 = vunpack.c.h.b16 %v275
    %v2280 = vunpack.c.l.b16 %v276
    %v2281 = vunpack.c.h.b16 %v276
    %v2282 = vunpack.c.l.b16 %v277
    %v2283 = vunpack.c.h.b16 %v277
    %v2284 = vunpack.c.l.b16 %v278
    %v2285 = vunpack.c.h.b16 %v278
    %v2286 = vunpack.c.l.b16 %v279
    %v2287 = vunpack.c.h.b16 %v279
    %v2288 = vunpack.c.l.b16 %v280
    %v2289 = vunpack.c.h.b16 %v280
    %v2290 = vunpack.c.l.b16 %v281
    %v2291 = vunpack.c.h.b16 %v281
    %v2292 = vunpack.c.l.b16 %v282
    %v2293 = vunpack.c.h.b16 %v282
    %v2294 = vunpack.c.l.b16 %v283
    %v2295 = vunpack.c.h.b16 %v283
    %v2296 = vunpack.c.l.b16 %v284
    %v2297 = vunpack.c.h.b16 %v284
    %v2298 = vunpack.c.l.b16 %v285
    %v2299 = vunpack.c.h.b16 %v285
    %v2300 = vunpack.c.l.b16 %v286
    %v2301 = vunpack.c.h.b16 %v286
    %v2302 = vunpack.c.l.b16 %v287
    %v2303 = vunpack.c.h.b16 %v287
    %v2304 = vunpack.c.l.b16 %v288
    %v2305 = vunpack.c.h.b16 %v288
    %v2306 = vunpack.c.l.b16 %v289
    %v2307 = vunpack.c.h.b16 %v289
    %v2308 = vunpack.c.l.b16 %v290
    %v2309 = vunpack.c.h.b16 %v290
    %v2310 = vunpack.c.l.b16 %v291
    %v2311 = vunpack.c.h.b16 %v291
    %v2312 = vunpack.c.l.b16 %v292
    %v2313 = vunpack.c.h.b16 %v292
    %v2314 = vunpack.c.l.b16 %v293
    %v2315 = vunpack.c.h.b16 %v293
    %v2316 = vunpack.c.l.b16 %v294
    %v2317 = vunpack.c.h.b16 %v294
    %v2318 = vunpack.c.l.b16 %v295
    %v2319 = vunpack.c.h.b16 %v295
    %v2320 = vunpack.c.l.b16 %v296
    %v2321 = vunpack.c.h.b16 %v296
    %v2322 = vunpack.c.l.b16 %v297
    %v2323 = vunpack.c.h.b16 %v297
    %v2324 = vunpack.c.l.b16 %v298
    %v2325 = vunpack.c.h.b16 %v298
    %v2326 = vunpack.c.l.b16 %v299
    %v2327 = vunpack.c.h.b16 %v299
    %v2328 = vunpack.c.l.b16 %v300
    %v2329 = vunpack.c.h.b16 %v300
    %v2330 = vunpack.c.l.b16 %v301
    %v2331 = vunpack.c.h.b16 %v301
    %v2332 = vunpack.c.l.b16 %v302
    %v2333 = vunpack.c.h.b16 %v302
    %v2334 = vunpack.c.l.b16 %v303
    %v2335 = vunpack.c.h.b16 %v303
    %v2336 = vunpack.c.l.b16 %v304
    %v2337 = vunpack.c.h.b16 %v304
    %v2338 = vunpack.c.l.b16 %v305
    %v2339 = vunpack.c.h.b16 %v305
    %v2340 = vunpack.c.l.b16 %v306
    %v2341 = vunpack.c.h.b16 %v306
    %v2342 = vunpack.c.l.b16 %v307
    %v2343 = vunpack.c.h.b16 %v307
    %v2344 = vunpack.c.l.b16 %v308
    %v2345 = vunpack.c.h.b16 %v308
    %v2346 = vunpack.c.l.b16 %v309
    %v2347 = vunpack.c.h.b16 %v309
    %v2348 = vunpack.c.l.b16 %v310
    %v2349 = vunpack.c.h.b16 %v310
    %v2350 = vunpack.c.l.b16 %v311
    %v2351 = vunpack.c.h.b16 %v311
    %v2352 = vunpack.c.l.b16 %v312
    %v2353 = vunpack.c.h.b16 %v312
    %v2354 = vunpack.c.l.b16 %v313
    %v2355 = vunpack.c.h.b16 %v313
    %v2356 = vunpack.c.l.b16 %v314
    %v2357 = vunpack.c.h.b16 %v314
    %v2358 = vunpack.c.l.b16 %v315
    %v2359 = vunpack.c.h.b16 %v315
    %v2360 = vunpack.c.l.b16 %v316
    %v2361 = vunpack.c.h.b16 %v316
    %v2362 = vunpack.c.l.b16 %v317
    %v2363 = vunpack.c.h.b16 %v317
    %v2364 = vunpack.c.l.b16 %v318
    %v2365 = vunpack.c.h.b16 %v318
    %v2366 = vunpack.c.l.b16 %v319
    %v2367 = vunpack.c.h.b16 %v319
    %v2368 = vunpack.c.l.b16 %v320
    %v2369 = vunpack.c.h.b16 %v320
    %v2370 = vunpack.c.l.b16 %v321
    %v2371 = vunpack.c.h.b16 %v321
    %v2372 = vunpack.c.l.b16 %v322
    %v2373 = vunpack.c.h.b16 %v322
    %v2374 = vunpack.c.l.b16 %v323
    %v2375 = vunpack.c.h.b16 %v323
    %v2376 = vunpack.c.l.b16 %v324
    %v2377 = vunpack.c.h.b16 %v324
    %v2378 = vunpack.c.l.b16 %v325
    %v2379 = vunpack.c.h.b16 %v325
    %v2380 = vunpack.c.l.b16 %v326
    %v2381 = vunpack.c.h.b16 %v326
    %v2382 = vunpack.c.l.b16 %v327
    %v2383 = vunpack.c.h.b16 %v327
    %v2384 = vunpack.c.l.b16 %v328
    %v2385 = vunpack.c.h.b16 %v328
    %v2386 = vunpack.c.l.b16 %v329
    %v2387 = vunpack.c.h.b16 %v329
    %v2388 = vunpack.c.l.b16 %v330
    %v2389 = vunpack.c.h.b16 %v330
    %v2390 = vunpack.c.l.b16 %v331
    %v2391 = vunpack.c.h.b16 %v331
    %v2392 = vunpack.c.l.b16 %v332
    %v2393 = vunpack.c.h.b16 %v332
    %v2394 = vunpack.c.l.b16 %v333
    %v2395 = vunpack.c.h.b16 %v333
    %v2396 = vunpack.c.l.b16 %v334
    %v2397 = vunpack.c.h.b16 %v334
    %v2398 = vunpack.c.l.b16 %v335
    %v2399 = vunpack.c.h.b16 %v335
    %v2400 = vunpack.c.l.b16 %v336
    %v2401 = vunpack.c.h.b16 %v336
    %v2402 = vunpack.c.l.b16 %v337
    %v2403 = vunpack.c.h.b16 %v337
    %v2404 = vunpack.c.l.b16 %v338
    %v2405 = vunpack.c.h.b16 %v338
    %v2406 = vunpack.c.l.b16 %v339
    %v2407 = vunpack.c.h.b16 %v339
    %v2408 = vunpack.c.l.b16 %v340
    %v2409 = vunpack.c.h.b16 %v340
    %v2410 = vunpack.c.l.b16 %v341
    %v2411 = vunpack.c.h.b16 %v341
    %v2412 = vunpack.c.l.b16 %v342
    %v2413 = vunpack.c.h.b16 %v342
    %v2414 = vunpack.c.l.b16 %v343
    %v2415 = vunpack.c.h.b16 %v343
    %v2416 = vunpack.c.l.b16 %v344
    %v2417 = vunpack.c.h.b16 %v344
    %v2418 = vunpack.c.l.b16 %v345
    %v2419 = vunpack.c.h.b16 %v345
    %v2420 = vunpack.c.l.b16 %v346
    %v2421 = vunpack.c.h.b16 %v346
    %v2422 = vunpack.c.l.b16 %v347
    %v2423 = vunpack.c.h.b16 %v347
    %v2424 = vunpack.c.l.b16 %v348
    %v2425 = vunpack.c.h.b16 %v348
    %v2426 = vunpack.c.l.b16 %v349
    %v2427 = vunpack.c.h.b16 %v349
    %v2428 = vunpack.c.l.b16 %v350
    %v2429 = vunpack.c.h.b16 %v350
    %v2430 = vunpack.c.l.b16 %v351
    %v2431 = vunpack.c.h.b16 %v351
    %v2432 = vunpack.c.l.b16 %v352
    %v2433 = vunpack.c.h.b16 %v352
    %v2434 = vunpack.c.l.b16 %v353
    %v2435 = vunpack.c.h.b16 %v353
    %v2436 = vunpack.c.l.b16 %v354
    %v2437 = vunpack.c.h.b16 %v354
    %v2438 = vunpack.c.l.b16 %v355
    %v2439 = vunpack.c.h.b16 %v355
    %v2440 = vunpack.c.l.b16 %v356
    %v2441 = vunpack.c.h.b16 %v356
    %v2442 = vunpack.c.l.b16 %v357
    %v2443 = vunpack.c.h.b16 %v357
    %v2444 = vunpack.c.l.b16 %v358
    %v2445 = vunpack.c.h.b16 %v358
    %v2446 = vunpack.c.l.b16 %v359
    %v2447 = vunpack.c.h.b16 %v359
    %v2448 = vunpack.c.l.b16 %v360
    %v2449 = vunpack.c.h.b16 %v360
    %v2450 = vunpack.c.l.b16 %v361
    %v2451 = vunpack.c.h.b16 %v361
    %v2452 = vunpack.c.l.b16 %v362
    %v2453 = vunpack.c.h.b16 %v362
    %v2454 = vunpack.c.l.b16 %v363
    %v2455 = vunpack.c.h.b16 %v363
    %v2456 = vunpack.c.l.b16 %v364
    %v2457 = vunpack.c.h.b16 %v364
    %v2458 = vunpack.c.l.b16 %v365
    %v2459 = vunpack.c.h.b16 %v365
    %v2460 = vunpack.c.l.b16 %v366
    %v2461 = vunpack.c.h.b16 %v366
    %v2462 = vunpack.c.l.b16 %v367
    %v2463 = vunpack.c.h.b16 %v367
    %v2464 = vunpack.c.l.b16 %v368
    %v2465 = vunpack.c.h.b16 %v368
    %v2466 = vunpack.c.l.b16 %v369
    %v2467 = vunpack.c.h.b16 %v369
    %v2468 = vunpack.c.l.b16 %v370
    %v2469 = vunpack.c.h.b16 %v370
    %v2470 = vunpack.c.l.b16 %v371
    %v2471 = vunpack.c.h.b16 %v371
    %v2472 = vunpack.c.l.b16 %v372
    %v2473 = vunpack.c.h.b16 %v372
    %v2474 = vunpack.c.l.b16 %v373
    %v2475 = vunpack.c.h.b16 %v373
    %v2476 = vunpack.c.l.b16 %v374
    %v2477 = vunpack.c.h.b16 %v374
    %v2478 = vunpack.c.l.b16 %v375
    %v2479 = vunpack.c.h.b16 %v375
    %v2480 = vunpack.c.l.b16 %v376
    %v2481 = vunpack.c.h.b16 %v376
    %v2482 = vunpack.c.l.b16 %v377
    %v2483 = vunpack.c.h.b16 %v377
    %v2484 = vunpack.c.l.b16 %v378
    %v2485 = vunpack.c.h.b16 %v378
    %v2486 = vunpack.c.l.b16 %v379
    %v2487 = vunpack.c.h.b16 %v379
    %v2488 = vunpack.c.l.b16 %v380
    %v2489 = vunpack.c.h.b16 %v380
    %v2490 = vunpack.c.l.b16 %v381
    %v2491 = vunpack.c.h.b16 %v381
    %v2492 = vunpack.c.l.b16 %v382
    %v2493 = vunpack.c.h.b16 %v382
    %v2494 = vunpack.c.l.b16 %v383
    %v2495 = vunpack.c.h.b16 %v383
    %v2496 = vunpack.c.l.b16 %v384
    %v2497 = vunpack.c.h.b16 %v384
    %v2498 = vunpack.c.l.b16 %v385
    %v2499 = vunpack.c.h.b16 %v385
    %v2500 = vunpack.c.l.b16 %v386
    %v2501 = vunpack.c.h.b16 %v386
    %v2502 = vunpack.c.l.b16 %v387
    %v2503 = vunpack.c.h.b16 %v387
    %v2504 = vunpack.c.l.b16 %v388
    %v2505 = vunpack.c.h.b16 %v388
    %v2506 = vunpack.c.l.b16 %v389
    %v2507 = vunpack.c.h.b16 %v389
    %v2508 = vunpack.c.l.b16 %v390
    %v2509 = vunpack.c.h.b16 %v390
    %v2510 = vunpack.c.l.b16 %v391
    %v2511 = vunpack.c.h.b16 %v391
    %v2512 = vunpack.c.l.b16 %v392
    %v2513 = vunpack.c.h.b16 %v392
    %v2514 = vunpack.c.l.b16 %v393
    %v2515 = vunpack.c.h.b16 %v393
    %v2516 = vunpack.c.l.b16 %v394
    %v2517 = vunpack.c.h.b16 %v394
    %v2518 = vunpack.c.l.b16 %v395
    %v2519 = vunpack.c.h.b16 %v395
    %v2520 = vunpack.c.l.b16 %v396
    %v2521 = vunpack.c.h.b16 %v396
    %v2522 = vunpack.c.l.b16 %v397
    %v2523 = vunpack.c.h.b16 %v397
    %v2524 = vunpack.c.l.b16 %v398
    %v2525 = vunpack.c.h.b16 %v398
    %v2526 = vunpack.c.l.b16 %v399
    %v2527 = vunpack.c.h.b16 %v399
    %v2528 = vunpack.c.l.b16 %v400
    %v2529 = vunpack.c.h.b16 %v400
    %v2530 = vunpack.c.l.b16 %v401
    %v2531 = vunpack.c.h.b16 %v401
    %v2532 = vunpack.c.l.b16 %v402
    %v2533 = vunpack.c.h.b16 %v402
    %v2534 = vunpack.c.l.b16 %v403
    %v2535 = vunpack.c.h.b16 %v403
    %v2536 = vunpack.c.l.b16 %v404
    %v2537 = vunpack.c.h.b16 %v404
    %v2538 = vunpack.c.l.b16 %v405
    %v2539 = vunpack.c.h.b16 %v405
    %v2540 = vunpack.c.l.b16 %v406
    %v2541 = vunpack.c.h.b16 %v406
    %v2542 = vunpack.c.l.b16 %v407
    %v2543 = vunpack.c.h.b16 %v407
    %v2544 = vunpack.c.l.b16 %v408
    %v2545 = vunpack.c.h.b16 %v408
    %v2546 = vunpack.c.l.b16 %v409
    %v2547 = vunpack.c.h.b16 %v409
    %v2548 = vunpack.c.l.b16 %v410
    %v2549 = vunpack.c.h.b16 %v410
    %v2550 = vunpack.c.l.b16 %v411
    %v2551 = vunpack.c.h.b16 %v411
    %v2552 = vunpack.c.l.b16 %v412
    %v2553 = vunpack.c.h.b16 %v412
    %v2554 = vunpack.c.l.b16 %v413
    %v2555 = vunpack.c.h.b16 %v413
    %v2556 = vunpack.c.l.b16 %v414
    %v2557 = vunpack.c.h.b16 %v414
    %v2558 = vunpack.c.l.b16 %v415
    %v2559 = vunpack.c.h.b16 %v415
    %v2560 = vunpack.c.l.b16 %v416
    %v2561 = vunpack.c.h.b16 %v416
    %v2562 = vunpack.c.l.b16 %v417
    %v2563 = vunpack.c.h.b16 %v417
    %v2564 = vunpack.c.l.b16 %v418
    %v2565 = vunpack.c.h.b16 %v418
    %v2566 = vunpack.c.l.b16 %v419
    %v2567 = vunpack.c.h.b16 %v419
    %v2568 = vunpack.c.l.b16 %v420
    %v2569 = vunpack.c.h.b16 %v420
    %v2570 = vunpack.c.l.b16 %v421
    %v2571 = vunpack.c.h.b16 %v421
    %v2572 = vunpack.c.l.b16 %v422
    %v2573 = vunpack.c.h.b16 %v422
    %v2574 = vunpack.c.l.b16 %v423
    %v2575 = vunpack.c.h.b16 %v423
    %v2576 = vunpack.c.l.b16 %v424
    %v2577 = vunpack.c.h.b16 %v424
    %v2578 = vunpack.c.l.b16 %v425
    %v2579 = vunpack.c.h.b16 %v425
    %v2580 = vunpack.c.l.b16 %v426
    %v2581 = vunpack.c.h.b16 %v426
    %v2582 = vunpack.c.l.b16 %v427
    %v2583 = vunpack.c.h.b16 %v427
    %v2584 = vunpack.c.l.b16 %v428
    %v2585 = vunpack.c.h.b16 %v428
    %v2586 = vunpack.c.l.b16 %v429
    %v2587 = vunpack.c.h.b16 %v429
    %v2588 = vunpack.c.l.b16 %v430
    %v2589 = vunpack.c.h.b16 %v430
    %v2590 = vunpack.c.l.b16 %v431
    %v2591 = vunpack.c.h.b16 %v431
    %v2592 = vunpack.c.l.b16 %v432
    %v2593 = vunpack.c.h.b16 %v432
    %v2594 = vunpack.c.l.b16 %v433
    %v2595 = vunpack.c.h.b16 %v433
    %v2596 = vunpack.c.l.b16 %v434
    %v2597 = vunpack.c.h.b16 %v434
    %v2598 = vunpack.c.l.b16 %v435
    %v2599 = vunpack.c.h.b16 %v435
    %v2600 = vunpack.c.l.b16 %v436
    %v2601 = vunpack.c.h.b16 %v436
    %v2602 = vunpack.c.l.b16 %v437
    %v2603 = vunpack.c.h.b16 %v437
    %v2604 = vunpack.c.l.b16 %v438
    %v2605 = vunpack.c.h.b16 %v438
    %v2606 = vunpack.c.l.b16 %v439
    %v2607 = vunpack.c.h.b16 %v439
    %v2608 = vunpack.c.l.b16 %v440
    %v2609 = vunpack.c.h.b16 %v440
    %v2610 = vunpack.c.l.b16 %v441
    %v2611 = vunpack.c.h.b16 %v441
    %v2612 = vunpack.c.l.b16 %v442
    %v2613 = vunpack.c.h.b16 %v442
    %v2614 = vunpack.c.l.b16 %v443
    %v2615 = vunpack.c.h.b16 %v443
    %v2616 = vunpack.c.l.b16 %v444
    %v2617 = vunpack.c.h.b16 %v444
    %v2618 = vunpack.c.l.b16 %v445
    %v2619 = vunpack.c.h.b16 %v445
    %v2620 = vunpack.c.l.b16 %v446
    %v2621 = vunpack.c.h.b16 %v446
    %v2622 = vunpack.c.l.b16 %v447
    %v2623 = vunpack.c.h.b16 %v447
    %v2624 = vunpack.c.l.b16 %v448
    %v2625 = vunpack.c.h.b16 %v448
    %v2626 = vunpack.c.l.b16 %v449
    %v2627 = vunpack.c.h.b16 %v449
    %v2628 = vunpack.c.l.b16 %v450
    %v2629 = vunpack.c.h.b16 %v450
    %v2630 = vunpack.c.l.b16 %v451
    %v2631 = vunpack.c.h.b16 %v451
    %v2632 = vunpack.c.l.b16 %v452
    %v2633 = vunpack.c.h.b16 %v452
    %v2634 = vunpack.c.l.b16 %v453
    %v2635 = vunpack.c.h.b16 %v453
    %v2636 = vunpack.c.l.b16 %v454
    %v2637 = vunpack.c.h.b16 %v454
    %v2638 = vunpack.c.l.b16 %v455
    %v2639 = vunpack.c.h.b16 %v455
    %v2640 = vunpack.c.l.b16 %v456
    %v2641 = vunpack.c.h.b16 %v456
    %v2642 = vunpack.c.l.b16 %v457
    %v2643 = vunpack.c.h.b16 %v457
    %v2644 = vunpack.c.l.b16 %v458
    %v2645 = vunpack.c.h.b16 %v458
    %v2646 = vunpack.c.l.b16 %v459
    %v2647 = vunpack.c.h.b16 %v459
    %v2648 = vunpack.c.l.b16 %v460
    %v2649 = vunpack.c.h.b16 %v460
    %v2650 = vunpack.c.l.b16 %v461
    %v2651 = vunpack.c.h.b16 %v461
    %v2652 = vunpack.c.l.b16 %v462
    %v2653 = vunpack.c.h.b16 %v462
    %v2654 = vunpack.c.l.b16 %v463
    %v2655 = vunpack.c.h.b16 %v463
    %v2656 = vunpack.c.l.b16 %v464
    %v2657 = vunpack.c.h.b16 %v464
    %v2658 = vunpack.c.l.b16 %v465
    %v2659 = vunpack.c.h.b16 %v465
    %v2660 = vunpack.c.l.b16 %v466
    %v2661 = vunpack.c.h.b16 %v466
    %v2662 = vunpack.c.l.b16 %v467
    %v2663 = vunpack.c.h.b16 %v467
    %v2664 = vunpack.c.l.b16 %v468
    %v2665 = vunpack.c.h.b16 %v468
    %v2666 = vunpack.c.l.b16 %v469
    %v2667 = vunpack.c.h.b16 %v469
    %v2668 = vunpack.c.l.b16 %v470
    %v2669 = vunpack.c.h.b16 %v470
    %v2670 = vunpack.c.l.b16 %v471
    %v2671 = vunpack.c.h.b16 %v471
    %v2672 = vunpack.c.l.b16 %v472
    %v2673 = vunpack.c.h.b16 %v472
    %v2674 = vunpack.c.l.b16 %v473
    %v2675 = vunpack.c.h.b16 %v473
    %v2676 = vunpack.c.l.b16 %v474
    %v2677 = vunpack.c.h.b16 %v474
    %v2678 = vunpack.c.l.b16 %v475
    %v2679 = vunpack.c.h.b16 %v475
    %v2680 = vunpack.c.l.b16 %v476
    %v2681 = vunpack.c.h.b16 %v476
    %v2682 = vunpack.c.l.b16 %v477
    %v2683 = vunpack.c.h.b16 %v477
    %v2684 = vunpack.c.l.b16 %v478
    %v2685 = vunpack.c.h.b16 %v478
    %v2686 = vunpack.c.l.b16 %v479
    %v2687 = vunpack.c.h.b16 %v479
    %v2688 = vunpack.c.l.b16 %v480
    %v2689 = vunpack.c.h.b16 %v480
    %v2690 = vunpack.c.l.b16 %v481
    %v2691 = vunpack.c.h.b16 %v481
    %v2692 = vunpack.c.l.b16 %v482
    %v2693 = vunpack.c.h.b16 %v482
    %v2694 = vunpack.c.l.b16 %v483
    %v2695 = vunpack.c.h.b16 %v483
    %v2696 = vunpack.c.l.b16 %v484
    %v2697 = vunpack.c.h.b16 %v484
    %v2698 = vunpack.c.l.b16 %v485
    %v2699 = vunpack.c.h.b16 %v485
    %v2700 = vunpack.c.l.b16 %v486
    %v2701 = vunpack.c.h.b16 %v486
    %v2702 = vunpack.c.l.b16 %v487
    %v2703 = vunpack.c.h.b16 %v487
    %v2704 = vunpack.c.l.b16 %v488
    %v2705 = vunpack.c.h.b16 %v488
    %v2706 = vunpack.c.l.b16 %v489
    %v2707 = vunpack.c.h.b16 %v489
    %v2708 = vunpack.c.l.b16 %v490
    %v2709 = vunpack.c.h.b16 %v490
    %v2710 = vunpack.c.l.b16 %v491
    %v2711 = vunpack.c.h.b16 %v491
    %v2712 = vunpack.c.l.b16 %v492
    %v2713 = vunpack.c.h.b16 %v492
    %v2714 = vunpack.c.l.b16 %v493
    %v2715 = vunpack.c.h.b16 %v493
    %v2716 = vunpack.c.l.b16 %v494
    %v2717 = vunpack.c.h.b16 %v494
    %v2718 = vunpack.c.l.b16 %v495
    %v2719 = vunpack.c.h.b16 %v495
    %v2720 = vunpack.c.l.b16 %v496
    %v2721 = vunpack.c.h.b16 %v496
    %v2722 = vunpack.c.l.b16 %v497
    %v2723 = vunpack.c.h.b16 %v497
    %v2724 = vunpack.c.l.b16 %v498
    %v2725 = vunpack.c.h.b16 %v498
    %v2726 = vunpack.c.l.b16 %v499
    %v2727 = vunpack.c.h.b16 %v499
    %v2728 = vunpack.c.l.b16 %v500
    %v2729 = vunpack.c.h.b16 %v500
    %v2730 = vunpack.c.l.b16 %v501
    %v2731 = vunpack.c.h.b16 %v501
    %v2732 = vunpack.c.l.b16 %v502
    %v2733 = vunpack.c.h.b16 %v502
    %v2734 = vunpack.c.l.b16 %v503
    %v2735 = vunpack.c.h.b16 %v503
    %v2736 = vunpack.c.l.b16 %v504
    %v2737 = vunpack.c.h.b16 %v504
    %v2738 = vunpack.c.l.b16 %v505
    %v2739 = vunpack.c.h.b16 %v505
    %v2740 = vunpack.c.l.b16 %v506
    %v2741 = vunpack.c.h.b16 %v506
    %v2742 = vunpack.c.l.b16 %v507
    %v2743 = vunpack.c.h.b16 %v507
    %v2744 = vunpack.c.l.b16 %v508
    %v2745 = vunpack.c.h.b16 %v508
    %v2746 = vunpack.c.l.b16 %v509
    %v2747 = vunpack.c.h.b16 %v509
    %v2748 = vunpack.c.l.b16 %v510
    %v2749 = vunpack.c.h.b16 %v510
    %v2750 = vunpack.c.l.b16 %v511
    %v2751 = vunpack.c.h.b16 %v511
    %v2752 = vunpack.c.l.b16 %v512
    %v2753 = vunpack.c.h.b16 %v512
    %v2754 = vunpack.c.l.b16 %v513
    %v2755 = vunpack.c.h.b16 %v513
    %v2756 = vunpack.c.l.b16 %v514
    %v2757 = vunpack.c.h.b16 %v514
    %v2758 = vunpack.c.l.b16 %v515
    %v2759 = vunpack.c.h.b16 %v515
    %v2760 = vunpack.c.l.b16 %v516
    %v2761 = vunpack.c.h.b16 %v516
    %v2762 = vunpack.c.l.b16 %v517
    %v2763 = vunpack.c.h.b16 %v517
    %v2764 = vunpack.c.l.b16 %v518
    %v2765 = vunpack.c.h.b16 %v518
    %v2766 = vunpack.c.l.b16 %v519
    %v2767 = vunpack.c.h.b16 %v519
    %v2768 = vunpack.c.l.b16 %v520
    %v2769 = vunpack.c.h.b16 %v520
    %v2770 = vunpack.c.l.b16 %v521
    %v2771 = vunpack.c.h.b16 %v521
    %v2772 = vunpack.c.l.b16 %v522
    %v2773 = vunpack.c.h.b16 %v522
    %v2774 = vunpack.c.l.b16 %v523
    %v2775 = vunpack.c.h.b16 %v523
    %v2776 = vunpack.c.l.b16 %v524
    %v2777 = vunpack.c.h.b16 %v524
    %v2778 = vunpack.c.l.b16 %v525
    %v2779 = vunpack.c.h.b16 %v525
    %v2780 = vunpack.c.l.b16 %v526
    %v2781 = vunpack.c.h.b16 %v526
    %v2782 = vunpack.c.l.b16 %v527
    %v2783 = vunpack.c.h.b16 %v527
    %v2784 = vunpack.c.l.b16 %v528
    %v2785 = vunpack.c.h.b16 %v528
    %v2786 = vunpack.c.l.b16 %v529
    %v2787 = vunpack.c.h.b16 %v529
    %v2788 = vunpack.c.l.b16 %v530
    %v2789 = vunpack.c.h.b16 %v530
    %v2790 = vunpack.c.l.b16 %v531
    %v2791 = vunpack.c.h.b16 %v531
    %v2792 = vunpack.c.l.b16 %v532
    %v2793 = vunpack.c.h.b16 %v532
    %v2794 = vunpack.c.l.b16 %v533
    %v2795 = vunpack.c.h.b16 %v533
    %v2796 = vunpack.c.l.b16 %v534
    %v2797 = vunpack.c.h.b16 %v534
    %v2798 = vunpack.c.l.b16 %v535
    %v2799 = vunpack.c.h.b16 %v535
    %v2800 = vunpack.c.l.b16 %v536
    %v2801 = vunpack.c.h.b16 %v536
    %v2802 = vunpack.c.l.b16 %v537
    %v2803 = vunpack.c.h.b16 %v537
    %v2804 = vunpack.c.l.b16 %v538
    %v2805 = vunpack.c.h.b16 %v538
    %v2806 = vunpack.c.l.b16 %v539
    %v2807 = vunpack.c.h.b16 %v539
    %v2808 = vunpack.c.l.b16 %v540
    %v2809 = vunpack.c.h.b16 %v540
    %v2810 = vunpack.c.l.b16 %v541
    %v2811 = vunpack.c.h.b16 %v541
    %v2812 = vunpack.c.l.b16 %v542
    %v2813 = vunpack.c.h.b16 %v542
    %v2814 = vunpack.c.l.b16 %v543
    %v2815 = vunpack.c.h.b16 %v543
    %v2816 = vunpack.c.l.b16 %v544
    %v2817 = vunpack.c.h.b16 %v544
    %v2818 = vunpack.c.l.b16 %v545
    %v2819 = vunpack.c.h.b16 %v545
    %v2820 = vunpack.c.l.b16 %v546
    %v2821 = vunpack.c.h.b16 %v546
    %v2822 = vunpack.c.l.b16 %v547
    %v2823 = vunpack.c.h.b16 %v547
    %v2824 = vunpack.c.l.b16 %v548
    %v2825 = vunpack.c.h.b16 %v548
    %v2826 = vunpack.c.l.b16 %v549
    %v2827 = vunpack.c.h.b16 %v549
    %v2828 = vunpack.c.l.b16 %v550
    %v2829 = vunpack.c.h.b16 %v550
    %v2830 = vunpack.c.l.b16 %v551
    %v2831 = vunpack.c.h.b16 %v551
    %v2832 = vunpack.c.l.b16 %v552
    %v2833 = vunpack.c.h.b16 %v552
    %v2834 = vunpack.c.l.b16 %v553
    %v2835 = vunpack.c.h.b16 %v553
    %v2836 = vunpack.c.l.b16 %v554
    %v2837 = vunpack.c.h.b16 %v554
    %v2838 = vunpack.c.l.b16 %v555
    %v2839 = vunpack.c.h.b16 %v555
    %v2840 = vunpack.c.l.b16 %v556
    %v2841 = vunpack.c.h.b16 %v556
    %v2842 = vunpack.c.l.b16 %v557
    %v2843 = vunpack.c.h.b16 %v557
    %v2844 = vunpack.c.l.b16 %v558
    %v2845 = vunpack.c.h.b16 %v558
    %v2846 = vunpack.c.l.b16 %v559
    %v2847 = vunpack.c.h.b16 %v559
    %v2848 = vunpack.c.l.b16 %v560
    %v2849 = vunpack.c.h.b16 %v560
    %v2850 = vunpack.c.l.b16 %v561
    %v2851 = vunpack.c.h.b16 %v561
    %v2852 = vunpack.c.l.b16 %v562
    %v2853 = vunpack.c.h.b16 %v562
    %v2854 = vunpack.c.l.b16 %v563
    %v2855 = vunpack.c.h.b16 %v563
    %v2856 = vunpack.c.l.b16 %v564
    %v2857 = vunpack.c.h.b16 %v564
    %v2858 = vunpack.c.l.b16 %v565
    %v2859 = vunpack.c.h.b16 %v565
    %v2860 = vunpack.c.l.b16 %v566
    %v2861 = vunpack.c.h.b16 %v566
    %v2862 = vunpack.c.l.b16 %v567
    %v2863 = vunpack.c.h.b16 %v567
    %v2864 = vunpack.c.l.b16 %v568
    %v2865 = vunpack.c.h.b16 %v568
    %v2866 = vunpack.c.l.b16 %v569
    %v2867 = vunpack.c.h.b16 %v569
    %v2868 = vunpack.c.l.b16 %v570
    %v2869 = vunpack.c.h.b16 %v570
    %v2870 = vunpack.c.l.b16 %v571
    %v2871 = vunpack.c.h.b16 %v571
    %v2872 = vunpack.c.l.b16 %v572
    %v2873 = vunpack.c.h.b16 %v572
    %v2874 = vunpack.c.l.b16 %v573
    %v2875 = vunpack.c.h.b16 %v573
    %v2876 = vunpack.c.l.b16 %v574
    %v2877 = vunpack.c.h.b16 %v574
    %v2878 = vunpack.c.l.b16 %v575
    %v2879 = vunpack.c.h.b16 %v575
    %v2880 = vunpack.c.l.b16 %v576
    %v2881 = vunpack.c.h.b16 %v576
    %v2882 = vunpack.c.l.b16 %v577
    %v2883 = vunpack.c.h.b16 %v577
    %v2884 = vunpack.c.l.b16 %v578
    %v2885 = vunpack.c.h.b16 %v578
    %v2886 = vunpack.c.l.b16 %v579
    %v2887 = vunpack.c.h.b16 %v579
    %v2888 = vunpack.c.l.b16 %v580
    %v2889 = vunpack.c.h.b16 %v580
    %v2890 = vunpack.c.l.b16 %v581
    %v2891 = vunpack.c.h.b16 %v581
    %v2892 = vunpack.c.l.b16 %v582
    %v2893 = vunpack.c.h.b16 %v582
    %v2894 = vunpack.c.l.b16 %v583
    %v2895 = vunpack.c.h.b16 %v583
    %v2896 = vunpack.c.l.b16 %v584
    %v2897 = vunpack.c.h.b16 %v584
    %v2898 = vunpack.c.l.b16 %v585
    %v2899 = vunpack.c.h.b16 %v585
    %v2900 = vunpack.c.l.b16 %v586
    %v2901 = vunpack.c.h.b16 %v586
    %v2902 = vunpack.c.l.b16 %v587
    %v2903 = vunpack.c.h.b16 %v587
    %v2904 = vunpack.c.l.b16 %v588
    %v2905 = vunpack.c.h.b16 %v588
    %v2906 = vunpack.c.l.b16 %v589
    %v2907 = vunpack.c.h.b16 %v589
    %v2908 = vunpack.c.l.b16 %v590
    %v2909 = vunpack.c.h.b16 %v590
    %v2910 = vunpack.c.l.b16 %v591
    %v2911 = vunpack.c.h.b16 %v591
    %v2912 = vunpack.c.l.b16 %v592
    %v2913 = vunpack.c.h.b16 %v592
    %v2914 = vunpack.c.l.b16 %v593
    %v2915 = vunpack.c.h.b16 %v593
    %v2916 = vunpack.c.l.b16 %v594
    %v2917 = vunpack.c.h.b16 %v594
    %v2918 = vunpack.c.l.b16 %v595
    %v2919 = vunpack.c.h.b16 %v595
    %v2920 = vunpack.c.l.b16 %v596
    %v2921 = vunpack.c.h.b16 %v596
    %v2922 = vunpack.c.l.b16 %v597
    %v2923 = vunpack.c.h.b16 %v597
    %v2924 = vunpack.c.l.b16 %v598
    %v2925 = vunpack.c.h.b16 %v598
    %v2926 = vunpack.c.l.b16 %v599
    %v2927 = vunpack.c.h.b16 %v599
    %v2928 = vunpack.c.l.b16 %v600
    %v2929 = vunpack.c.h.b16 %v600
    %v2930 = vunpack.c.l.b16 %v601
    %v2931 = vunpack.c.h.b16 %v601
    %v2932 = vunpack.c.l.b16 %v602
    %v2933 = vunpack.c.h.b16 %v602
    %v2934 = vunpack.c.l.b16 %v603
    %v2935 = vunpack.c.h.b16 %v603
    %v2936 = vunpack.c.l.b16 %v604
    %v2937 = vunpack.c.h.b16 %v604
    %v2938 = vunpack.c.l.b16 %v605
    %v2939 = vunpack.c.h.b16 %v605
    %v2940 = vunpack.c.l.b16 %v606
    %v2941 = vunpack.c.h.b16 %v606
    %v2942 = vunpack.c.l.b16 %v607
    %v2943 = vunpack.c.h.b16 %v607
    %v2944 = vunpack.c.l.b16 %v608
    %v2945 = vunpack.c.h.b16 %v608
    %v2946 = vunpack.c.l.b16 %v609
    %v2947 = vunpack.c.h.b16 %v609
    %v2948 = vunpack.c.l.b16 %v610
    %v2949 = vunpack.c.h.b16 %v610
    %v2950 = vunpack.c.l.b16 %v611
    %v2951 = vunpack.c.h.b16 %v611
    %v2952 = vunpack.c.l.b16 %v612
    %v2953 = vunpack.c.h.b16 %v612
    %v2954 = vunpack.c.l.b16 %v613
    %v2955 = vunpack.c.h.b16 %v613
    %v2956 = vunpack.c.l.b16 %v614
    %v2957 = vunpack.c.h.b16 %v614
    %v2958 = vunpack.c.l.b16 %v615
    %v2959 = vunpack.c.h.b16 %v615
    %v2960 = vunpack.c.l.b16 %v616
    %v2961 = vunpack.c.h.b16 %v616
    %v2962 = vunpack.c.l.b16 %v617
    %v2963 = vunpack.c.h.b16 %v617
    %v2964 = vunpack.c.l.b16 %v618
    %v2965 = vunpack.c.h.b16 %v618
    %v2966 = vunpack.c.l.b16 %v619
    %v2967 = vunpack.c.h.b16 %v619
    %v2968 = vunpack.c.l.b16 %v620
    %v2969 = vunpack.c.h.b16 %v620
    %v2970 = vunpack.c.l.b16 %v621
    %v2971 = vunpack.c.h.b16 %v621
    %v2972 = vunpack.c.l.b16 %v622
    %v2973 = vunpack.c.h.b16 %v622
    %v2974 = vunpack.c.l.b16 %v623
    %v2975 = vunpack.c.h.b16 %v623
    %v2976 = vunpack.c.l.b16 %v624
    %v2977 = vunpack.c.h.b16 %v624
    %v2978 = vunpack.c.l.b16 %v625
    %v2979 = vunpack.c.h.b16 %v625
    %v2980 = vunpack.c.l.b16 %v626
    %v2981 = vunpack.c.h.b16 %v626
    %v2982 = vunpack.c.l.b16 %v627
    %v2983 = vunpack.c.h.b16 %v627
    %v2984 = vunpack.c.l.b16 %v628
    %v2985 = vunpack.c.h.b16 %v628
    %v2986 = vunpack.c.l.b16 %v629
    %v2987 = vunpack.c.h.b16 %v629
    %v2988 = vunpack.c.l.b16 %v630
    %v2989 = vunpack.c.h.b16 %v630
    %v2990 = vunpack.c.l.b16 %v631
    %v2991 = vunpack.c.h.b16 %v631
    %v2992 = vunpack.c.l.b16 %v632
    %v2993 = vunpack.c.h.b16 %v632
    %v2994 = vunpack.c.l.b16 %v633
    %v2995 = vunpack.c.h.b16 %v633
    %v2996 = vunpack.c.l.b16 %v634
    %v2997 = vunpack.c.h.b16 %v634
    %v2998 = vunpack.c.l.b16 %v635
    %v2999 = vunpack.c.h.b16 %v635
    %v3000 = vunpack.c.l.b16 %v636
    %v3001 = vunpack.c.h.b16 %v636
    %v3002 = vunpack.c.l.b16 %v637
    %v3003 = vunpack.c.h.b16 %v637
    %v3004 = vunpack.c.l.b16 %v638
    %v3005 = vunpack.c.h.b16 %v638
    %v3006 = vunpack.c.l.b16 %v639
    %v3007 = vunpack.c.h.b16 %v639
    %v3008 = vunpack.c.l.b16 %v640
    %v3009 = vunpack.c.h.b16 %v640
    %v3010 = vunpack.c.l.b16 %v641
    %v3011 = vunpack.c.h.b16 %v641
    %v3012 = vunpack.c.l.b16 %v642
    %v3013 = vunpack.c.h.b16 %v642
    %v3014 = vunpack.c.l.b16 %v643
    %v3015 = vunpack.c.h.b16 %v643
    %v3016 = vunpack.c.l.b16 %v644
    %v3017 = vunpack.c.h.b16 %v644
    %v3018 = vunpack.c.l.b16 %v645
    %v3019 = vunpack.c.h.b16 %v645
    %v3020 = vunpack.c.l.b16 %v646
    %v3021 = vunpack.c.h.b16 %v646
    %v3022 = vunpack.c.l.b16 %v647
    %v3023 = vunpack.c.h.b16 %v647
    %v3024 = vunpack.c.l.b16 %v648
    %v3025 = vunpack.c.h.b16 %v648
    %v3026 = vunpack.c.l.b16 %v649
    %v3027 = vunpack.c.h.b16 %v649
    %v3028 = vunpack.c.l.b16 %v650
    %v3029 = vunpack.c.h.b16 %v650
    %v3030 = vunpack.c.l.b16 %v651
    %v3031 = vunpack.c.h.b16 %v651
    %v3032 = vunpack.c.l.b16 %v652
    %v3033 = vunpack.c.h.b16 %v652
    %v3034 = vunpack.c.l.b16 %v653
    %v3035 = vunpack.c.h.b16 %v653
    %v3036 = vunpack.c.l.b16 %v654
    %v3037 = vunpack.c.h.b16 %v654
    %v3038 = vunpack.c.l.b16 %v655
    %v3039 = vunpack.c.h.b16 %v655
    %v3040 = vunpack.c.l.b16 %v656
    %v3041 = vunpack.c.h.b16 %v656
    %v3042 = vunpack.c.l.b16 %v657
    %v3043 = vunpack.c.h.b16 %v657
    %v3044 = vunpack.c.l.b16 %v658
    %v3045 = vunpack.c.h.b16 %v658
    %v3046 = vunpack.c.l.b16 %v659
    %v3047 = vunpack.c.h.b16 %v659
    %v3048 = vunpack.c.l.b16 %v660
    %v3049 = vunpack.c.h.b16 %v660
    %v3050 = vunpack.c.l.b16 %v661
    %v3051 = vunpack.c.h.b16 %v661
    %v3052 = vunpack.c.l.b16 %v662
    %v3053 = vunpack.c.h.b16 %v662
    %v3054 = vunpack.c.l.b16 %v663
    %v3055 = vunpack.c.h.b16 %v663
    %v3056 = vunpack.c.l.b16 %v664
    %v3057 = vunpack.c.h.b16 %v664
    %v3058 = vunpack.c.l.b16 %v665
    %v3059 = vunpack.c.h.b16 %v665
    %v3060 = vunpack.c.l.b16 %v666
    %v3061 = vunpack.c.h.b16 %v666
    %v3062 = vunpack.c.l.b16 %v667
    %v3063 = vunpack.c.h.b16 %v667
    %v3064 = vunpack.c.l.b16 %v668
    %v3065 = vunpack.c.h.b16 %v668
    %v3066 = vunpack.c.l.b16 %v669
    %v3067 = vunpack.c.h.b16 %v669
    %v3068 = vunpack.c.l.b16 %v670
    %v3069 = vunpack.c.h.b16 %v670
    %v3070 = vunpack.c.l.b16 %v671
    %v3071 = vunpack.c.h.b16 %v671
    %v3072 = vunpack.c.l.b16 %v672
    %v3073 = vunpack.c.h.b16 %v672
    %v3074 = vunpack.c.l.b16 %v673
    %v3075 = vunpack.c.h.b16 %v673
    %v3076 = vunpack.c.l.b16 %v674
    %v3077 = vunpack.c.h.b16 %v674
    %v3078 = vunpack.c.l.b16 %v675
    %v3079 = vunpack.c.h.b16 %v675
    %v3080 = vunpack.c.l.b16 %v676
    %v3081 = vunpack.c.h.b16 %v676
    %v3082 = vunpack.c.l.b16 %v677
    %v3083 = vunpack.c.h.b16 %v677
    %v3084 = vunpack.c.l.b16 %v678
    %v3085 = vunpack.c.h.b16 %v678
    %v3086 = vunpack.c.l.b16 %v679
    %v3087 = vunpack.c.h.b16 %v679
    %v3088 = vunpack.c.l.b16 %v680
    %v3089 = vunpack.c.h.b16 %v680
    %v3090 = vunpack.c.l.b16 %v681
    %v3091 = vunpack.c.h.b16 %v681
    %v3092 = vunpack.c.l.b16 %v682
    %v3093 = vunpack.c.h.b16 %v682
    %v3094 = vunpack.c.l.b16 %v683
    %v3095 = vunpack.c.h.b16 %v683
    %v3096 = vunpack.c.l.b16 %v684
    %v3097 = vunpack.c.h.b16 %v684
    %v3098 = vunpack.c.l.b16 %v685
    %v3099 = vunpack.c.h.b16 %v685
    %v3100 = vunpack.c.l.b16 %v686
    %v3101 = vunpack.c.h.b16 %v686
    %v3102 = vunpack.c.l.b16 %v687
    %v3103 = vunpack.c.h.b16 %v687
    %v3104 = vunpack.c.l.b16 %v688
    %v3105 = vunpack.c.h.b16 %v688
    %v3106 = vunpack.c.l.b16 %v689
    %v3107 = vunpack.c.h.b16 %v689
    %v3108 = vunpack.c.l.b16 %v690
    %v3109 = vunpack.c.h.b16 %v690
    %v3110 = vunpack.c.l.b16 %v691
    %v3111 = vunpack.c.h.b16 %v691
    %v3112 = vunpack.c.l.b16 %v692
    %v3113 = vunpack.c.h.b16 %v692
    %v3114 = vunpack.c.l.b16 %v693
    %v3115 = vunpack.c.h.b16 %v693
    %v3116 = vunpack.c.l.b16 %v694
    %v3117 = vunpack.c.h.b16 %v694
    %v3118 = vunpack.c.l.b16 %v695
    %v3119 = vunpack.c.h.b16 %v695
    %v3120 = vunpack.c.l.b16 %v696
    %v3121 = vunpack.c.h.b16 %v696
    %v3122 = vunpack.c.l.b16 %v697
    %v3123 = vunpack.c.h.b16 %v697
    %v3124 = vunpack.c.l.b16 %v698
    %v3125 = vunpack.c.h.b16 %v698
    %v3126 = vunpack.c.l.b16 %v699
    %v3127 = vunpack.c.h.b16 %v699
    %v3128 = vunpack.c.l.b16 %v700
    %v3129 = vunpack.c.h.b16 %v700
    %v3130 = vunpack.c.l.b16 %v701
    %v3131 = vunpack.c.h.b16 %v701
    %v3132 = vunpack.c.l.b16 %v702
    %v3133 = vunpack.c.h.b16 %v702
    %v3134 = vunpack.c.l.b16 %v703
    %v3135 = vunpack.c.h.b16 %v703
    %v3136 = vunpack.c.l.b16 %v704
    %v3137 = vunpack.c.h.b16 %v704
    %v3138 = vunpack.c.l.b16 %v705
    %v3139 = vunpack.c.h.b16 %v705
    %v3140 = vunpack.c.l.b16 %v706
    %v3141 = vunpack.c.h.b16 %v706
    %v3142 = vunpack.c.l.b16 %v707
    %v3143 = vunpack.c.h.b16 %v707
    %v3144 = vunpack.c.l.b16 %v708
    %v3145 = vunpack.c.h.b16 %v708
    %v3146 = vunpack.c.l.b16 %v709
    %v3147 = vunpack.c.h.b16 %v709
    %v3148 = vunpack.c.l.b16 %v710
    %v3149 = vunpack.c.h.b16 %v710
    %v3150 = vunpack.c.l.b16 %v711
    %v3151 = vunpack.c.h.b16 %v711
    %v3152 = vunpack.c.l.b16 %v712
    %v3153 = vunpack.c.h.b16 %v712
    %v3154 = vunpack.c.l.b16 %v713
    %v3155 = vunpack.c.h.b16 %v713
    %v3156 = vunpack.c.l.b16 %v714
    %v3157 = vunpack.c.h.b16 %v714
    %v3158 = vunpack.c.l.b16 %v715
    %v3159 = vunpack.c.h.b16 %v715
    %v3160 = vunpack.c.l.b16 %v716
    %v3161 = vunpack.c.h.b16 %v716
    %v3162 = vunpack.c.l.b16 %v717
    %v3163 = vunpack.c.h.b16 %v717
    %v3164 = vunpack.c.l.b16 %v718
    %v3165 = vunpack.c.h.b16 %v718
    %v3166 = vunpack.c.l.b16 %v719
    %v3167 = vunpack.c.h.b16 %v719
    %v3168 = vunpack.c.l.b16 %v720
    %v3169 = vunpack.c.h.b16 %v720
    %v3170 = vunpack.c.l.b16 %v721
    %v3171 = vunpack.c.h.b16 %v721
    %v3172 = vunpack.c.l.b16 %v722
    %v3173 = vunpack.c.h.b16 %v722
    %v3174 = vunpack.c.l.b16 %v723
    %v3175 = vunpack.c.h.b16 %v723
    %v3176 = vunpack.c.l.b16 %v724
    %v3177 = vunpack.c.h.b16 %v724
    %v3178 = vunpack.c.l.b16 %v725
    %v3179 = vunpack.c.h.b16 %v725
    %v3180 = vunpack.c.l.b16 %v726
    %v3181 = vunpack.c.h.b16 %v726
    %v3182 = vunpack.c.l.b16 %v727
    %v3183 = vunpack.c.h.b16 %v727
    %v3184 = vunpack.c.l.b16 %v728
    %v3185 = vunpack.c.h.b16 %v728
    %v3186 = vunpack.c.l.b16 %v729
    %v3187 = vunpack.c.h.b16 %v729
    %v3188 = vunpack.c.l.b16 %v730
    %v3189 = vunpack.c.h.b16 %v730
    %v3190 = vunpack.c.l.b16 %v731
    %v3191 = vunpack.c.h.b16 %v731
    %v3192 = vunpack.c.l.b16 %v732
    %v3193 = vunpack.c.h.b16 %v732
    %v3194 = vunpack.c.l.b16 %v733
    %v3195 = vunpack.c.h.b16 %v733
    %v3196 = vunpack.c.l.b16 %v734
    %v3197 = vunpack.c.h.b16 %v734
    %v3198 = vunpack.c.l.b16 %v735
    %v3199 = vunpack.c.h.b16 %v735
    %v3200 = vunpack.c.l.b16 %v736
    %v3201 = vunpack.c.h.b16 %v736
    %v3202 = vunpack.c.l.b16 %v737
    %v3203 = vunpack.c.h.b16 %v737
    %v3204 = vunpack.c.l.b16 %v738
    %v3205 = vunpack.c.h.b16 %v738
    %v3206 = vunpack.c.l.b16 %v739
    %v3207 = vunpack.c.h.b16 %v739
    %v3208 = vunpack.c.l.b16 %v740
    %v3209 = vunpack.c.h.b16 %v740
    %v3210 = vunpack.c.l.b16 %v741
    %v3211 = vunpack.c.h.b16 %v741
    %v3212 = vunpack.c.l.b16 %v742
    %v3213 = vunpack.c.h.b16 %v742
    %v3214 = vunpack.c.l.b16 %v743
    %v3215 = vunpack.c.h.b16 %v743
    %v3216 = vunpack.c.l.b16 %v744
    %v3217 = vunpack.c.h.b16 %v744
    %v3218 = vunpack.c.l.b16 %v745
    %v3219 = vunpack.c.h.b16 %v745
    %v3220 = vunpack.c.l.b16 %v746
    %v3221 = vunpack.c.h.b16 %v746
    %v3222 = vunpack.c.l.b16 %v747
    %v3223 = vunpack.c.h.b16 %v747
    %v3224 = vunpack.c.l.b16 %v748
    %v3225 = vunpack.c.h.b16 %v748
    %v3226 = vunpack.c.l.b16 %v749
    %v3227 = vunpack.c.h.b16 %v749
    %v3228 = vunpack.c.l.b16 %v750
    %v3229 = vunpack.c.h.b16 %v750
    %v3230 = vunpack.c.l.b16 %v751
    %v3231 = vunpack.c.h.b16 %v751
    %v3232 = vunpack.c.l.b16 %v752
    %v3233 = vunpack.c.h.b16 %v752
    %v3234 = vunpack.c.l.b16 %v753
    %v3235 = vunpack.c.h.b16 %v753
    %v3236 = vunpack.c.l.b16 %v754
    %v3237 = vunpack.c.h.b16 %v754
    %v3238 = vunpack.c.l.b16 %v755
    %v3239 = vunpack.c.h.b16 %v755
    %v3240 = vunpack.c.l.b16 %v756
    %v3241 = vunpack.c.h.b16 %v756
    %v3242 = vunpack.c.l.b16 %v757
    %v3243 = vunpack.c.h.b16 %v757
    %v3244 = vunpack.c.l.b16 %v758
    %v3245 = vunpack.c.h.b16 %v758
    %v3246 = vunpack.c.l.b16 %v759
    %v3247 = vunpack.c.h.b16 %v759
    %v3248 = vunpack.c.l.b16 %v760
    %v3249 = vunpack.c.h.b16 %v760
    %v3250 = vunpack.c.l.b16 %v761
    %v3251 = vunpack.c.h.b16 %v761
    %v3252 = vunpack.c.l.b16 %v762
    %v3253 = vunpack.c.h.b16 %v762
    %v3254 = vunpack.c.l.b16 %v763
    %v3255 = vunpack.c.h.b16 %v763
    %v3256 = vunpack.c.l.b16 %v764
    %v3257 = vunpack.c.h.b16 %v764
    %v3258 = vunpack.c.l.b16 %v765
    %v3259 = vunpack.c.h.b16 %v765
    %v3260 = vunpack.c.l.b16 %v766
    %v3261 = vunpack.c.h.b16 %v766
    %v3262 = vunpack.c.l.b16 %v767
    %v3263 = vunpack.c.h.b16 %v767
    %v3264 = vunpack.c.l.b16 %v768
    %v3265 = vunpack.c.h.b16 %v768
    %v3266 = vunpack.c.l.b16 %v769
    %v3267 = vunpack.c.h.b16 %v769
    %v3268 = vunpack.c.l.b16 %v770
    %v3269 = vunpack.c.h.b16 %v770
    %v3270 = vunpack.c.l.b16 %v771
    %v3271 = vunpack.c.h.b16 %v771
    %v3272 = vunpack.c.l.b16 %v772
    %v3273 = vunpack.c.h.b16 %v772
    %v3274 = vunpack.c.l.b16 %v773
    %v3275 = vunpack.c.h.b16 %v773
    %v3276 = vunpack.c.l.b16 %v774
    %v3277 = vunpack.c.h.b16 %v774
    %v3278 = vunpack.c.l.b16 %v775
    %v3279 = vunpack.c.h.b16 %v775
    %v3280 = vunpack.c.l.b16 %v776
    %v3281 = vunpack.c.h.b16 %v776
    %v3282 = vunpack.c.l.b16 %v777
    %v3283 = vunpack.c.h.b16 %v777
    %v3284 = vunpack.c.l.b16 %v778
    %v3285 = vunpack.c.h.b16 %v778
    %v3286 = vunpack.c.l.b16 %v779
    %v3287 = vunpack.c.h.b16 %v779
    %v3288 = vunpack.c.l.b16 %v780
    %v3289 = vunpack.c.h.b16 %v780
    %v3290 = vunpack.c.l.b16 %v781
    %v3291 = vunpack.c.h.b16 %v781
    %v3292 = vunpack.c.l.b16 %v782
    %v3293 = vunpack.c.h.b16 %v782
    %v3294 = vunpack.c.l.b16 %v783
    %v3295 = vunpack.c.h.b16 %v783
    %v3296 = vunpack.c.l.b16 %v784
    %v3297 = vunpack.c.h.b16 %v784
    %v3298 = vunpack.c.l.b16 %v785
    %v3299 = vunpack.c.h.b16 %v785
    %v3300 = vunpack.c.l.b16 %v786
    %v3301 = vunpack.c.h.b16 %v786
    %v3302 = vunpack.c.l.b16 %v787
    %v3303 = vunpack.c.h.b16 %v787
    %v3304 = vunpack.c.l.b16 %v788
    %v3305 = vunpack.c.h.b16 %v788
    %v3306 = vunpack.c.l.b16 %v789
    %v3307 = vunpack.c.h.b16 %v789
    %v3308 = vunpack.c.l.b16 %v790
    %v3309 = vunpack.c.h.b16 %v790
    %v3310 = vunpack.c.l.b16 %v791
    %v3311 = vunpack.c.h.b16 %v791
    %v3312 = vunpack.c.l.b16 %v792
    %v3313 = vunpack.c.h.b16 %v792
    %v3314 = vunpack.c.l.b16 %v793
    %v3315 = vunpack.c.h.b16 %v793
    %v3316 = vunpack.c.l.b16 %v794
    %v3317 = vunpack.c.h.b16 %v794
    %v3318 = vunpack.c.l.b16 %v795
    %v3319 = vunpack.c.h.b16 %v795
    %v3320 = vunpack.c.l.b16 %v796
    %v3321 = vunpack.c.h.b16 %v796
    %v3322 = vunpack.c.l.b16 %v797
    %v3323 = vunpack.c.h.b16 %v797
    %v3324 = vunpack.c.l.b16 %v798
    %v3325 = vunpack.c.h.b16 %v798
    %v3326 = vunpack.c.l.b16 %v799
    %v3327 = vunpack.c.h.b16 %v799
    %v3328 = vunpack.c.l.b16 %v800
    %v3329 = vunpack.c.h.b16 %v800
    %v3330 = vunpack.c.l.b16 %v801
    %v3331 = vunpack.c.h.b16 %v801
    %v3332 = vunpack.c.l.b16 %v802
    %v3333 = vunpack.c.h.b16 %v802
    %v3334 = vunpack.c.l.b16 %v803
    %v3335 = vunpack.c.h.b16 %v803
    %v3336 = vunpack.c.l.b16 %v804
    %v3337 = vunpack.c.h.b16 %v804
    %v3338 = vunpack.c.l.b16 %v805
    %v3339 = vunpack.c.h.b16 %v805
    %v3340 = vunpack.c.l.b16 %v806
    %v3341 = vunpack.c.h.b16 %v806
    %v3342 = vunpack.c.l.b16 %v807
    %v3343 = vunpack.c.h.b16 %v807
    %v3344 = vunpack.c.l.b16 %v808
    %v3345 = vunpack.c.h.b16 %v808
    %v3346 = vunpack.c.l.b16 %v809
    %v3347 = vunpack.c.h.b16 %v809
    %v3348 = vunpack.c.l.b16 %v810
    %v3349 = vunpack.c.h.b16 %v810
    %v3350 = vunpack.c.l.b16 %v811
    %v3351 = vunpack.c.h.b16 %v811
    %v3352 = vunpack.c.l.b16 %v812
    %v3353 = vunpack.c.h.b16 %v812
    %v3354 = vunpack.c.l.b16 %v813
    %v3355 = vunpack.c.h.b16 %v813
    %v3356 = vunpack.c.l.b16 %v814
    %v3357 = vunpack.c.h.b16 %v814
    %v3358 = vunpack.c.l.b16 %v815
    %v3359 = vunpack.c.h.b16 %v815
    %v3360 = vunpack.c.l.b16 %v816
    %v3361 = vunpack.c.h.b16 %v816
    %v3362 = vunpack.c.l.b16 %v817
    %v3363 = vunpack.c.h.b16 %v817
    %v3364 = vunpack.c.l.b16 %v818
    %v3365 = vunpack.c.h.b16 %v818
    %v3366 = vunpack.c.l.b16 %v819
    %v3367 = vunpack.c.h.b16 %v819
    %v3368 = vunpack.c.l.b16 %v820
    %v3369 = vunpack.c.h.b16 %v820
    %v3370 = vunpack.c.l.b16 %v821
    %v3371 = vunpack.c.h.b16 %v821
    %v3372 = vunpack.c.l.b16 %v822
    %v3373 = vunpack.c.h.b16 %v822
    %v3374 = vunpack.c.l.b16 %v823
    %v3375 = vunpack.c.h.b16 %v823
    %v3376 = vunpack.c.l.b16 %v824
    %v3377 = vunpack.c.h.b16 %v824
    %v3378 = vunpack.c.l.b16 %v825
    %v3379 = vunpack.c.h.b16 %v825
    %v3380 = vunpack.c.l.b16 %v826
    %v3381 = vunpack.c.h.b16 %v826
    %v3382 = vunpack.c.l.b16 %v827
    %v3383 = vunpack.c.h.b16 %v827
    %v3384 = vunpack.c.l.b16 %v828
    %v3385 = vunpack.c.h.b16 %v828
    %v3386 = vunpack.c.l.b16 %v829
    %v3387 = vunpack.c.h.b16 %v829
    %v3388 = vunpack.c.l.b16 %v830
    %v3389 = vunpack.c.h.b16 %v830
    %v3390 = vunpack.c.l.b16 %v831
    %v3391 = vunpack.c.h.b16 %v831
    %v3392 = vunpack.c.l.b16 %v832
    %v3393 = vunpack.c.h.b16 %v832
    %v3394 = vunpack.c.l.b16 %v833
    %v3395 = vunpack.c.h.b16 %v833
    %v3396 = vunpack.c.l.b16 %v834
    %v3397 = vunpack.c.h.b16 %v834
    %v3398 = vunpack.c.l.b16 %v835
    %v3399 = vunpack.c.h.b16 %v835
    %v3400 = vunpack.c.l.b16 %v836
    %v3401 = vunpack.c.h.b16 %v836
    %v3402 = vunpack.c.l.b16 %v837
    %v3403 = vunpack.c.h.b16 %v837
    %v3404 = vunpack.c.l.b16 %v838
    %v3405 = vunpack.c.h.b16 %v838
    %v3406 = vunpack.c.l.b16 %v839
    %v3407 = vunpack.c.h.b16 %v839
    %v3408 = vunpack.c.l.b16 %v840
    %v3409 = vunpack.c.h.b16 %v840
    %v3410 = vunpack.c.l.b16 %v841
    %v3411 = vunpack.c.h.b16 %v841
    %v3412 = vunpack.c.l.b16 %v842
    %v3413 = vunpack.c.h.b16 %v842
    %v3414 = vunpack.c.l.b16 %v843
    %v3415 = vunpack.c.h.b16 %v843
    %v3416 = vunpack.c.l.b16 %v844
    %v3417 = vunpack.c.h.b16 %v844
    %v3418 = vunpack.c.l.b16 %v845
    %v3419 = vunpack.c.h.b16 %v845
    %v3420 = vunpack.c.l.b16 %v846
    %v3421 = vunpack.c.h.b16 %v846
    %v3422 = vunpack.c.l.b16 %v847
    %v3423 = vunpack.c.h.b16 %v847
    %v3424 = vunpack.c.l.b16 %v848
    %v3425 = vunpack.c.h.b16 %v848
    %v3426 = vunpack.c.l.b16 %v849
    %v3427 = vunpack.c.h.b16 %v849
    %v3428 = vunpack.c.l.b16 %v850
    %v3429 = vunpack.c.h.b16 %v850
    %v3430 = vunpack.c.l.b16 %v851
    %v3431 = vunpack.c.h.b16 %v851
    %v3432 = vunpack.c.l.b16 %v852
    %v3433 = vunpack.c.h.b16 %v852
    %v3434 = vunpack.c.l.b16 %v853
    %v3435 = vunpack.c.h.b16 %v853
    %v3436 = vunpack.c.l.b16 %v854
    %v3437 = vunpack.c.h.b16 %v854
    %v3438 = vunpack.c.l.b16 %v855
    %v3439 = vunpack.c.h.b16 %v855
    %v3440 = vunpack.c.l.b16 %v856
    %v3441 = vunpack.c.h.b16 %v856
    %v3442 = vunpack.c.l.b16 %v857
    %v3443 = vunpack.c.h.b16 %v857
    %v3444 = vunpack.c.l.b16 %v858
    %v3445 = vunpack.c.h.b16 %v858
    %v3446 = vunpack.c.l.b16 %v859
    %v3447 = vunpack.c.h.b16 %v859
    %v3448 = vunpack.c.l.b16 %v860
    %v3449 = vunpack.c.h.b16 %v860
    %v3450 = vunpack.c.l.b16 %v861
    %v3451 = vunpack.c.h.b16 %v861
    %v3452 = vunpack.c.l.b16 %v862
    %v3453 = vunpack.c.h.b16 %v862
    %v3454 = vunpack.c.l.b16 %v863
    %v3455 = vunpack.c.h.b16 %v863
    %v3456 = vunpack.c.l.b16 %v864
    %v3457 = vunpack.c.h.b16 %v864
    %v3458 = vunpack.c.l.b16 %v865
    %v3459 = vunpack.c.h.b16 %v865
    %v3460 = vunpack.c.l.b16 %v866
    %v3461 = vunpack.c.h.b16 %v866
    %v3462 = vunpack.c.l.b16 %v867
    %v3463 = vunpack.c.h.b16 %v867
    %v3464 = vunpack.c.l.b16 %v868
    %v3465 = vunpack.c.h.b16 %v868
    %v3466 = vunpack.c.l.b16 %v869
    %v3467 = vunpack.c.h.b16 %v869
    %v3468 = vunpack.c.l.b16 %v870
    %v3469 = vunpack.c.h.b16 %v870
    %v3470 = vunpack.c.l.b16 %v871
    %v3471 = vunpack.c.h.b16 %v871
    %v3472 = vunpack.c.l.b16 %v872
    %v3473 = vunpack.c.h.b16 %v872
    %v3474 = vunpack.c.l.b16 %v873
    %v3475 = vunpack.c.h.b16 %v873
    %v3476 = vunpack.c.l.b16 %v874
    %v3477 = vunpack.c.h.b16 %v874
    %v3478 = vunpack.c.l.b16 %v875
    %v3479 = vunpack.c.h.b16 %v875
    %v3480 = vunpack.c.l.b16 %v876
    %v3481 = vunpack.c.h.b16 %v876
    %v3482 = vunpack.c.l.b16 %v877
    %v3483 = vunpack.c.h.b16 %v877
    %v3484 = vunpack.c.l.b16 %v878
    %v3485 = vunpack.c.h.b16 %v878
    %v3486 = vunpack.c.l.b16 %v879
    %v3487 = vunpack.c.h.b16 %v879
    %v3488 = vunpack.c.l.b16 %v880
    %v3489 = vunpack.c.h.b16 %v880
    %v3490 = vunpack.c.l.b16 %v881
    %v3491 = vunpack.c.h.b16 %v881
    %v3492 = vunpack.c.l.b16 %v882
    %v3493 = vunpack.c.h.b16 %v882
    %v3494 = vunpack.c.l.b16 %v883
    %v3495 = vunpack.c.h.b16 %v883
    %v3496 = vunpack.c.l.b16 %v884
    %v3497 = vunpack.c.h.b16 %v884
    %v3498 = vunpack.c.l.b16 %v885
    %v3499 = vunpack.c.h.b16 %v885
    %v3500 = vunpack.c.l.b16 %v886
    %v3501 = vunpack.c.h.b16 %v886
    %v3502 = vunpack.c.l.b16 %v887
    %v3503 = vunpack.c.h.b16 %v887
    %v3504 = vunpack.c.l.b16 %v888
    %v3505 = vunpack.c.h.b16 %v888
    %v3506 = vunpack.c.l.b16 %v889
    %v3507 = vunpack.c.h.b16 %v889
    %v3508 = vunpack.c.l.b16 %v890
    %v3509 = vunpack.c.h.b16 %v890
    %v3510 = vunpack.c.l.b16 %v891
    %v3511 = vunpack.c.h.b16 %v891
    %v3512 = vunpack.c.l.b16 %v892
    %v3513 = vunpack.c.h.b16 %v892
    %v3514 = vunpack.c.l.b16 %v893
    %v3515 = vunpack.c.h.b16 %v893
    %v3516 = vunpack.c.l.b16 %v894
    %v3517 = vunpack.c.h.b16 %v894
    %v3518 = vunpack.c.l.b16 %v895
    %v3519 = vunpack.c.h.b16 %v895
    %v3520 = vunpack.c.l.b16 %v896
    %v3521 = vunpack.c.h.b16 %v896
    %v3522 = vunpack.c.l.b16 %v897
    %v3523 = vunpack.c.h.b16 %v897
    %v3524 = vunpack.c.l.b16 %v898
    %v3525 = vunpack.c.h.b16 %v898
    %v3526 = vunpack.c.l.b16 %v899
    %v3527 = vunpack.c.h.b16 %v899
    %v3528 = vunpack.c.l.b16 %v900
    %v3529 = vunpack.c.h.b16 %v900
    %v3530 = vunpack.c.l.b16 %v901
    %v3531 = vunpack.c.h.b16 %v901
    %v3532 = vunpack.c.l.b16 %v902
    %v3533 = vunpack.c.h.b16 %v902
    %v3534 = vunpack.c.l.b16 %v903
    %v3535 = vunpack.c.h.b16 %v903
    %v3536 = vunpack.c.l.b16 %v904
    %v3537 = vunpack.c.h.b16 %v904
    %v3538 = vunpack.c.l.b16 %v905
    %v3539 = vunpack.c.h.b16 %v905
    %v3540 = vunpack.c.l.b16 %v906
    %v3541 = vunpack.c.h.b16 %v906
    %v3542 = vunpack.c.l.b16 %v907
    %v3543 = vunpack.c.h.b16 %v907
    %v3544 = vunpack.c.l.b16 %v908
    %v3545 = vunpack.c.h.b16 %v908
    %v3546 = vunpack.c.l.b16 %v909
    %v3547 = vunpack.c.h.b16 %v909
    %v3548 = vunpack.c.l.b16 %v910
    %v3549 = vunpack.c.h.b16 %v910
    %v3550 = vunpack.c.l.b16 %v911
    %v3551 = vunpack.c.h.b16 %v911
    %v3552 = vunpack.c.l.b16 %v912
    %v3553 = vunpack.c.h.b16 %v912
    %v3554 = vunpack.c.l.b16 %v913
    %v3555 = vunpack.c.h.b16 %v913
    %v3556 = vunpack.c.l.b16 %v914
    %v3557 = vunpack.c.h.b16 %v914
    %v3558 = vunpack.c.l.b16 %v915
    %v3559 = vunpack.c.h.b16 %v915
    %v3560 = vunpack.c.l.b16 %v916
    %v3561 = vunpack.c.h.b16 %v916
    %v3562 = vunpack.c.l.b16 %v917
    %v3563 = vunpack.c.h.b16 %v917
    %v3564 = vunpack.c.l.b16 %v918
    %v3565 = vunpack.c.h.b16 %v918
    %v3566 = vunpack.c.l.b16 %v919
    %v3567 = vunpack.c.h.b16 %v919
    %v3568 = vunpack.c.l.b16 %v920
    %v3569 = vunpack.c.h.b16 %v920
    %v3570 = vunpack.c.l.b16 %v921
    %v3571 = vunpack.c.h.b16 %v921
    %v3572 = vunpack.c.l.b16 %v922
    %v3573 = vunpack.c.h.b16 %v922
    %v3574 = vunpack.c.l.b16 %v923
    %v3575 = vunpack.c.h.b16 %v923
    %v3576 = vunpack.c.l.b16 %v924
    %v3577 = vunpack.c.h.b16 %v924
    %v3578 = vunpack.c.l.b16 %v925
    %v3579 = vunpack.c.h.b16 %v925
    %v3580 = vunpack.c.l.b16 %v926
    %v3581 = vunpack.c.h.b16 %v926
    %v3582 = vunpack.c.l.b16 %v927
    %v3583 = vunpack.c.h.b16 %v927
    %v3584 = vunpack.c.l.b16 %v928
    %v3585 = vunpack.c.h.b16 %v928
    %v3586 = vunpack.c.l.b16 %v929
    %v3587 = vunpack.c.h.b16 %v929
    %v3588 = vunpack.c.l.b16 %v930
    %v3589 = vunpack.c.h.b16 %v930
    %v3590 = vunpack.c.l.b16 %v931
    %v3591 = vunpack.c.h.b16 %v931
    %v3592 = vunpack.c.l.b16 %v932
    %v3593 = vunpack.c.h.b16 %v932
    %v3594 = vunpack.c.l.b16 %v933
    %v3595 = vunpack.c.h.b16 %v933
    %v3596 = vunpack.c.l.b16 %v934
    %v3597 = vunpack.c.h.b16 %v934
    %v3598 = vunpack.c.l.b16 %v935
    %v3599 = vunpack.c.h.b16 %v935
    %v3600 = vunpack.c.l.b16 %v936
    %v3601 = vunpack.c.h.b16 %v936
    %v3602 = vunpack.c.l.b16 %v937
    %v3603 = vunpack.c.h.b16 %v937
    %v3604 = vunpack.c.l.b16 %v938
    %v3605 = vunpack.c.h.b16 %v938
    %v3606 = vunpack.c.l.b16 %v939
    %v3607 = vunpack.c.h.b16 %v939
    %v3608 = vunpack.c.l.b16 %v940
    %v3609 = vunpack.c.h.b16 %v940
    %v3610 = vunpack.c.l.b16 %v941
    %v3611 = vunpack.c.h.b16 %v941
    %v3612 = vunpack.c.l.b16 %v942
    %v3613 = vunpack.c.h.b16 %v942
    %v3614 = vunpack.c.l.b16 %v943
    %v3615 = vunpack.c.h.b16 %v943
    %v3616 = vunpack.c.l.b16 %v944
    %v3617 = vunpack.c.h.b16 %v944
    %v3618 = vunpack.c.l.b16 %v945
    %v3619 = vunpack.c.h.b16 %v945
    %v3620 = vunpack.c.l.b16 %v946
    %v3621 = vunpack.c.h.b16 %v946
    %v3622 = vunpack.c.l.b16 %v947
    %v3623 = vunpack.c.h.b16 %v947
    %v3624 = vunpack.c.l.b16 %v948
    %v3625 = vunpack.c.h.b16 %v948
    %v3626 = vunpack.c.l.b16 %v949
    %v3627 = vunpack.c.h.b16 %v949
    %v3628 = vunpack.c.l.b16 %v950
    %v3629 = vunpack.c.h.b16 %v950
    %v3630 = vunpack.c.l.b16 %v951
    %v3631 = vunpack.c.h.b16 %v951
    %v3632 = vunpack.c.l.b16 %v952
    %v3633 = vunpack.c.h.b16 %v952
    %v3634 = vunpack.c.l.b16 %v953
    %v3635 = vunpack.c.h.b16 %v953
    %v3636 = vunpack.c.l.b16 %v954
    %v3637 = vunpack.c.h.b16 %v954
    %v3638 = vunpack.c.l.b16 %v955
    %v3639 = vunpack.c.h.b16 %v955
    %v3640 = vunpack.c.l.b16 %v956
    %v3641 = vunpack.c.h.b16 %v956
    %v3642 = vunpack.c.l.b16 %v957
    %v3643 = vunpack.c.h.b16 %v957
    %v3644 = vunpack.c.l.b16 %v958
    %v3645 = vunpack.c.h.b16 %v958
    %v3646 = vunpack.c.l.b16 %v959
    %v3647 = vunpack.c.h.b16 %v959
    %v3648 = vpack.c.b16 %v1938, %v1920
    %v3649 = vpack.c.b16 %v1939, %v1921
    %v3650 = vpack.c.b16 %v1940, %v1922
    %v3651 = vpack.c.b16 %v1941, %v1923
    %v3652 = vpack.c.b16 %v1942, %v1924
    %v3653 = vpack.c.b16 %v1943, %v1925
    %v3654 = vpack.c.b16 %v1944, %v1926
    %v3655 = vpack.c.b16 %v1945, %v1927
    %v3656 = vpack.c.b16 %v1946, %v1928
    %v3657 = vpack.c.b16 %v1947, %v1929
    %v3658 = vpack.c.b16 %v1948, %v1930
    %v3659 = vpack.c.b16 %v1949, %v1931
    %v3660 = vpack.c.b16 %v1950, %v1932
    %v3661 = vpack.c.b16 %v1951, %v1933
    %v3662 = vpack.c.b16 %v1952, %v1934
    %v3663 = vpack.c.b16 %v1953, %v1935
    %v3664 = vpack.c.b16 %v1954, %v1936
    %v3665 = vpack.c.b16 %v1955, %v1937
    %v3666 = vpack.c.b16 %v1974, %v1956
    %v3667 = vpack.c.b16 %v1975, %v1957
    %v3668 = vpack.c.b16 %v1976, %v1958
    %v3669 = vpack.c.b16 %v1977, %v1959
    %v3670 = vpack.c.b16 %v1978, %v1960
    %v3671 = vpack.c.b16 %v1979, %v1961
    %v3672 = vpack.c.b16 %v1980, %v1962
    %v3673 = vpack.c.b16 %v1981, %v1963
    %v3674 = vpack.c.b16 %v1982, %v1964
    %v3675 = vpack.c.b16 %v1983, %v1965
    %v3676 = vpack.c.b16 %v1984, %v1966
    %v3677 = vpack.c.b16 %v1985, %v1967
    %v3678 = vpack.c.b16 %v1986, %v1968
    %v3679 = vpack.c.b16 %v1987, %v1969
    %v3680 = vpack.c.b16 %v1988, %v1970
    %v3681 = vpack.c.b16 %v1989, %v1971
    %v3682 = vpack.c.b16 %v1990, %v1972
    %v3683 = vpack.c.b16 %v1991, %v1973
    %v3684 = vpack.c.b16 %v2010, %v1992
    %v3685 = vpack.c.b16 %v2011, %v1993
    %v3686 = vpack.c.b16 %v2012, %v1994
    %v3687 = vpack.c.b16 %v2013, %v1995
    %v3688 = vpack.c.b16 %v2014, %v1996
    %v3689 = vpack.c.b16 %v2015, %v1997
    %v3690 = vpack.c.b16 %v2016, %v1998
    %v3691 = vpack.c.b16 %v2017, %v1999
    %v3692 = vpack.c.b16 %v2018, %v2000
    %v3693 = vpack.c.b16 %v2019, %v2001
    %v3694 = vpack.c.b16 %v2020, %v2002
    %v3695 = vpack.c.b16 %v2021, %v2003
    %v3696 = vpack.c.b16 %v2022, %v2004
    %v3697 = vpack.c.b16 %v2023, %v2005
    %v3698 = vpack.c.b16 %v2024, %v2006
    %v3699 = vpack.c.b16 %v2025, %v2007
    %v3700 = vpack.c.b16 %v2026, %v2008
    %v3701 = vpack.c.b16 %v2027, %v2009
    %v3702 = vpack.c.b16 %v2046, %v2028
    %v3703 = vpack.c.b16 %v2047, %v2029
    %v3704 = vpack.c.b16 %v2048, %v2030
    %v3705 = vpack.c.b16 %v2049, %v2031
    %v3706 = vpack.c.b16 %v2050, %v2032
    %v3707 = vpack.c.b16 %v2051, %v2033
    %v3708 = vpack.c.b16 %v2052, %v2034
    %v3709 = vpack.c.b16 %v2053, %v2035
    %v3710 = vpack.c.b16 %v2054, %v2036
    %v3711 = vpack.c.b16 %v2055, %v2037
    %v3712 = vpack.c.b16 %v2056, %v2038
    %v3713 = vpack.c.b16 %v2057, %v2039
    %v3714 = vpack.c.b16 %v2058, %v2040
    %v3715 = vpack.c.b16 %v2059, %v2041
    %v3716 = vpack.c.b16 %v2060, %v2042
    %v3717 = vpack.c.b16 %v2061, %v2043
    %v3718 = vpack.c.b16 %v2062, %v2044
    %v3719 = vpack.c.b16 %v2063, %v2045
    %v3720 = vpack.c.b16 %v2082, %v2064
    %v3721 = vpack.c.b16 %v2083, %v2065
    %v3722 = vpack.c.b16 %v2084, %v2066
    %v3723 = vpack.c.b16 %v2085, %v2067
    %v3724 = vpack.c.b16 %v2086, %v2068
    %v3725 = vpack.c.b16 %v2087, %v2069
    %v3726 = vpack.c.b16 %v2088, %v2070
    %v3727 = vpack.c.b16 %v2089, %v2071
    %v3728 = vpack.c.b16 %v2090, %v2072
    %v3729 = vpack.c.b16 %v2091, %v2073
    %v3730 = vpack.c.b16 %v2092, %v2074
    %v3731 = vpack.c.b16 %v2093, %v2075
    %v3732 = vpack.c.b16 %v2094, %v2076
    %v3733 = vpack.c.b16 %v2095, %v2077
    %v3734 = vpack.c.b16 %v2096, %v2078
    %v3735 = vpack.c.b16 %v2097, %v2079
    %v3736 = vpack.c.b16 %v2098, %v2080
    %v3737 = vpack.c.b16 %v2099, %v2081
    %v3738 = vpack.c.b16 %v2118, %v2100
    %v3739 = vpack.c.b16 %v2119, %v2101
    %v3740 = vpack.c.b16 %v2120, %v2102
    %v3741 = vpack.c.b16 %v2121, %v2103
    %v3742 = vpack.c.b16 %v2122, %v2104
    %v3743 = vpack.c.b16 %v2123, %v2105
    %v3744 = vpack.c.b16 %v2124, %v2106
    %v3745 = vpack.c.b16 %v2125, %v2107
    %v3746 = vpack.c.b16 %v2126, %v2108
    %v3747 = vpack.c.b16 %v2127, %v2109
    %v3748 = vpack.c.b16 %v2128, %v2110
    %v3749 = vpack.c.b16 %v2129, %v2111
    %v3750 = vpack.c.b16 %v2130, %v2112
    %v3751 = vpack.c.b16 %v2131, %v2113
    %v3752 = vpack.c.b16 %v2132, %v2114
    %v3753 = vpack.c.b16 %v2133, %v2115
    %v3754 = vpack.c.b16 %v2134, %v2116
    %v3755 = vpack.c.b16 %v2135, %v2117
    %v3756 = vpack.c.b16 %v2154, %v2136
    %v3757 = vpack.c.b16 %v2155, %v2137
    %v3758 = vpack.c.b16 %v2156, %v2138
    %v3759 = vpack.c.b16 %v2157, %v2139
    %v3760 = vpack.c.b16 %v2158, %v2140
    %v3761 = vpack.c.b16 %v2159, %v2141
    %v3762 = vpack.c.b16 %v2160, %v2142
    %v3763 = vpack.c.b16 %v2161, %v2143
    %v3764 = vpack.c.b16 %v2162, %v2144
    %v3765 = vpack.c.b16 %v2163, %v2145
    %v3766 = vpack.c.b16 %v2164, %v2146
    %v3767 = vpack.c.b16 %v2165, %v2147
    %v3768 = vpack.c.b16 %v2166, %v2148
    %v3769 = vpack.c.b16 %v2167, %v2149
    %v3770 = vpack.c.b16 %v2168, %v2150
    %v3771 = vpack.c.b16 %v2169, %v2151
    %v3772 = vpack.c.b16 %v2170, %v2152
    %v3773 = vpack.c.b16 %v2171, %v2153
    %v3774 = vpack.c.b16 %v2190, %v2172
    %v3775 = vpack.c.b16 %v2191, %v2173
    %v3776 = vpack.c.b16 %v2192, %v2174
    %v3777 = vpack.c.b16 %v2193, %v2175
    %v3778 = vpack.c.b16 %v2194, %v2176
    %v3779 = vpack.c.b16 %v2195, %v2177
    %v3780 = vpack.c.b16 %v2196, %v2178
    %v3781 = vpack.c.b16 %v2197, %v2179
    %v3782 = vpack.c.b16 %v2198, %v2180
    %v3783 = vpack.c.b16 %v2199, %v2181
    %v3784 = vpack.c.b16 %v2200, %v2182
    %v3785 = vpack.c.b16 %v2201, %v2183
    %v3786 = vpack.c.b16 %v2202, %v2184
    %v3787 = vpack.c.b16 %v2203, %v2185
    %v3788 = vpack.c.b16 %v2204, %v2186
    %v3789 = vpack.c.b16 %v2205, %v2187
    %v3790 = vpack.c.b16 %v2206, %v2188
    %v3791 = vpack.c.b16 %v2207, %v2189
    %v3792 = vpack.c.b16 %v2226, %v2208
    %v3793 = vpack.c.b16 %v2227, %v2209
    %v3794 = vpack.c.b16 %v2228, %v2210
    %v3795 = vpack.c.b16 %v2229, %v2211
    %v3796 = vpack.c.b16 %v2230, %v2212
    %v3797 = vpack.c.b16 %v2231, %v2213
    %v3798 = vpack.c.b16 %v2232, %v2214
    %v3799 = vpack.c.b16 %v2233, %v2215
    %v3800 = vpack.c.b16 %v2234, %v2216
    %v3801 = vpack.c.b16 %v2235, %v2217
    %v3802 = vpack.c.b16 %v2236, %v2218
    %v3803 = vpack.c.b16 %v2237, %v2219
    %v3804 = vpack.c.b16 %v2238, %v2220
    %v3805 = vpack.c.b16 %v2239, %v2221
    %v3806 = vpack.c.b16 %v2240, %v2222
    %v3807 = vpack.c.b16 %v2241, %v2223
    %v3808 = vpack.c.b16 %v2242, %v2224
    %v3809 = vpack.c.b16 %v2243, %v2225
    %v3810 = vpack.c.b16 %v2262, %v2244
    %v3811 = vpack.c.b16 %v2263, %v2245
    %v3812 = vpack.c.b16 %v2264, %v2246
    %v3813 = vpack.c.b16 %v2265, %v2247
    %v3814 = vpack.c.b16 %v2266, %v2248
    %v3815 = vpack.c.b16 %v2267, %v2249
    %v3816 = vpack.c.b16 %v2268, %v2250
    %v3817 = vpack.c.b16 %v2269, %v2251
    %v3818 = vpack.c.b16 %v2270, %v2252
    %v3819 = vpack.c.b16 %v2271, %v2253
    %v3820 = vpack.c.b16 %v2272, %v2254
    %v3821 = vpack.c.b16 %v2273, %v2255
    %v3822 = vpack.c.b16 %v2274, %v2256
    %v3823 = vpack.c.b16 %v2275, %v2257
    %v3824 = vpack.c.b16 %v2276, %v2258
    %v3825 = vpack.c.b16 %v2277, %v2259
    %v3826 = vpack.c.b16 %v2278, %v2260
    %v3827 = vpack.c.b16 %v2279, %v2261
    %v3828 = vpack.c.b16 %v2298, %v2280
    %v3829 = vpack.c.b16 %v2299, %v2281
    %v3830 = vpack.c.b16 %v2300, %v2282
    %v3831 = vpack.c.b16 %v2301, %v2283
    %v3832 = vpack.c.b16 %v2302, %v2284
    %v3833 = vpack.c.b16 %v2303, %v2285
    %v3834 = vpack.c.b16 %v2304, %v2286
    %v3835 = vpack.c.b16 %v2305, %v2287
    %v3836 = vpack.c.b16 %v2306, %v2288
    %v3837 = vpack.c.b16 %v2307, %v2289
    %v3838 = vpack.c.b16 %v2308, %v2290
    %v3839 = vpack.c.b16 %v2309, %v2291
    %v3840 = vpack.c.b16 %v2310, %v2292
    %v3841 = vpack.c.b16 %v2311, %v2293
    %v3842 = vpack.c.b16 %v2312, %v2294
    %v3843 = vpack.c.b16 %v2313, %v2295
    %v3844 = vpack.c.b16 %v2314, %v2296
    %v3845 = vpack.c.b16 %v2315, %v2297
    %v3846 = vpack.c.b16 %v2334, %v2316
    %v3847 = vpack.c.b16 %v2335, %v2317
    %v3848 = vpack.c.b16 %v2336, %v2318
    %v3849 = vpack.c.b16 %v2337, %v2319
    %v3850 = vpack.c.b16 %v2338, %v2320
    %v3851 = vpack.c.b16 %v2339, %v2321
    %v3852 = vpack.c.b16 %v2340, %v2322
    %v3853 = vpack.c.b16 %v2341, %v2323
    %v3854 = vpack.c.b16 %v2342, %v2324
    %v3855 = vpack.c.b16 %v2343, %v2325
    %v3856 = vpack.c.b16 %v2344, %v2326
    %v3857 = vpack.c.b16 %v2345, %v2327
    %v3858 = vpack.c.b16 %v2346, %v2328
    %v3859 = vpack.c.b16 %v2347, %v2329
    %v3860 = vpack.c.b16 %v2348, %v2330
    %v3861 = vpack.c.b16 %v2349, %v2331
    %v3862 = vpack.c.b16 %v2350, %v2332
    %v3863 = vpack.c.b16 %v2351, %v2333
    %v3864 = vpack.c.b16 %v2370, %v2352
    %v3865 = vpack.c.b16 %v2371, %v2353
    %v3866 = vpack.c.b16 %v2372, %v2354
    %v3867 = vpack.c.b16 %v2373, %v2355
    %v3868 = vpack.c.b16 %v2374, %v2356
    %v3869 = vpack.c.b16 %v2375, %v2357
    %v3870 = vpack.c.b16 %v2376, %v2358
    %v3871 = vpack.c.b16 %v2377, %v2359
    %v3872 = vpack.c.b16 %v2378, %v2360
    %v3873 = vpack.c.b16 %v2379, %v2361
    %v3874 = vpack.c.b16 %v2380, %v2362
    %v3875 = vpack.c.b16 %v2381, %v2363
    %v3876 = vpack.c.b16 %v2382, %v2364
    %v3877 = vpack.c.b16 %v2383, %v2365
    %v3878 = vpack.c.b16 %v2384, %v2366
    %v3879 = vpack.c.b16 %v2385, %v2367
    %v3880 = vpack.c.b16 %v2386, %v2368
    %v3881 = vpack.c.b16 %v2387, %v2369
    %v3882 = vpack.c.b16 %v2406, %v2388
    %v3883 = vpack.c.b16 %v2407, %v2389
    %v3884 = vpack.c.b16 %v2408, %v2390
    %v3885 = vpack.c.b16 %v2409, %v2391
    %v3886 = vpack.c.b16 %v2410, %v2392
    %v3887 = vpack.c.b16 %v2411, %v2393
    %v3888 = vpack.c.b16 %v2412, %v2394
    %v3889 = vpack.c.b16 %v2413, %v2395
    %v3890 = vpack.c.b16 %v2414, %v2396
    %v3891 = vpack.c.b16 %v2415, %v2397
    %v3892 = vpack.c.b16 %v2416, %v2398
    %v3893 = vpack.c.b16 %v2417, %v2399
    %v3894 = vpack.c.b16 %v2418, %v2400
    %v3895 = vpack.c.b16 %v2419, %v2401
    %v3896 = vpack.c.b16 %v2420, %v2402
    %v3897 = vpack.c.b16 %v2421, %v2403
    %v3898 = vpack.c.b16 %v2422, %v2404
    %v3899 = vpack.c.b16 %v2423, %v2405
    %v3900 = vpack.c.b16 %v2442, %v2424
    %v3901 = vpack.c.b16 %v2443, %v2425
    %v3902 = vpack.c.b16 %v2444, %v2426
    %v3903 = vpack.c.b16 %v2445, %v2427
    %v3904 = vpack.c.b16 %v2446, %v2428
    %v3905 = vpack.c.b16 %v2447, %v2429
    %v3906 = vpack.c.b16 %v2448, %v2430
    %v3907 = vpack.c.b16 %v2449, %v2431
    %v3908 = vpack.c.b16 %v2450, %v2432
    %v3909 = vpack.c.b16 %v2451, %v2433
    %v3910 = vpack.c.b16 %v2452, %v2434
    %v3911 = vpack.c.b16 %v2453, %v2435
    %v3912 = vpack.c.b16 %v2454, %v2436
    %v3913 = vpack.c.b16 %v2455, %v2437
    %v3914 = vpack.c.b16 %v2456, %v2438
    %v3915 = vpack.c.b16 %v2457, %v2439
    %v3916 = vpack.c.b16 %v2458, %v2440
    %v3917 = vpack.c.b16 %v2459, %v2441
    %v3918 = vpack.c.b16 %v2478, %v2460
    %v3919 = vpack.c.b16 %v2479, %v2461
    %v3920 = vpack.c.b16 %v2480, %v2462
    %v3921 = vpack.c.b16 %v2481, %v2463
    %v3922 = vpack.c.b16 %v2482, %v2464
    %v3923 = vpack.c.b16 %v2483, %v2465
    %v3924 = vpack.c.b16 %v2484, %v2466
    %v3925 = vpack.c.b16 %v2485, %v2467
    %v3926 = vpack.c.b16 %v2486, %v2468
    %v3927 = vpack.c.b16 %v2487, %v2469
    %v3928 = vpack.c.b16 %v2488, %v2470
    %v3929 = vpack.c.b16 %v2489, %v2471
    %v3930 = vpack.c.b16 %v2490, %v2472
    %v3931 = vpack.c.b16 %v2491, %v2473
    %v3932 = vpack.c.b16 %v2492, %v2474
    %v3933 = vpack.c.b16 %v2493, %v2475
    %v3934 = vpack.c.b16 %v2494, %v2476
    %v3935 = vpack.c.b16 %v2495, %v2477
    %v3936 = vpack.c.b16 %v2514, %v2496
    %v3937 = vpack.c.b16 %v2515, %v2497
    %v3938 = vpack.c.b16 %v2516, %v2498
    %v3939 = vpack.c.b16 %v2517, %v2499
    %v3940 = vpack.c.b16 %v2518, %v2500
    %v3941 = vpack.c.b16 %v2519, %v2501
    %v3942 = vpack.c.b16 %v2520, %v2502
    %v3943 = vpack.c.b16 %v2521, %v2503
    %v3944 = vpack.c.b16 %v2522, %v2504
    %v3945 = vpack.c.b16 %v2523, %v2505
    %v3946 = vpack.c.b16 %v2524, %v2506
    %v3947 = vpack.c.b16 %v2525, %v2507
    %v3948 = vpack.c.b16 %v2526, %v2508
    %v3949 = vpack.c.b16 %v2527, %v2509
    %v3950 = vpack.c.b16 %v2528, %v2510
    %v3951 = vpack.c.b16 %v2529, %v2511
    %v3952 = vpack.c.b16 %v2530, %v2512
    %v3953 = vpack.c.b16 %v2531, %v2513
    %v3954 = vpack.c.b16 %v2550, %v2532
    %v3955 = vpack.c.b16 %v2551, %v2533
    %v3956 = vpack.c.b16 %v2552, %v2534
    %v3957 = vpack.c.b16 %v2553, %v2535
    %v3958 = vpack.c.b16 %v2554, %v2536
    %v3959 = vpack.c.b16 %v2555, %v2537
    %v3960 = vpack.c.b16 %v2556, %v2538
    %v3961 = vpack.c.b16 %v2557, %v2539
    %v3962 = vpack.c.b16 %v2558, %v2540
    %v3963 = vpack.c.b16 %v2559, %v2541
    %v3964 = vpack.c.b16 %v2560, %v2542
    %v3965 = vpack.c.b16 %v2561, %v2543
    %v3966 = vpack.c.b16 %v2562, %v2544
    %v3967 = vpack.c.b16 %v2563, %v2545
    %v3968 = vpack.c.b16 %v2564, %v2546
    %v3969 = vpack.c.b16 %v2565, %v2547
    %v3970 = vpack.c.b16 %v2566, %v2548
    %v3971 = vpack.c.b16 %v2567, %v2549
    %v3972 = vpack.c.b16 %v2586, %v2568
    %v3973 = vpack.c.b16 %v2587, %v2569
    %v3974 = vpack.c.b16 %v2588, %v2570
    %v3975 = vpack.c.b16 %v2589, %v2571
    %v3976 = vpack.c.b16 %v2590, %v2572
    %v3977 = vpack.c.b16 %v2591, %v2573
    %v3978 = vpack.c.b16 %v2592, %v2574
    %v3979 = vpack.c.b16 %v2593, %v2575
    %v3980 = vpack.c.b16 %v2594, %v2576
    %v3981 = vpack.c.b16 %v2595, %v2577
    %v3982 = vpack.c.b16 %v2596, %v2578
    %v3983 = vpack.c.b16 %v2597, %v2579
    %v3984 = vpack.c.b16 %v2598, %v2580
    %v3985 = vpack.c.b16 %v2599, %v2581
    %v3986 = vpack.c.b16 %v2600, %v2582
    %v3987 = vpack.c.b16 %v2601, %v2583
    %v3988 = vpack.c.b16 %v2602, %v2584
    %v3989 = vpack.c.b16 %v2603, %v2585
    %v3990 = vpack.c.b16 %v2622, %v2604
    %v3991 = vpack.c.b16 %v2623, %v2605
    %v3992 = vpack.c.b16 %v2624, %v2606
    %v3993 = vpack.c.b16 %v2625, %v2607
    %v3994 = vpack.c.b16 %v2626, %v2608
    %v3995 = vpack.c.b16 %v2627, %v2609
    %v3996 = vpack.c.b16 %v2628, %v2610
    %v3997 = vpack.c.b16 %v2629, %v2611
    %v3998 = vpack.c.b16 %v2630, %v2612
    %v3999 = vpack.c.b16 %v2631, %v2613
    %v4000 = vpack.c.b16 %v2632, %v2614
    %v4001 = vpack.c.b16 %v2633, %v2615
    %v4002 = vpack.c.b16 %v2634, %v2616
    %v4003 = vpack.c.b16 %v2635, %v2617
    %v4004 = vpack.c.b16 %v2636, %v2618
    %v4005 = vpack.c.b16 %v2637, %v2619
    %v4006 = vpack.c.b16 %v2638, %v2620
    %v4007 = vpack.c.b16 %v2639, %v2621
    %v4008 = vpack.c.b16 %v2658, %v2640
    %v4009 = vpack.c.b16 %v2659, %v2641
    %v4010 = vpack.c.b16 %v2660, %v2642
    %v4011 = vpack.c.b16 %v2661, %v2643
    %v4012 = vpack.c.b16 %v2662, %v2644
    %v4013 = vpack.c.b16 %v2663, %v2645
    %v4014 = vpack.c.b16 %v2664, %v2646
    %v4015 = vpack.c.b16 %v2665, %v2647
    %v4016 = vpack.c.b16 %v2666, %v2648
    %v4017 = vpack.c.b16 %v2667, %v2649
    %v4018 = vpack.c.b16 %v2668, %v2650
    %v4019 = vpack.c.b16 %v2669, %v2651
    %v4020 = vpack.c.b16 %v2670, %v2652
    %v4021 = vpack.c.b16 %v2671, %v2653
    %v4022 = vpack.c.b16 %v2672, %v2654
    %v4023 = vpack.c.b16 %v2673, %v2655
    %v4024 = vpack.c.b16 %v2674, %v2656
    %v4025 = vpack.c.b16 %v2675, %v2657
    %v4026 = vpack.c.b16 %v2694, %v2676
    %v4027 = vpack.c.b16 %v2695, %v2677
    %v4028 = vpack.c.b16 %v2696, %v2678
    %v4029 = vpack.c.b16 %v2697, %v2679
    %v4030 = vpack.c.b16 %v2698, %v2680
    %v4031 = vpack.c.b16 %v2699, %v2681
    %v4032 = vpack.c.b16 %v2700, %v2682
    %v4033 = vpack.c.b16 %v2701, %v2683
    %v4034 = vpack.c.b16 %v2702, %v2684
    %v4035 = vpack.c.b16 %v2703, %v2685
    %v4036 = vpack.c.b16 %v2704, %v2686
    %v4037 = vpack.c.b16 %v2705, %v2687
    %v4038 = vpack.c.b16 %v2706, %v2688
    %v4039 = vpack.c.b16 %v2707, %v2689
    %v4040 = vpack.c.b16 %v2708, %v2690
    %v4041 = vpack.c.b16 %v2709, %v2691
    %v4042 = vpack.c.b16 %v2710, %v2692
    %v4043 = vpack.c.b16 %v2711, %v2693
    %v4044 = vpack.c.b16 %v2730, %v2712
    %v4045 = vpack.c.b16 %v2731, %v2713
    %v4046 = vpack.c.b16 %v2732, %v2714
    %v4047 = vpack.c.b16 %v2733, %v2715
    %v4048 = vpack.c.b16 %v2734, %v2716
    %v4049 = vpack.c.b16 %v2735, %v2717
    %v4050 = vpack.c.b16 %v2736, %v2718
    %v4051 = vpack.c.b16 %v2737, %v2719
    %v4052 = vpack.c.b16 %v2738, %v2720
    %v4053 = vpack.c.b16 %v2739, %v2721
    %v4054 = vpack.c.b16 %v2740, %v2722
    %v4055 = vpack.c.b16 %v2741, %v2723
    %v4056 = vpack.c.b16 %v2742, %v2724
    %v4057 = vpack.c.b16 %v2743, %v2725
    %v4058 = vpack.c.b16 %v2744, %v2726
    %v4059 = vpack.c.b16 %v2745, %v2727
    %v4060 = vpack.c.b16 %v2746, %v2728
    %v4061 = vpack.c.b16 %v2747, %v2729
    %v4062 = vpack.c.b16 %v2766, %v2748
    %v4063 = vpack.c.b16 %v2767, %v2749
    %v4064 = vpack.c.b16 %v2768, %v2750
    %v4065 = vpack.c.b16 %v2769, %v2751
    %v4066 = vpack.c.b16 %v2770, %v2752
    %v4067 = vpack.c.b16 %v2771, %v2753
    %v4068 = vpack.c.b16 %v2772, %v2754
    %v4069 = vpack.c.b16 %v2773, %v2755
    %v4070 = vpack.c.b16 %v2774, %v2756
    %v4071 = vpack.c.b16 %v2775, %v2757
    %v4072 = vpack.c.b16 %v2776, %v2758
    %v4073 = vpack.c.b16 %v2777, %v2759
    %v4074 = vpack.c.b16 %v2778, %v2760
    %v4075 = vpack.c.b16 %v2779, %v2761
    %v4076 = vpack.c.b16 %v2780, %v2762
    %v4077 = vpack.c.b16 %v2781, %v2763
    %v4078 = vpack.c.b16 %v2782, %v2764
    %v4079 = vpack.c.b16 %v2783, %v2765
    %v4080 = vpack.c.b16 %v2802, %v2784
    %v4081 = vpack.c.b16 %v2803, %v2785
    %v4082 = vpack.c.b16 %v2804, %v2786
    %v4083 = vpack.c.b16 %v2805, %v2787
    %v4084 = vpack.c.b16 %v2806, %v2788
    %v4085 = vpack.c.b16 %v2807, %v2789
    %v4086 = vpack.c.b16 %v2808, %v2790
    %v4087 = vpack.c.b16 %v2809, %v2791
    %v4088 = vpack.c.b16 %v2810, %v2792
    %v4089 = vpack.c.b16 %v2811, %v2793
    %v4090 = vpack.c.b16 %v2812, %v2794
    %v4091 = vpack.c.b16 %v2813, %v2795
    %v4092 = vpack.c.b16 %v2814, %v2796
    %v4093 = vpack.c.b16 %v2815, %v2797
    %v4094 = vpack.c.b16 %v2816, %v2798
    %v4095 = vpack.c.b16 %v2817, %v2799
    %v4096 = vpack.c.b16 %v2818, %v2800
    %v4097 = vpack.c.b16 %v2819, %v2801
    %v4098 = vpack.c.b16 %v2838, %v2820
    %v4099 = vpack.c.b16 %v2839, %v2821
    %v4100 = vpack.c.b16 %v2840, %v2822
    %v4101 = vpack.c.b16 %v2841, %v2823
    %v4102 = vpack.c.b16 %v2842, %v2824
    %v4103 = vpack.c.b16 %v2843, %v2825
    %v4104 = vpack.c.b16 %v2844, %v2826
    %v4105 = vpack.c.b16 %v2845, %v2827
    %v4106 = vpack.c.b16 %v2846, %v2828
    %v4107 = vpack.c.b16 %v2847, %v2829
    %v4108 = vpack.c.b16 %v2848, %v2830
    %v4109 = vpack.c.b16 %v2849, %v2831
    %v4110 = vpack.c.b16 %v2850, %v2832
    %v4111 = vpack.c.b16 %v2851, %v2833
    %v4112 = vpack.c.b16 %v2852, %v2834
    %v4113 = vpack.c.b16 %v2853, %v2835
    %v4114 = vpack.c.b16 %v2854, %v2836
    %v4115 = vpack.c.b16 %v2855, %v2837
    %v4116 = vpack.c.b16 %v2874, %v2856
    %v4117 = vpack.c.b16 %v2875, %v2857
    %v4118 = vpack.c.b16 %v2876, %v2858
    %v4119 = vpack.c.b16 %v2877, %v2859
    %v4120 = vpack.c.b16 %v2878, %v2860
    %v4121 = vpack.c.b16 %v2879, %v2861
    %v4122 = vpack.c.b16 %v2880, %v2862
    %v4123 = vpack.c.b16 %v2881, %v2863
    %v4124 = vpack.c.b16 %v2882, %v2864
    %v4125 = vpack.c.b16 %v2883, %v2865
    %v4126 = vpack.c.b16 %v2884, %v2866
    %v4127 = vpack.c.b16 %v2885, %v2867
    %v4128 = vpack.c.b16 %v2886, %v2868
    %v4129 = vpack.c.b16 %v2887, %v2869
    %v4130 = vpack.c.b16 %v2888, %v2870
    %v4131 = vpack.c.b16 %v2889, %v2871
    %v4132 = vpack.c.b16 %v2890, %v2872
    %v4133 = vpack.c.b16 %v2891, %v2873
    %v4134 = vpack.c.b16 %v2910, %v2892
    %v4135 = vpack.c.b16 %v2911, %v2893
    %v4136 = vpack.c.b16 %v2912, %v2894
    %v4137 = vpack.c.b16 %v2913, %v2895
    %v4138 = vpack.c.b16 %v2914, %v2896
    %v4139 = vpack.c.b16 %v2915, %v2897
    %v4140 = vpack.c.b16 %v2916, %v2898
    %v4141 = vpack.c.b16 %v2917, %v2899
    %v4142 = vpack.c.b16 %v2918, %v2900
    %v4143 = vpack.c.b16 %v2919, %v2901
    %v4144 = vpack.c.b16 %v2920, %v2902
    %v4145 = vpack.c.b16 %v2921, %v2903
    %v4146 = vpack.c.b16 %v2922, %v2904
    %v4147 = vpack.c.b16 %v2923, %v2905
    %v4148 = vpack.c.b16 %v2924, %v2906
    %v4149 = vpack.c.b16 %v2925, %v2907
    %v4150 = vpack.c.b16 %v2926, %v2908
    %v4151 = vpack.c.b16 %v2927, %v2909
    %v4152 = vpack.c.b16 %v2946, %v2928
    %v4153 = vpack.c.b16 %v2947, %v2929
    %v4154 = vpack.c.b16 %v2948, %v2930
    %v4155 = vpack.c.b16 %v2949, %v2931
    %v4156 = vpack.c.b16 %v2950, %v2932
    %v4157 = vpack.c.b16 %v2951, %v2933
    %v4158 = vpack.c.b16 %v2952, %v2934
    %v4159 = vpack.c.b16 %v2953, %v2935
    %v4160 = vpack.c.b16 %v2954, %v2936
    %v4161 = vpack.c.b16 %v2955, %v2937
    %v4162 = vpack.c.b16 %v2956, %v2938
    %v4163 = vpack.c.b16 %v2957, %v2939
    %v4164 = vpack.c.b16 %v2958, %v2940
    %v4165 = vpack.c.b16 %v2959, %v2941
    %v4166 = vpack.c.b16 %v2960, %v2942
    %v4167 = vpack.c.b16 %v2961, %v2943
    %v4168 = vpack.c.b16 %v2962, %v2944
    %v4169 = vpack.c.b16 %v2963, %v2945
    %v4170 = vpack.c.b16 %v2982, %v2964
    %v4171 = vpack.c.b16 %v2983, %v2965
    %v4172 = vpack.c.b16 %v2984, %v2966
    %v4173 = vpack.c.b16 %v2985, %v2967
    %v4174 = vpack.c.b16 %v2986, %v2968
    %v4175 = vpack.c.b16 %v2987, %v2969
    %v4176 = vpack.c.b16 %v2988, %v2970
    %v4177 = vpack.c.b16 %v2989, %v2971
    %v4178 = vpack.c.b16 %v2990, %v2972
    %v4179 = vpack.c.b16 %v2991, %v2973
    %v4180 = vpack.c.b16 %v2992, %v2974
    %v4181 = vpack.c.b16 %v2993, %v2975
    %v4182 = vpack.c.b16 %v2994, %v2976
    %v4183 = vpack.c.b16 %v2995, %v2977
    %v4184 = vpack.c.b16 %v2996, %v2978
    %v4185 = vpack.c.b16 %v2997, %v2979
    %v4186 = vpack.c.b16 %v2998, %v2980
    %v4187 = vpack.c.b16 %v2999, %v2981
    %v4188 = vpack.c.b16 %v3018, %v3000
    %v4189 = vpack.c.b16 %v3019, %v3001
    %v4190 = vpack.c.b16 %v3020, %v3002
    %v4191 = vpack.c.b16 %v3021, %v3003
    %v4192 = vpack.c.b16 %v3022, %v3004
    %v4193 = vpack.c.b16 %v3023, %v3005
    %v4194 = vpack.c.b16 %v3024, %v3006
    %v4195 = vpack.c.b16 %v3025, %v3007
    %v4196 = vpack.c.b16 %v3026, %v3008
    %v4197 = vpack.c.b16 %v3027, %v3009
    %v4198 = vpack.c.b16 %v3028, %v3010
    %v4199 = vpack.c.b16 %v3029, %v3011
    %v4200 = vpack.c.b16 %v3030, %v3012
    %v4201 = vpack.c.b16 %v3031, %v3013
    %v4202 = vpack.c.b16 %v3032, %v3014
    %v4203 = vpack.c.b16 %v3033, %v3015
    %v4204 = vpack.c.b16 %v3034, %v3016
    %v4205 = vpack.c.b16 %v3035, %v3017
    %v4206 = vpack.c.b16 %v3054, %v3036
    %v4207 = vpack.c.b16 %v3055, %v3037
    %v4208 = vpack.c.b16 %v3056, %v3038
    %v4209 = vpack.c.b16 %v3057, %v3039
    %v4210 = vpack.c.b16 %v3058, %v3040
    %v4211 = vpack.c.b16 %v3059, %v3041
    %v4212 = vpack.c.b16 %v3060, %v3042
    %v4213 = vpack.c.b16 %v3061, %v3043
    %v4214 = vpack.c.b16 %v3062, %v3044
    %v4215 = vpack.c.b16 %v3063, %v3045
    %v4216 = vpack.c.b16 %v3064, %v3046
    %v4217 = vpack.c.b16 %v3065, %v3047
    %v4218 = vpack.c.b16 %v3066, %v3048
    %v4219 = vpack.c.b16 %v3067, %v3049
    %v4220 = vpack.c.b16 %v3068, %v3050
    %v4221 = vpack.c.b16 %v3069, %v3051
    %v4222 = vpack.c.b16 %v3070, %v3052
    %v4223 = vpack.c.b16 %v3071, %v3053
    %v4224 = vpack.c.b16 %v3090, %v3072
    %v4225 = vpack.c.b16 %v3091, %v3073
    %v4226 = vpack.c.b16 %v3092, %v3074
    %v4227 = vpack.c.b16 %v3093, %v3075
    %v4228 = vpack.c.b16 %v3094, %v3076
    %v4229 = vpack.c.b16 %v3095, %v3077
    %v4230 = vpack.c.b16 %v3096, %v3078
    %v4231 = vpack.c.b16 %v3097, %v3079
    %v4232 = vpack.c.b16 %v3098, %v3080
    %v4233 = vpack.c.b16 %v3099, %v3081
    %v4234 = vpack.c.b16 %v3100, %v3082
    %v4235 = vpack.c.b16 %v3101, %v3083
    %v4236 = vpack.c.b16 %v3102, %v3084
    %v4237 = vpack.c.b16 %v3103, %v3085
    %v4238 = vpack.c.b16 %v3104, %v3086
    %v4239 = vpack.c.b16 %v3105, %v3087
    %v4240 = vpack.c.b16 %v3106, %v3088
    %v4241 = vpack.c.b16 %v3107, %v3089
    %v4242 = vpack.c.b16 %v3126, %v3108
    %v4243 = vpack.c.b16 %v3127, %v3109
    %v4244 = vpack.c.b16 %v3128, %v3110
    %v4245 = vpack.c.b16 %v3129, %v3111
    %v4246 = vpack.c.b16 %v3130, %v3112
    %v4247 = vpack.c.b16 %v3131, %v3113
    %v4248 = vpack.c.b16 %v3132, %v3114
    %v4249 = vpack.c.b16 %v3133, %v3115
    %v4250 = vpack.c.b16 %v3134, %v3116
    %v4251 = vpack.c.b16 %v3135, %v3117
    %v4252 = vpack.c.b16 %v3136, %v3118
    %v4253 = vpack.c.b16 %v3137, %v3119
    %v4254 = vpack.c.b16 %v3138, %v3120
    %v4255 = vpack.c.b16 %v3139, %v3121
    %v4256 = vpack.c.b16 %v3140, %v3122
    %v4257 = vpack.c.b16 %v3141, %v3123
    %v4258 = vpack.c.b16 %v3142, %v3124
    %v4259 = vpack.c.b16 %v3143, %v3125
    %v4260 = vpack.c.b16 %v3162, %v3144
    %v4261 = vpack.c.b16 %v3163, %v3145
    %v4262 = vpack.c.b16 %v3164, %v3146
    %v4263 = vpack.c.b16 %v3165, %v3147
    %v4264 = vpack.c.b16 %v3166, %v3148
    %v4265 = vpack.c.b16 %v3167, %v3149
    %v4266 = vpack.c.b16 %v3168, %v3150
    %v4267 = vpack.c.b16 %v3169, %v3151
    %v4268 = vpack.c.b16 %v3170, %v3152
    %v4269 = vpack.c.b16 %v3171, %v3153
    %v4270 = vpack.c.b16 %v3172, %v3154
    %v4271 = vpack.c.b16 %v3173, %v3155
    %v4272 = vpack.c.b16 %v3174, %v3156
    %v4273 = vpack.c.b16 %v3175, %v3157
    %v4274 = vpack.c.b16 %v3176, %v3158
    %v4275 = vpack.c.b16 %v3177, %v3159
    %v4276 = vpack.c.b16 %v3178, %v3160
    %v4277 = vpack.c.b16 %v3179, %v3161
    %v4278 = vpack.c.b16 %v3198, %v3180
    %v4279 = vpack.c.b16 %v3199, %v3181
    %v4280 = vpack.c.b16 %v3200, %v3182
    %v4281 = vpack.c.b16 %v3201, %v3183
    %v4282 = vpack.c.b16 %v3202, %v3184
    %v4283 = vpack.c.b16 %v3203, %v3185
    %v4284 = vpack.c.b16 %v3204, %v3186
    %v4285 = vpack.c.b16 %v3205, %v3187
    %v4286 = vpack.c.b16 %v3206, %v3188
    %v4287 = vpack.c.b16 %v3207, %v3189
    %v4288 = vpack.c.b16 %v3208, %v3190
    %v4289 = vpack.c.b16 %v3209, %v3191
    %v4290 = vpack.c.b16 %v3210, %v3192
    %v4291 = vpack.c.b16 %v3211, %v3193
    %v4292 = vpack.c.b16 %v3212, %v3194
    %v4293 = vpack.c.b16 %v3213, %v3195
    %v4294 = vpack.c.b16 %v3214, %v3196
    %v4295 = vpack.c.b16 %v3215, %v3197
    %v4296 = vpack.c.b16 %v3234, %v3216
    %v4297 = vpack.c.b16 %v3235, %v3217
    %v4298 = vpack.c.b16 %v3236, %v3218
    %v4299 = vpack.c.b16 %v3237, %v3219
    %v4300 = vpack.c.b16 %v3238, %v3220
    %v4301 = vpack.c.b16 %v3239, %v3221
    %v4302 = vpack.c.b16 %v3240, %v3222
    %v4303 = vpack.c.b16 %v3241, %v3223
    %v4304 = vpack.c.b16 %v3242, %v3224
    %v4305 = vpack.c.b16 %v3243, %v3225
    %v4306 = vpack.c.b16 %v3244, %v3226
    %v4307 = vpack.c.b16 %v3245, %v3227
    %v4308 = vpack.c.b16 %v3246, %v3228
    %v4309 = vpack.c.b16 %v3247, %v3229
    %v4310 = vpack.c.b16 %v3248, %v3230
    %v4311 = vpack.c.b16 %v3249, %v3231
    %v4312 = vpack.c.b16 %v3250, %v3232
    %v4313 = vpack.c.b16 %v3251, %v3233
    %v4314 = vpack.c.b16 %v3270, %v3252
    %v4315 = vpack.c.b16 %v3271, %v3253
    %v4316 = vpack.c.b16 %v3272, %v3254
    %v4317 = vpack.c.b16 %v3273, %v3255
    %v4318 = vpack.c.b16 %v3274, %v3256
    %v4319 = vpack.c.b16 %v3275, %v3257
    %v4320 = vpack.c.b16 %v3276, %v3258
    %v4321 = vpack.c.b16 %v3277, %v3259
    %v4322 = vpack.c.b16 %v3278, %v3260
    %v4323 = vpack.c.b16 %v3279, %v3261
    %v4324 = vpack.c.b16 %v3280, %v3262
    %v4325 = vpack.c.b16 %v3281, %v3263
    %v4326 = vpack.c.b16 %v3282, %v3264
    %v4327 = vpack.c.b16 %v3283, %v3265
    %v4328 = vpack.c.b16 %v3284, %v3266
    %v4329 = vpack.c.b16 %v3285, %v3267
    %v4330 = vpack.c.b16 %v3286, %v3268
    %v4331 = vpack.c.b16 %v3287, %v3269
    %v4332 = vpack.c.b16 %v3306, %v3288
    %v4333 = vpack.c.b16 %v3307, %v3289
    %v4334 = vpack.c.b16 %v3308, %v3290
    %v4335 = vpack.c.b16 %v3309, %v3291
    %v4336 = vpack.c.b16 %v3310, %v3292
    %v4337 = vpack.c.b16 %v3311, %v3293
    %v4338 = vpack.c.b16 %v3312, %v3294
    %v4339 = vpack.c.b16 %v3313, %v3295
    %v4340 = vpack.c.b16 %v3314, %v3296
    %v4341 = vpack.c.b16 %v3315, %v3297
    %v4342 = vpack.c.b16 %v3316, %v3298
    %v4343 = vpack.c.b16 %v3317, %v3299
    %v4344 = vpack.c.b16 %v3318, %v3300
    %v4345 = vpack.c.b16 %v3319, %v3301
    %v4346 = vpack.c.b16 %v3320, %v3302
    %v4347 = vpack.c.b16 %v3321, %v3303
    %v4348 = vpack.c.b16 %v3322, %v3304
    %v4349 = vpack.c.b16 %v3323, %v3305
    %v4350 = vpack.c.b16 %v3342, %v3324
    %v4351 = vpack.c.b16 %v3343, %v3325
    %v4352 = vpack.c.b16 %v3344, %v3326
    %v4353 = vpack.c.b16 %v3345, %v3327
    %v4354 = vpack.c.b16 %v3346, %v3328
    %v4355 = vpack.c.b16 %v3347, %v3329
    %v4356 = vpack.c.b16 %v3348, %v3330
    %v4357 = vpack.c.b16 %v3349, %v3331
    %v4358 = vpack.c.b16 %v3350, %v3332
    %v4359 = vpack.c.b16 %v3351, %v3333
    %v4360 = vpack.c.b16 %v3352, %v3334
    %v4361 = vpack.c.b16 %v3353, %v3335
    %v4362 = vpack.c.b16 %v3354, %v3336
    %v4363 = vpack.c.b16 %v3355, %v3337
    %v4364 = vpack.c.b16 %v3356, %v3338
    %v4365 = vpack.c.b16 %v3357, %v3339
    %v4366 = vpack.c.b16 %v3358, %v3340
    %v4367 = vpack.c.b16 %v3359, %v3341
    %v4368 = vpack.c.b16 %v3378, %v3360
    %v4369 = vpack.c.b16 %v3379, %v3361
    %v4370 = vpack.c.b16 %v3380, %v3362
    %v4371 = vpack.c.b16 %v3381, %v3363
    %v4372 = vpack.c.b16 %v3382, %v3364
    %v4373 = vpack.c.b16 %v3383, %v3365
    %v4374 = vpack.c.b16 %v3384, %v3366
    %v4375 = vpack.c.b16 %v3385, %v3367
    %v4376 = vpack.c.b16 %v3386, %v3368
    %v4377 = vpack.c.b16 %v3387, %v3369
    %v4378 = vpack.c.b16 %v3388, %v3370
    %v4379 = vpack.c.b16 %v3389, %v3371
    %v4380 = vpack.c.b16 %v3390, %v3372
    %v4381 = vpack.c.b16 %v3391, %v3373
    %v4382 = vpack.c.b16 %v3392, %v3374
    %v4383 = vpack.c.b16 %v3393, %v3375
    %v4384 = vpack.c.b16 %v3394, %v3376
    %v4385 = vpack.c.b16 %v3395, %v3377
    %v4386 = vpack.c.b16 %v3414, %v3396
    %v4387 = vpack.c.b16 %v3415, %v3397
    %v4388 = vpack.c.b16 %v3416, %v3398
    %v4389 = vpack.c.b16 %v3417, %v3399
    %v4390 = vpack.c.b16 %v3418, %v3400
    %v4391 = vpack.c.b16 %v3419, %v3401
    %v4392 = vpack.c.b16 %v3420, %v3402
    %v4393 = vpack.c.b16 %v3421, %v3403
    %v4394 = vpack.c.b16 %v3422, %v3404
    %v4395 = vpack.c.b16 %v3423, %v3405
    %v4396 = vpack.c.b16 %v3424, %v3406
    %v4397 = vpack.c.b16 %v3425, %v3407
    %v4398 = vpack.c.b16 %v3426, %v3408
    %v4399 = vpack.c.b16 %v3427, %v3409
    %v4400 = vpack.c.b16 %v3428, %v3410
    %v4401 = vpack.c.b16 %v3429, %v3411
    %v4402 = vpack.c.b16 %v3430, %v3412
    %v4403 = vpack.c.b16 %v3431, %v3413
    %v4404 = vpack.c.b16 %v3450, %v3432
    %v4405 = vpack.c.b16 %v3451, %v3433
    %v4406 = vpack.c.b16 %v3452, %v3434
    %v4407 = vpack.c.b16 %v3453, %v3435
    %v4408 = vpack.c.b16 %v3454, %v3436
    %v4409 = vpack.c.b16 %v3455, %v3437
    %v4410 = vpack.c.b16 %v3456, %v3438
    %v4411 = vpack.c.b16 %v3457, %v3439
    %v4412 = vpack.c.b16 %v3458, %v3440
    %v4413 = vpack.c.b16 %v3459, %v3441
    %v4414 = vpack.c.b16 %v3460, %v3442
    %v4415 = vpack.c.b16 %v3461, %v3443
    %v4416 = vpack.c.b16 %v3462, %v3444
    %v4417 = vpack.c.b16 %v3463, %v3445
    %v4418 = vpack.c.b16 %v3464, %v3446
    %v4419 = vpack.c.b16 %v3465, %v3447
    %v4420 = vpack.c.b16 %v3466, %v3448
    %v4421 = vpack.c.b16 %v3467, %v3449
    %v4422 = vpack.c.b16 %v3486, %v3468
    %v4423 = vpack.c.b16 %v3487, %v3469
    %v4424 = vpack.c.b16 %v3488, %v3470
    %v4425 = vpack.c.b16 %v3489, %v3471
    %v4426 = vpack.c.b16 %v3490, %v3472
    %v4427 = vpack.c.b16 %v3491, %v3473
    %v4428 = vpack.c.b16 %v3492, %v3474
    %v4429 = vpack.c.b16 %v3493, %v3475
    %v4430 = vpack.c.b16 %v3494, %v3476
    %v4431 = vpack.c.b16 %v3495, %v3477
    %v4432 = vpack.c.b16 %v3496, %v3478
    %v4433 = vpack.c.b16 %v3497, %v3479
    %v4434 = vpack.c.b16 %v3498, %v3480
    %v4435 = vpack.c.b16 %v3499, %v3481
    %v4436 = vpack.c.b16 %v3500, %v3482
    %v4437 = vpack.c.b16 %v3501, %v3483
    %v4438 = vpack.c.b16 %v3502, %v3484
    %v4439 = vpack.c.b16 %v3503, %v3485
    %v4440 = vpack.c.b16 %v3522, %v3504
    %v4441 = vpack.c.b16 %v3523, %v3505
    %v4442 = vpack.c.b16 %v3524, %v3506
    %v4443 = vpack.c.b16 %v3525, %v3507
    %v4444 = vpack.c.b16 %v3526, %v3508
    %v4445 = vpack.c.b16 %v3527, %v3509
    %v4446 = vpack.c.b16 %v3528, %v3510
    %v4447 = vpack.c.b16 %v3529, %v3511
    %v4448 = vpack.c.b16 %v3530, %v3512
    %v4449 = vpack.c.b16 %v3531, %v3513
    %v4450 = vpack.c.b16 %v3532, %v3514
    %v4451 = vpack.c.b16 %v3533, %v3515
    %v4452 = vpack.c.b16 %v3534, %v3516
    %v4453 = vpack.c.b16 %v3535, %v3517
    %v4454 = vpack.c.b16 %v3536, %v3518
    %v4455 = vpack.c.b16 %v3537, %v3519
    %v4456 = vpack.c.b16 %v3538, %v3520
    %v4457 = vpack.c.b16 %v3539, %v3521
    %v4458 = vpack.c.b16 %v3558, %v3540
    %v4459 = vpack.c.b16 %v3559, %v3541
    %v4460 = vpack.c.b16 %v3560, %v3542
    %v4461 = vpack.c.b16 %v3561, %v3543
    %v4462 = vpack.c.b16 %v3562, %v3544
    %v4463 = vpack.c.b16 %v3563, %v3545
    %v4464 = vpack.c.b16 %v3564, %v3546
    %v4465 = vpack.c.b16 %v3565, %v3547
    %v4466 = vpack.c.b16 %v3566, %v3548
    %v4467 = vpack.c.b16 %v3567, %v3549
    %v4468 = vpack.c.b16 %v3568, %v3550
    %v4469 = vpack.c.b16 %v3569, %v3551
    %v4470 = vpack.c.b16 %v3570, %v3552
    %v4471 = vpack.c.b16 %v3571, %v3553
    %v4472 = vpack.c.b16 %v3572, %v3554
    %v4473 = vpack.c.b16 %v3573, %v3555
    %v4474 = vpack.c.b16 %v3574, %v3556
    %v4475 = vpack.c.b16 %v3575, %v3557
    %v4476 = vpack.c.b16 %v3594, %v3576
    %v4477 = vpack.c.b16 %v3595, %v3577
    %v4478 = vpack.c.b16 %v3596, %v3578
    %v4479 = vpack.c.b16 %v3597, %v3579
    %v4480 = vpack.c.b16 %v3598, %v3580
    %v4481 = vpack.c.b16 %v3599, %v3581
    %v4482 = vpack.c.b16 %v3600, %v3582
    %v4483 = vpack.c.b16 %v3601, %v3583
    %v4484 = vpack.c.b16 %v3602, %v3584
    %v4485 = vpack.c.b16 %v3603, %v3585
    %v4486 = vpack.c.b16 %v3604, %v3586
    %v4487 = vpack.c.b16 %v3605, %v3587
    %v4488 = vpack.c.b16 %v3606, %v3588
    %v4489 = vpack.c.b16 %v3607, %v3589
    %v4490 = vpack.c.b16 %v3608, %v3590
    %v4491 = vpack.c.b16 %v3609, %v3591
    %v4492 = vpack.c.b16 %v3610, %v3592
    %v4493 = vpack.c.b16 %v3611, %v3593
    %v4494 = vpack.c.b16 %v3630, %v3612
    %v4495 = vpack.c.b16 %v3631, %v3613
    %v4496 = vpack.c.b16 %v3632, %v3614
    %v4497 = vpack.c.b16 %v3633, %v3615
    %v4498 = vpack.c.b16 %v3634, %v3616
    %v4499 = vpack.c.b16 %v3635, %v3617
    %v4500 = vpack.c.b16 %v3636, %v3618
    %v4501 = vpack.c.b16 %v3637, %v3619
    %v4502 = vpack.c.b16 %v3638, %v3620
    %v4503 = vpack.c.b16 %v3639, %v3621
    %v4504 = vpack.c.b16 %v3640, %v3622
    %v4505 = vpack.c.b16 %v3641, %v3623
    %v4506 = vpack.c.b16 %v3642, %v3624
    %v4507 = vpack.c.b16 %v3643, %v3625
    %v4508 = vpack.c.b16 %v3644, %v3626
    %v4509 = vpack.c.b16 %v3645, %v3627
    %v4510 = vpack.c.b16 %v3646, %v3628
    %v4511 = vpack.c.b16 %v3647, %v3629
    %5376 = vmatprep.subr.bf16.mxu0 %v3775
    %5377 = vmatpush1.bf16.msra.mxu0 %v3774
    %5378 = vmatprep.subr.bf16.mxu0 %v3757
    %5379 = vmatpush1.bf16.msra.mxu0 %v3756
    %5380 = vmatprep.subr.bf16.mxu0 %v3739
    %5381 = vmatpush1.bf16.msra.mxu0 %v3738
    %5382 = vmatprep.subr.bf16.mxu0 %v3721
    %5383 = vmatpush1.bf16.msra.mxu0 %v3720
    %5384 = vmatprep.subr.bf16.mxu0 %v3703
    %5385 = vmatpush1.bf16.msra.mxu0 %v3702
    %5386 = vmatprep.subr.bf16.mxu0 %v3685
    %5387 = vmatpush1.bf16.msra.mxu0 %v3684
    %5388 = vmatprep.subr.bf16.mxu0 %v3667
    %5389 = vmatpush1.bf16.msra.mxu0 %v3666
    %5390 = vmatprep.subr.bf16.mxu0 %v3649
    %5391 = vmatpush1.bf16.msra.mxu0 %v3648
    %5392 = vmatprep.subr.bf16.mxu0 %v3919
    %5393 = vmatpush2.bf16.msra.mxu0 %v3918
    %5394 = vmatprep.subr.bf16.mxu0 %v3901
    %5395 = vmatpush2.bf16.msra.mxu0 %v3900
    %5396 = vmatprep.subr.bf16.mxu0 %v3883
    %5397 = vmatpush2.bf16.msra.mxu0 %v3882
    %5398 = vmatprep.subr.bf16.mxu0 %v3865
    %5399 = vmatpush2.bf16.msra.mxu0 %v3864
    %5400 = vmatprep.subr.bf16.mxu0 %v3847
    %5401 = vmatpush2.bf16.msra.mxu0 %v3846
    %5402 = vmatprep.subr.bf16.mxu0 %v3829
    %5403 = vmatpush2.bf16.msra.mxu0 %v3828
    %5404 = vmatprep.subr.bf16.mxu0 %v3811
    %5405 = vmatpush2.bf16.msra.mxu0 %v3810
    %5406 = vmatprep.subr.bf16.mxu0 %v3793
    %5407 = vmatpush2.bf16.msra.mxu0 %v3792
    %5408 = vmatprep.mubr.bf16.mxu0 %v91
    %5409 = vmatmul.mubr.bf16.gmra.mxu0 %v90
    %v5410 = vpop.f32.mrf.mxu0
    %v5411 = vadd.f32 %v969, %v5410
    %v5412 = vpop.f32.mrf.mxu0
    %v5413 = vadd.f32 %v973, %v5412
    %v5414 = vpop.f32.mrf.mxu0
    %v5415 = vpop.f32.mrf.mxu0
    %5416 = vdwg.mxu0
    %5417 = vmatprep.subr.bf16.mxu0 %v4063
    %5418 = vmatpush1.bf16.msra.mxu0 %v4062
    %5419 = vmatprep.subr.bf16.mxu0 %v4045
    %5420 = vmatpush1.bf16.msra.mxu0 %v4044
    %5421 = vmatprep.subr.bf16.mxu0 %v4027
    %5422 = vmatpush1.bf16.msra.mxu0 %v4026
    %5423 = vmatprep.subr.bf16.mxu0 %v4009
    %5424 = vmatpush1.bf16.msra.mxu0 %v4008
    %5425 = vmatprep.subr.bf16.mxu0 %v3991
    %5426 = vmatpush1.bf16.msra.mxu0 %v3990
    %5427 = vmatprep.subr.bf16.mxu0 %v3973
    %5428 = vmatpush1.bf16.msra.mxu0 %v3972
    %5429 = vmatprep.subr.bf16.mxu0 %v3955
    %5430 = vmatpush1.bf16.msra.mxu0 %v3954
    %5431 = vmatprep.subr.bf16.mxu0 %v3937
    %5432 = vmatpush1.bf16.msra.mxu0 %v3936
    %5433 = vmatprep.subr.bf16.mxu0 %v4207
    %5434 = vmatpush2.bf16.msra.mxu0 %v4206
    %5435 = vmatprep.subr.bf16.mxu0 %v4189
    %5436 = vmatpush2.bf16.msra.mxu0 %v4188
    %5437 = vmatprep.subr.bf16.mxu0 %v4171
    %5438 = vmatpush2.bf16.msra.mxu0 %v4170
    %5439 = vmatprep.subr.bf16.mxu0 %v4153
    %5440 = vmatpush2.bf16.msra.mxu0 %v4152
    %5441 = vmatprep.subr.bf16.mxu0 %v4135
    %5442 = vmatpush2.bf16.msra.mxu0 %v4134
    %5443 = vmatprep.subr.bf16.mxu0 %v4117
    %5444 = vmatpush2.bf16.msra.mxu0 %v4116
    %5445 = vmatprep.subr.bf16.mxu0 %v4099
    %5446 = vmatpush2.bf16.msra.mxu0 %v4098
    %5447 = vmatprep.subr.bf16.mxu0 %v4081
    %5448 = vmatpush2.bf16.msra.mxu0 %v4080
    %5449 = vmatprep.mubr.bf16.mxu0 %v93
    %5450 = vmatmul.mubr.bf16.gmra.mxu0 %v92
    %v5451 = vpop.f32.mrf.mxu0
    %v5452 = vadd.f32 %v5411, %v5451
    %v5453 = vpop.f32.mrf.mxu0
    %v5454 = vadd.f32 %v5413, %v5453
    %v5455 = vpop.f32.mrf.mxu0
    %v5456 = vpop.f32.mrf.mxu0
    %5457 = vdwg.mxu0
    %5458 = vmatprep.subr.bf16.mxu0 %v4351
    %5459 = vmatpush1.bf16.msra.mxu0 %v4350
    %5460 = vmatprep.subr.bf16.mxu0 %v4333
    %5461 = vmatpush1.bf16.msra.mxu0 %v4332
    %5462 = vmatprep.subr.bf16.mxu0 %v4315
    %5463 = vmatpush1.bf16.msra.mxu0 %v4314
    %5464 = vmatprep.subr.bf16.mxu0 %v4297
    %5465 = vmatpush1.bf16.msra.mxu0 %v4296
    %5466 = vmatprep.subr.bf16.mxu0 %v4279
    %5467 = vmatpush1.bf16.msra.mxu0 %v4278
    %5468 = vmatprep.subr.bf16.mxu0 %v4261
    %5469 = vmatpush1.bf16.msra.mxu0 %v4260
    %5470 = vmatprep.subr.bf16.mxu0 %v4243
    %5471 = vmatpush1.bf16.msra.mxu0 %v4242
    %5472 = vmatprep.subr.bf16.mxu0 %v4225
    %5473 = vmatpush1.bf16.msra.mxu0 %v4224
    %5474 = vmatprep.subr.bf16.mxu0 %v4495
    %5475 = vmatpush2.bf16.msra.mxu0 %v4494
    %5476 = vmatprep.subr.bf16.mxu0 %v4477
    %5477 = vmatpush2.bf16.msra.mxu0 %v4476
    %5478 = vmatprep.subr.bf16.mxu0 %v4459
    %5479 = vmatpush2.bf16.msra.mxu0 %v4458
    %5480 = vmatprep.subr.bf16.mxu0 %v4441
    %5481 = vmatpush2.bf16.msra.mxu0 %v4440
    %5482 = vmatprep.subr.bf16.mxu0 %v4423
    %5483 = vmatpush2.bf16.msra.mxu0 %v4422
    %5484 = vmatprep.subr.bf16.mxu0 %v4405
    %5485 = vmatpush2.bf16.msra.mxu0 %v4404
    %5486 = vmatprep.subr.bf16.mxu0 %v4387
    %5487 = vmatpush2.bf16.msra.mxu0 %v4386
    %5488 = vmatprep.subr.bf16.mxu0 %v4369
    %5489 = vmatpush2.bf16.msra.mxu0 %v4368
    %5490 = vmatprep.mubr.bf16.mxu0 %v95
    %5491 = vmatmul.mubr.bf16.gmra.mxu0 %v94
    %v5492 = vpop.f32.mrf.mxu0
    %v5493 = vadd.f32 %v5452, %v5492
    %v5494 = vpop.f32.mrf.mxu0
    %v5495 = vadd.f32 %v5454, %v5494
    %v5496 = vpop.f32.mrf.mxu0
    %v5497 = vpop.f32.mrf.mxu0
    %5498 = vdwg.mxu0
    %5499 = vmatprep.subr.bf16.mxu0 %v3777
    %5500 = vmatpush1.bf16.msra.mxu0 %v3776
    %5501 = vmatprep.subr.bf16.mxu0 %v3759
    %5502 = vmatpush1.bf16.msra.mxu0 %v3758
    %5503 = vmatprep.subr.bf16.mxu0 %v3741
    %5504 = vmatpush1.bf16.msra.mxu0 %v3740
    %5505 = vmatprep.subr.bf16.mxu0 %v3723
    %5506 = vmatpush1.bf16.msra.mxu0 %v3722
    %5507 = vmatprep.subr.bf16.mxu0 %v3705
    %5508 = vmatpush1.bf16.msra.mxu0 %v3704
    %5509 = vmatprep.subr.bf16.mxu0 %v3687
    %5510 = vmatpush1.bf16.msra.mxu0 %v3686
    %5511 = vmatprep.subr.bf16.mxu0 %v3669
    %5512 = vmatpush1.bf16.msra.mxu0 %v3668
    %5513 = vmatprep.subr.bf16.mxu0 %v3651
    %5514 = vmatpush1.bf16.msra.mxu0 %v3650
    %5515 = vmatprep.subr.bf16.mxu0 %v3921
    %5516 = vmatpush2.bf16.msra.mxu0 %v3920
    %5517 = vmatprep.subr.bf16.mxu0 %v3903
    %5518 = vmatpush2.bf16.msra.mxu0 %v3902
    %5519 = vmatprep.subr.bf16.mxu0 %v3885
    %5520 = vmatpush2.bf16.msra.mxu0 %v3884
    %5521 = vmatprep.subr.bf16.mxu0 %v3867
    %5522 = vmatpush2.bf16.msra.mxu0 %v3866
    %5523 = vmatprep.subr.bf16.mxu0 %v3849
    %5524 = vmatpush2.bf16.msra.mxu0 %v3848
    %5525 = vmatprep.subr.bf16.mxu0 %v3831
    %5526 = vmatpush2.bf16.msra.mxu0 %v3830
    %5527 = vmatprep.subr.bf16.mxu0 %v3813
    %5528 = vmatpush2.bf16.msra.mxu0 %v3812
    %5529 = vmatprep.subr.bf16.mxu0 %v3795
    %5530 = vmatpush2.bf16.msra.mxu0 %v3794
    %5531 = vmatprep.mubr.bf16.mxu0 %v91
    %5532 = vmatmul.mubr.bf16.gmra.mxu0 %v90
    %v5533 = vpop.f32.mrf.mxu0
    %v5534 = vadd.f32 %v977, %v5533
    %v5535 = vpop.f32.mrf.mxu0
    %v5536 = vadd.f32 %v981, %v5535
    %v5537 = vpop.f32.mrf.mxu0
    %v5538 = vpop.f32.mrf.mxu0
    %5539 = vdwg.mxu0
    %5540 = vmatprep.subr.bf16.mxu0 %v4065
    %5541 = vmatpush1.bf16.msra.mxu0 %v4064
    %5542 = vmatprep.subr.bf16.mxu0 %v4047
    %5543 = vmatpush1.bf16.msra.mxu0 %v4046
    %5544 = vmatprep.subr.bf16.mxu0 %v4029
    %5545 = vmatpush1.bf16.msra.mxu0 %v4028
    %5546 = vmatprep.subr.bf16.mxu0 %v4011
    %5547 = vmatpush1.bf16.msra.mxu0 %v4010
    %5548 = vmatprep.subr.bf16.mxu0 %v3993
    %5549 = vmatpush1.bf16.msra.mxu0 %v3992
    %5550 = vmatprep.subr.bf16.mxu0 %v3975
    %5551 = vmatpush1.bf16.msra.mxu0 %v3974
    %5552 = vmatprep.subr.bf16.mxu0 %v3957
    %5553 = vmatpush1.bf16.msra.mxu0 %v3956
    %5554 = vmatprep.subr.bf16.mxu0 %v3939
    %5555 = vmatpush1.bf16.msra.mxu0 %v3938
    %5556 = vmatprep.subr.bf16.mxu0 %v4209
    %5557 = vmatpush2.bf16.msra.mxu0 %v4208
    %5558 = vmatprep.subr.bf16.mxu0 %v4191
    %5559 = vmatpush2.bf16.msra.mxu0 %v4190
    %5560 = vmatprep.subr.bf16.mxu0 %v4173
    %5561 = vmatpush2.bf16.msra.mxu0 %v4172
    %5562 = vmatprep.subr.bf16.mxu0 %v4155
    %5563 = vmatpush2.bf16.msra.mxu0 %v4154
    %5564 = vmatprep.subr.bf16.mxu0 %v4137
    %5565 = vmatpush2.bf16.msra.mxu0 %v4136
    %5566 = vmatprep.subr.bf16.mxu0 %v4119
    %5567 = vmatpush2.bf16.msra.mxu0 %v4118
    %5568 = vmatprep.subr.bf16.mxu0 %v4101
    %5569 = vmatpush2.bf16.msra.mxu0 %v4100
    %5570 = vmatprep.subr.bf16.mxu0 %v4083
    %5571 = vmatpush2.bf16.msra.mxu0 %v4082
    %5572 = vmatprep.mubr.bf16.mxu0 %v93
    %5573 = vmatmul.mubr.bf16.gmra.mxu0 %v92
    %v5574 = vpop.f32.mrf.mxu0
    %v5575 = vadd.f32 %v5534, %v5574
    %v5576 = vpop.f32.mrf.mxu0
    %v5577 = vadd.f32 %v5536, %v5576
    %v5578 = vpop.f32.mrf.mxu0
    %v5579 = vpop.f32.mrf.mxu0
    %5580 = vdwg.mxu0
    %5581 = vmatprep.subr.bf16.mxu0 %v4353
    %5582 = vmatpush1.bf16.msra.mxu0 %v4352
    %5583 = vmatprep.subr.bf16.mxu0 %v4335
    %5584 = vmatpush1.bf16.msra.mxu0 %v4334
    %5585 = vmatprep.subr.bf16.mxu0 %v4317
    %5586 = vmatpush1.bf16.msra.mxu0 %v4316
    %5587 = vmatprep.subr.bf16.mxu0 %v4299
    %5588 = vmatpush1.bf16.msra.mxu0 %v4298
    %5589 = vmatprep.subr.bf16.mxu0 %v4281
    %5590 = vmatpush1.bf16.msra.mxu0 %v4280
    %5591 = vmatprep.subr.bf16.mxu0 %v4263
    %5592 = vmatpush1.bf16.msra.mxu0 %v4262
    %5593 = vmatprep.subr.bf16.mxu0 %v4245
    %5594 = vmatpush1.bf16.msra.mxu0 %v4244
    %5595 = vmatprep.subr.bf16.mxu0 %v4227
    %5596 = vmatpush1.bf16.msra.mxu0 %v4226
    %5597 = vmatprep.subr.bf16.mxu0 %v4497
    %5598 = vmatpush2.bf16.msra.mxu0 %v4496
    %5599 = vmatprep.subr.bf16.mxu0 %v4479
    %5600 = vmatpush2.bf16.msra.mxu0 %v4478
    %5601 = vmatprep.subr.bf16.mxu0 %v4461
    %5602 = vmatpush2.bf16.msra.mxu0 %v4460
    %5603 = vmatprep.subr.bf16.mxu0 %v4443
    %5604 = vmatpush2.bf16.msra.mxu0 %v4442
    %5605 = vmatprep.subr.bf16.mxu0 %v4425
    %5606 = vmatpush2.bf16.msra.mxu0 %v4424
    %5607 = vmatprep.subr.bf16.mxu0 %v4407
    %5608 = vmatpush2.bf16.msra.mxu0 %v4406
    %5609 = vmatprep.subr.bf16.mxu0 %v4389
    %5610 = vmatpush2.bf16.msra.mxu0 %v4388
    %5611 = vmatprep.subr.bf16.mxu0 %v4371
    %5612 = vmatpush2.bf16.msra.mxu0 %v4370
    %5613 = vmatprep.mubr.bf16.mxu0 %v95
    %5614 = vmatmul.mubr.bf16.gmra.mxu0 %v94
    %v5615 = vpop.f32.mrf.mxu0
    %v5616 = vadd.f32 %v5575, %v5615
    %v5617 = vpop.f32.mrf.mxu0
    %v5618 = vadd.f32 %v5577, %v5617
    %v5619 = vpop.f32.mrf.mxu0
    %v5620 = vpop.f32.mrf.mxu0
    %5621 = vdwg.mxu0
    %5622 = vmatprep.subr.bf16.mxu0 %v3779
    %5623 = vmatpush1.bf16.msra.mxu0 %v3778
    %5624 = vmatprep.subr.bf16.mxu0 %v3761
    %5625 = vmatpush1.bf16.msra.mxu0 %v3760
    %5626 = vmatprep.subr.bf16.mxu0 %v3743
    %5627 = vmatpush1.bf16.msra.mxu0 %v3742
    %5628 = vmatprep.subr.bf16.mxu0 %v3725
    %5629 = vmatpush1.bf16.msra.mxu0 %v3724
    %5630 = vmatprep.subr.bf16.mxu0 %v3707
    %5631 = vmatpush1.bf16.msra.mxu0 %v3706
    %5632 = vmatprep.subr.bf16.mxu0 %v3689
    %5633 = vmatpush1.bf16.msra.mxu0 %v3688
    %5634 = vmatprep.subr.bf16.mxu0 %v3671
    %5635 = vmatpush1.bf16.msra.mxu0 %v3670
    %5636 = vmatprep.subr.bf16.mxu0 %v3653
    %5637 = vmatpush1.bf16.msra.mxu0 %v3652
    %5638 = vmatprep.subr.bf16.mxu0 %v3923
    %5639 = vmatpush2.bf16.msra.mxu0 %v3922
    %5640 = vmatprep.subr.bf16.mxu0 %v3905
    %5641 = vmatpush2.bf16.msra.mxu0 %v3904
    %5642 = vmatprep.subr.bf16.mxu0 %v3887
    %5643 = vmatpush2.bf16.msra.mxu0 %v3886
    %5644 = vmatprep.subr.bf16.mxu0 %v3869
    %5645 = vmatpush2.bf16.msra.mxu0 %v3868
    %5646 = vmatprep.subr.bf16.mxu0 %v3851
    %5647 = vmatpush2.bf16.msra.mxu0 %v3850
    %5648 = vmatprep.subr.bf16.mxu0 %v3833
    %5649 = vmatpush2.bf16.msra.mxu0 %v3832
    %5650 = vmatprep.subr.bf16.mxu0 %v3815
    %5651 = vmatpush2.bf16.msra.mxu0 %v3814
    %5652 = vmatprep.subr.bf16.mxu0 %v3797
    %5653 = vmatpush2.bf16.msra.mxu0 %v3796
    %5654 = vmatprep.mubr.bf16.mxu0 %v91
    %5655 = vmatmul.mubr.bf16.gmra.mxu0 %v90
    %v5656 = vpop.f32.mrf.mxu0
    %v5657 = vadd.f32 %v985, %v5656
    %v5658 = vpop.f32.mrf.mxu0
    %v5659 = vadd.f32 %v989, %v5658
    %v5660 = vpop.f32.mrf.mxu0
    %v5661 = vpop.f32.mrf.mxu0
    %5662 = vdwg.mxu0
    %5663 = vmatprep.subr.bf16.mxu0 %v4067
    %5664 = vmatpush1.bf16.msra.mxu0 %v4066
    %5665 = vmatprep.subr.bf16.mxu0 %v4049
    %5666 = vmatpush1.bf16.msra.mxu0 %v4048
    %5667 = vmatprep.subr.bf16.mxu0 %v4031
    %5668 = vmatpush1.bf16.msra.mxu0 %v4030
    %5669 = vmatprep.subr.bf16.mxu0 %v4013
    %5670 = vmatpush1.bf16.msra.mxu0 %v4012
    %5671 = vmatprep.subr.bf16.mxu0 %v3995
    %5672 = vmatpush1.bf16.msra.mxu0 %v3994
    %5673 = vmatprep.subr.bf16.mxu0 %v3977
    %5674 = vmatpush1.bf16.msra.mxu0 %v3976
    %5675 = vmatprep.subr.bf16.mxu0 %v3959
    %5676 = vmatpush1.bf16.msra.mxu0 %v3958
    %5677 = vmatprep.subr.bf16.mxu0 %v3941
    %5678 = vmatpush1.bf16.msra.mxu0 %v3940
    %5679 = vmatprep.subr.bf16.mxu0 %v4211
    %5680 = vmatpush2.bf16.msra.mxu0 %v4210
    %5681 = vmatprep.subr.bf16.mxu0 %v4193
    %5682 = vmatpush2.bf16.msra.mxu0 %v4192
    %5683 = vmatprep.subr.bf16.mxu0 %v4175
    %5684 = vmatpush2.bf16.msra.mxu0 %v4174
    %5685 = vmatprep.subr.bf16.mxu0 %v4157
    %5686 = vmatpush2.bf16.msra.mxu0 %v4156
    %5687 = vmatprep.subr.bf16.mxu0 %v4139
    %5688 = vmatpush2.bf16.msra.mxu0 %v4138
    %5689 = vmatprep.subr.bf16.mxu0 %v4121
    %5690 = vmatpush2.bf16.msra.mxu0 %v4120
    %5691 = vmatprep.subr.bf16.mxu0 %v4103
    %5692 = vmatpush2.bf16.msra.mxu0 %v4102
    %5693 = vmatprep.subr.bf16.mxu0 %v4085
    %5694 = vmatpush2.bf16.msra.mxu0 %v4084
    %5695 = vmatprep.mubr.bf16.mxu0 %v93
    %5696 = vmatmul.mubr.bf16.gmra.mxu0 %v92
    %v5697 = vpop.f32.mrf.mxu0
    %v5698 = vadd.f32 %v5657, %v5697
    %v5699 = vpop.f32.mrf.mxu0
    %v5700 = vadd.f32 %v5659, %v5699
    %v5701 = vpop.f32.mrf.mxu0
    %v5702 = vpop.f32.mrf.mxu0
    %5703 = vdwg.mxu0
    %5704 = vmatprep.subr.bf16.mxu0 %v4355
    %5705 = vmatpush1.bf16.msra.mxu0 %v4354
    %5706 = vmatprep.subr.bf16.mxu0 %v4337
    %5707 = vmatpush1.bf16.msra.mxu0 %v4336
    %5708 = vmatprep.subr.bf16.mxu0 %v4319
    %5709 = vmatpush1.bf16.msra.mxu0 %v4318
    %5710 = vmatprep.subr.bf16.mxu0 %v4301
    %5711 = vmatpush1.bf16.msra.mxu0 %v4300
    %5712 = vmatprep.subr.bf16.mxu0 %v4283
    %5713 = vmatpush1.bf16.msra.mxu0 %v4282
    %5714 = vmatprep.subr.bf16.mxu0 %v4265
    %5715 = vmatpush1.bf16.msra.mxu0 %v4264
    %5716 = vmatprep.subr.bf16.mxu0 %v4247
    %5717 = vmatpush1.bf16.msra.mxu0 %v4246
    %5718 = vmatprep.subr.bf16.mxu0 %v4229
    %5719 = vmatpush1.bf16.msra.mxu0 %v4228
    %5720 = vmatprep.subr.bf16.mxu0 %v4499
    %5721 = vmatpush2.bf16.msra.mxu0 %v4498
    %5722 = vmatprep.subr.bf16.mxu0 %v4481
    %5723 = vmatpush2.bf16.msra.mxu0 %v4480
    %5724 = vmatprep.subr.bf16.mxu0 %v4463
    %5725 = vmatpush2.bf16.msra.mxu0 %v4462
    %5726 = vmatprep.subr.bf16.mxu0 %v4445
    %5727 = vmatpush2.bf16.msra.mxu0 %v4444
    %5728 = vmatprep.subr.bf16.mxu0 %v4427
    %5729 = vmatpush2.bf16.msra.mxu0 %v4426
    %5730 = vmatprep.subr.bf16.mxu0 %v4409
    %5731 = vmatpush2.bf16.msra.mxu0 %v4408
    %5732 = vmatprep.subr.bf16.mxu0 %v4391
    %5733 = vmatpush2.bf16.msra.mxu0 %v4390
    %5734 = vmatprep.subr.bf16.mxu0 %v4373
    %5735 = vmatpush2.bf16.msra.mxu0 %v4372
    %5736 = vmatprep.mubr.bf16.mxu0 %v95
    %5737 = vmatmul.mubr.bf16.gmra.mxu0 %v94
    %v5738 = vpop.f32.mrf.mxu0
    %v5739 = vadd.f32 %v5698, %v5738
    %v5740 = vpop.f32.mrf.mxu0
    %v5741 = vadd.f32 %v5700, %v5740
    %v5742 = vpop.f32.mrf.mxu0
    %v5743 = vpop.f32.mrf.mxu0
    %5744 = vdwg.mxu0
    %5745 = vmatprep.subr.bf16.mxu0 %v3781
    %5746 = vmatpush1.bf16.msra.mxu0 %v3780
    %5747 = vmatprep.subr.bf16.mxu0 %v3763
    %5748 = vmatpush1.bf16.msra.mxu0 %v3762
    %5749 = vmatprep.subr.bf16.mxu0 %v3745
    %5750 = vmatpush1.bf16.msra.mxu0 %v3744
    %5751 = vmatprep.subr.bf16.mxu0 %v3727
    %5752 = vmatpush1.bf16.msra.mxu0 %v3726
    %5753 = vmatprep.subr.bf16.mxu0 %v3709
    %5754 = vmatpush1.bf16.msra.mxu0 %v3708
    %5755 = vmatprep.subr.bf16.mxu0 %v3691
    %5756 = vmatpush1.bf16.msra.mxu0 %v3690
    %5757 = vmatprep.subr.bf16.mxu0 %v3673
    %5758 = vmatpush1.bf16.msra.mxu0 %v3672
    %5759 = vmatprep.subr.bf16.mxu0 %v3655
    %5760 = vmatpush1.bf16.msra.mxu0 %v3654
    %5761 = vmatprep.subr.bf16.mxu0 %v3925
    %5762 = vmatpush2.bf16.msra.mxu0 %v3924
    %5763 = vmatprep.subr.bf16.mxu0 %v3907
    %5764 = vmatpush2.bf16.msra.mxu0 %v3906
    %5765 = vmatprep.subr.bf16.mxu0 %v3889
    %5766 = vmatpush2.bf16.msra.mxu0 %v3888
    %5767 = vmatprep.subr.bf16.mxu0 %v3871
    %5768 = vmatpush2.bf16.msra.mxu0 %v3870
    %5769 = vmatprep.subr.bf16.mxu0 %v3853
    %5770 = vmatpush2.bf16.msra.mxu0 %v3852
    %5771 = vmatprep.subr.bf16.mxu0 %v3835
    %5772 = vmatpush2.bf16.msra.mxu0 %v3834
    %5773 = vmatprep.subr.bf16.mxu0 %v3817
    %5774 = vmatpush2.bf16.msra.mxu0 %v3816
    %5775 = vmatprep.subr.bf16.mxu0 %v3799
    %5776 = vmatpush2.bf16.msra.mxu0 %v3798
    %5777 = vmatprep.mubr.bf16.mxu0 %v91
    %5778 = vmatmul.mubr.bf16.gmra.mxu0 %v90
    %v5779 = vpop.f32.mrf.mxu0
    %v5780 = vadd.f32 %v993, %v5779
    %v5781 = vpop.f32.mrf.mxu0
    %v5782 = vadd.f32 %v997, %v5781
    %v5783 = vpop.f32.mrf.mxu0
    %v5784 = vpop.f32.mrf.mxu0
    %5785 = vdwg.mxu0
    %5786 = vmatprep.subr.bf16.mxu0 %v4069
    %5787 = vmatpush1.bf16.msra.mxu0 %v4068
    %5788 = vmatprep.subr.bf16.mxu0 %v4051
    %5789 = vmatpush1.bf16.msra.mxu0 %v4050
    %5790 = vmatprep.subr.bf16.mxu0 %v4033
    %5791 = vmatpush1.bf16.msra.mxu0 %v4032
    %5792 = vmatprep.subr.bf16.mxu0 %v4015
    %5793 = vmatpush1.bf16.msra.mxu0 %v4014
    %5794 = vmatprep.subr.bf16.mxu0 %v3997
    %5795 = vmatpush1.bf16.msra.mxu0 %v3996
    %5796 = vmatprep.subr.bf16.mxu0 %v3979
    %5797 = vmatpush1.bf16.msra.mxu0 %v3978
    %5798 = vmatprep.subr.bf16.mxu0 %v3961
    %5799 = vmatpush1.bf16.msra.mxu0 %v3960
    %5800 = vmatprep.subr.bf16.mxu0 %v3943
    %5801 = vmatpush1.bf16.msra.mxu0 %v3942
    %5802 = vmatprep.subr.bf16.mxu0 %v4213
    %5803 = vmatpush2.bf16.msra.mxu0 %v4212
    %5804 = vmatprep.subr.bf16.mxu0 %v4195
    %5805 = vmatpush2.bf16.msra.mxu0 %v4194
    %5806 = vmatprep.subr.bf16.mxu0 %v4177
    %5807 = vmatpush2.bf16.msra.mxu0 %v4176
    %5808 = vmatprep.subr.bf16.mxu0 %v4159
    %5809 = vmatpush2.bf16.msra.mxu0 %v4158
    %5810 = vmatprep.subr.bf16.mxu0 %v4141
    %5811 = vmatpush2.bf16.msra.mxu0 %v4140
    %5812 = vmatprep.subr.bf16.mxu0 %v4123
    %5813 = vmatpush2.bf16.msra.mxu0 %v4122
    %5814 = vmatprep.subr.bf16.mxu0 %v4105
    %5815 = vmatpush2.bf16.msra.mxu0 %v4104
    %5816 = vmatprep.subr.bf16.mxu0 %v4087
    %5817 = vmatpush2.bf16.msra.mxu0 %v4086
    %5818 = vmatprep.mubr.bf16.mxu0 %v93
    %5819 = vmatmul.mubr.bf16.gmra.mxu0 %v92
    %v5820 = vpop.f32.mrf.mxu0
    %v5821 = vadd.f32 %v5780, %v5820
    %v5822 = vpop.f32.mrf.mxu0
    %v5823 = vadd.f32 %v5782, %v5822
    %v5824 = vpop.f32.mrf.mxu0
    %v5825 = vpop.f32.mrf.mxu0
    %5826 = vdwg.mxu0
    %5827 = vmatprep.subr.bf16.mxu0 %v4357
    %5828 = vmatpush1.bf16.msra.mxu0 %v4356
    %5829 = vmatprep.subr.bf16.mxu0 %v4339
    %5830 = vmatpush1.bf16.msra.mxu0 %v4338
    %5831 = vmatprep.subr.bf16.mxu0 %v4321
    %5832 = vmatpush1.bf16.msra.mxu0 %v4320
    %5833 = vmatprep.subr.bf16.mxu0 %v4303
    %5834 = vmatpush1.bf16.msra.mxu0 %v4302
    %5835 = vmatprep.subr.bf16.mxu0 %v4285
    %5836 = vmatpush1.bf16.msra.mxu0 %v4284
    %5837 = vmatprep.subr.bf16.mxu0 %v4267
    %5838 = vmatpush1.bf16.msra.mxu0 %v4266
    %5839 = vmatprep.subr.bf16.mxu0 %v4249
    %5840 = vmatpush1.bf16.msra.mxu0 %v4248
    %5841 = vmatprep.subr.bf16.mxu0 %v4231
    %5842 = vmatpush1.bf16.msra.mxu0 %v4230
    %5843 = vmatprep.subr.bf16.mxu0 %v4501
    %5844 = vmatpush2.bf16.msra.mxu0 %v4500
    %5845 = vmatprep.subr.bf16.mxu0 %v4483
    %5846 = vmatpush2.bf16.msra.mxu0 %v4482
    %5847 = vmatprep.subr.bf16.mxu0 %v4465
    %5848 = vmatpush2.bf16.msra.mxu0 %v4464
    %5849 = vmatprep.subr.bf16.mxu0 %v4447
    %5850 = vmatpush2.bf16.msra.mxu0 %v4446
    %5851 = vmatprep.subr.bf16.mxu0 %v4429
    %5852 = vmatpush2.bf16.msra.mxu0 %v4428
    %5853 = vmatprep.subr.bf16.mxu0 %v4411
    %5854 = vmatpush2.bf16.msra.mxu0 %v4410
    %5855 = vmatprep.subr.bf16.mxu0 %v4393
    %5856 = vmatpush2.bf16.msra.mxu0 %v4392
    %5857 = vmatprep.subr.bf16.mxu0 %v4375
    %5858 = vmatpush2.bf16.msra.mxu0 %v4374
    %5859 = vmatprep.mubr.bf16.mxu0 %v95
    %5860 = vmatmul.mubr.bf16.gmra.mxu0 %v94
    %v5861 = vpop.f32.mrf.mxu0
    %v5862 = vadd.f32 %v5821, %v5861
    %v5863 = vpop.f32.mrf.mxu0
    %v5864 = vadd.f32 %v5823, %v5863
    %v5865 = vpop.f32.mrf.mxu0
    %v5866 = vpop.f32.mrf.mxu0
    %5867 = vdwg.mxu0
    %5868 = vmatprep.subr.bf16.mxu0 %v3783
    %5869 = vmatpush1.bf16.msra.mxu0 %v3782
    %5870 = vmatprep.subr.bf16.mxu0 %v3765
    %5871 = vmatpush1.bf16.msra.mxu0 %v3764
    %5872 = vmatprep.subr.bf16.mxu0 %v3747
    %5873 = vmatpush1.bf16.msra.mxu0 %v3746
    %5874 = vmatprep.subr.bf16.mxu0 %v3729
    %5875 = vmatpush1.bf16.msra.mxu0 %v3728
    %5876 = vmatprep.subr.bf16.mxu0 %v3711
    %5877 = vmatpush1.bf16.msra.mxu0 %v3710
    %5878 = vmatprep.subr.bf16.mxu0 %v3693
    %5879 = vmatpush1.bf16.msra.mxu0 %v3692
    %5880 = vmatprep.subr.bf16.mxu0 %v3675
    %5881 = vmatpush1.bf16.msra.mxu0 %v3674
    %5882 = vmatprep.subr.bf16.mxu0 %v3657
    %5883 = vmatpush1.bf16.msra.mxu0 %v3656
    %5884 = vmatprep.subr.bf16.mxu0 %v3927
    %5885 = vmatpush2.bf16.msra.mxu0 %v3926
    %5886 = vmatprep.subr.bf16.mxu0 %v3909
    %5887 = vmatpush2.bf16.msra.mxu0 %v3908
    %5888 = vmatprep.subr.bf16.mxu0 %v3891
    %5889 = vmatpush2.bf16.msra.mxu0 %v3890
    %5890 = vmatprep.subr.bf16.mxu0 %v3873
    %5891 = vmatpush2.bf16.msra.mxu0 %v3872
    %5892 = vmatprep.subr.bf16.mxu0 %v3855
    %5893 = vmatpush2.bf16.msra.mxu0 %v3854
    %5894 = vmatprep.subr.bf16.mxu0 %v3837
    %5895 = vmatpush2.bf16.msra.mxu0 %v3836
    %5896 = vmatprep.subr.bf16.mxu0 %v3819
    %5897 = vmatpush2.bf16.msra.mxu0 %v3818
    %5898 = vmatprep.subr.bf16.mxu0 %v3801
    %5899 = vmatpush2.bf16.msra.mxu0 %v3800
    %5900 = vmatprep.mubr.bf16.mxu0 %v91
    %5901 = vmatmul.mubr.bf16.gmra.mxu0 %v90
    %v5902 = vpop.f32.mrf.mxu0
    %v5903 = vadd.f32 %v1001, %v5902
    %v5904 = vpop.f32.mrf.mxu0
    %v5905 = vadd.f32 %v1005, %v5904
    %v5906 = vpop.f32.mrf.mxu0
    %v5907 = vpop.f32.mrf.mxu0
    %5908 = vdwg.mxu0
    %5909 = vmatprep.subr.bf16.mxu0 %v4071
    %5910 = vmatpush1.bf16.msra.mxu0 %v4070
    %5911 = vmatprep.subr.bf16.mxu0 %v4053
    %5912 = vmatpush1.bf16.msra.mxu0 %v4052
    %5913 = vmatprep.subr.bf16.mxu0 %v4035
    %5914 = vmatpush1.bf16.msra.mxu0 %v4034
    %5915 = vmatprep.subr.bf16.mxu0 %v4017
    %5916 = vmatpush1.bf16.msra.mxu0 %v4016
    %5917 = vmatprep.subr.bf16.mxu0 %v3999
    %5918 = vmatpush1.bf16.msra.mxu0 %v3998
    %5919 = vmatprep.subr.bf16.mxu0 %v3981
    %5920 = vmatpush1.bf16.msra.mxu0 %v3980
    %5921 = vmatprep.subr.bf16.mxu0 %v3963
    %5922 = vmatpush1.bf16.msra.mxu0 %v3962
    %5923 = vmatprep.subr.bf16.mxu0 %v3945
    %5924 = vmatpush1.bf16.msra.mxu0 %v3944
    %5925 = vmatprep.subr.bf16.mxu0 %v4215
    %5926 = vmatpush2.bf16.msra.mxu0 %v4214
    %5927 = vmatprep.subr.bf16.mxu0 %v4197
    %5928 = vmatpush2.bf16.msra.mxu0 %v4196
    %5929 = vmatprep.subr.bf16.mxu0 %v4179
    %5930 = vmatpush2.bf16.msra.mxu0 %v4178
    %5931 = vmatprep.subr.bf16.mxu0 %v4161
    %5932 = vmatpush2.bf16.msra.mxu0 %v4160
    %5933 = vmatprep.subr.bf16.mxu0 %v4143
    %5934 = vmatpush2.bf16.msra.mxu0 %v4142
    %5935 = vmatprep.subr.bf16.mxu0 %v4125
    %5936 = vmatpush2.bf16.msra.mxu0 %v4124
    %5937 = vmatprep.subr.bf16.mxu0 %v4107
    %5938 = vmatpush2.bf16.msra.mxu0 %v4106
    %5939 = vmatprep.subr.bf16.mxu0 %v4089
    %5940 = vmatpush2.bf16.msra.mxu0 %v4088
    %5941 = vmatprep.mubr.bf16.mxu0 %v93
    %5942 = vmatmul.mubr.bf16.gmra.mxu0 %v92
    %v5943 = vpop.f32.mrf.mxu0
    %v5944 = vadd.f32 %v5903, %v5943
    %v5945 = vpop.f32.mrf.mxu0
    %v5946 = vadd.f32 %v5905, %v5945
    %v5947 = vpop.f32.mrf.mxu0
    %v5948 = vpop.f32.mrf.mxu0
    %5949 = vdwg.mxu0
    %5950 = vmatprep.subr.bf16.mxu0 %v4359
    %5951 = vmatpush1.bf16.msra.mxu0 %v4358
    %5952 = vmatprep.subr.bf16.mxu0 %v4341
    %5953 = vmatpush1.bf16.msra.mxu0 %v4340
    %5954 = vmatprep.subr.bf16.mxu0 %v4323
    %5955 = vmatpush1.bf16.msra.mxu0 %v4322
    %5956 = vmatprep.subr.bf16.mxu0 %v4305
    %5957 = vmatpush1.bf16.msra.mxu0 %v4304
    %5958 = vmatprep.subr.bf16.mxu0 %v4287
    %5959 = vmatpush1.bf16.msra.mxu0 %v4286
    %5960 = vmatprep.subr.bf16.mxu0 %v4269
    %5961 = vmatpush1.bf16.msra.mxu0 %v4268
    %5962 = vmatprep.subr.bf16.mxu0 %v4251
    %5963 = vmatpush1.bf16.msra.mxu0 %v4250
    %5964 = vmatprep.subr.bf16.mxu0 %v4233
    %5965 = vmatpush1.bf16.msra.mxu0 %v4232
    %5966 = vmatprep.subr.bf16.mxu0 %v4503
    %5967 = vmatpush2.bf16.msra.mxu0 %v4502
    %5968 = vmatprep.subr.bf16.mxu0 %v4485
    %5969 = vmatpush2.bf16.msra.mxu0 %v4484
    %5970 = vmatprep.subr.bf16.mxu0 %v4467
    %5971 = vmatpush2.bf16.msra.mxu0 %v4466
    %5972 = vmatprep.subr.bf16.mxu0 %v4449
    %5973 = vmatpush2.bf16.msra.mxu0 %v4448
    %5974 = vmatprep.subr.bf16.mxu0 %v4431
    %5975 = vmatpush2.bf16.msra.mxu0 %v4430
    %5976 = vmatprep.subr.bf16.mxu0 %v4413
    %5977 = vmatpush2.bf16.msra.mxu0 %v4412
    %5978 = vmatprep.subr.bf16.mxu0 %v4395
    %5979 = vmatpush2.bf16.msra.mxu0 %v4394
    %5980 = vmatprep.subr.bf16.mxu0 %v4377
    %5981 = vmatpush2.bf16.msra.mxu0 %v4376
    %5982 = vmatprep.mubr.bf16.mxu0 %v95
    %5983 = vmatmul.mubr.bf16.gmra.mxu0 %v94
    %v5984 = vpop.f32.mrf.mxu0
    %v5985 = vadd.f32 %v5944, %v5984
    %v5986 = vpop.f32.mrf.mxu0
    %v5987 = vadd.f32 %v5946, %v5986
    %v5988 = vpop.f32.mrf.mxu0
    %v5989 = vpop.f32.mrf.mxu0
    %5990 = vdwg.mxu0
    %5991 = vmatprep.subr.bf16.mxu0 %v3785
    %5992 = vmatpush1.bf16.msra.mxu0 %v3784
    %5993 = vmatprep.subr.bf16.mxu0 %v3767
    %5994 = vmatpush1.bf16.msra.mxu0 %v3766
    %5995 = vmatprep.subr.bf16.mxu0 %v3749
    %5996 = vmatpush1.bf16.msra.mxu0 %v3748
    %5997 = vmatprep.subr.bf16.mxu0 %v3731
    %5998 = vmatpush1.bf16.msra.mxu0 %v3730
    %5999 = vmatprep.subr.bf16.mxu0 %v3713
    %6000 = vmatpush1.bf16.msra.mxu0 %v3712
    %6001 = vmatprep.subr.bf16.mxu0 %v3695
    %6002 = vmatpush1.bf16.msra.mxu0 %v3694
    %6003 = vmatprep.subr.bf16.mxu0 %v3677
    %6004 = vmatpush1.bf16.msra.mxu0 %v3676
    %6005 = vmatprep.subr.bf16.mxu0 %v3659
    %6006 = vmatpush1.bf16.msra.mxu0 %v3658
    %6007 = vmatprep.subr.bf16.mxu0 %v3929
    %6008 = vmatpush2.bf16.msra.mxu0 %v3928
    %6009 = vmatprep.subr.bf16.mxu0 %v3911
    %6010 = vmatpush2.bf16.msra.mxu0 %v3910
    %6011 = vmatprep.subr.bf16.mxu0 %v3893
    %6012 = vmatpush2.bf16.msra.mxu0 %v3892
    %6013 = vmatprep.subr.bf16.mxu0 %v3875
    %6014 = vmatpush2.bf16.msra.mxu0 %v3874
    %6015 = vmatprep.subr.bf16.mxu0 %v3857
    %6016 = vmatpush2.bf16.msra.mxu0 %v3856
    %6017 = vmatprep.subr.bf16.mxu0 %v3839
    %6018 = vmatpush2.bf16.msra.mxu0 %v3838
    %6019 = vmatprep.subr.bf16.mxu0 %v3821
    %6020 = vmatpush2.bf16.msra.mxu0 %v3820
    %6021 = vmatprep.subr.bf16.mxu0 %v3803
    %6022 = vmatpush2.bf16.msra.mxu0 %v3802
    %6023 = vmatprep.mubr.bf16.mxu0 %v91
    %6024 = vmatmul.mubr.bf16.gmra.mxu0 %v90
    %v6025 = vpop.f32.mrf.mxu0
    %v6026 = vadd.f32 %v1009, %v6025
    %v6027 = vpop.f32.mrf.mxu0
    %v6028 = vadd.f32 %v1013, %v6027
    %v6029 = vpop.f32.mrf.mxu0
    %v6030 = vpop.f32.mrf.mxu0
    %6031 = vdwg.mxu0
    %6032 = vmatprep.subr.bf16.mxu0 %v4073
    %6033 = vmatpush1.bf16.msra.mxu0 %v4072
    %6034 = vmatprep.subr.bf16.mxu0 %v4055
    %6035 = vmatpush1.bf16.msra.mxu0 %v4054
    %6036 = vmatprep.subr.bf16.mxu0 %v4037
    %6037 = vmatpush1.bf16.msra.mxu0 %v4036
    %6038 = vmatprep.subr.bf16.mxu0 %v4019
    %6039 = vmatpush1.bf16.msra.mxu0 %v4018
    %6040 = vmatprep.subr.bf16.mxu0 %v4001
    %6041 = vmatpush1.bf16.msra.mxu0 %v4000
    %6042 = vmatprep.subr.bf16.mxu0 %v3983
    %6043 = vmatpush1.bf16.msra.mxu0 %v3982
    %6044 = vmatprep.subr.bf16.mxu0 %v3965
    %6045 = vmatpush1.bf16.msra.mxu0 %v3964
    %6046 = vmatprep.subr.bf16.mxu0 %v3947
    %6047 = vmatpush1.bf16.msra.mxu0 %v3946
    %6048 = vmatprep.subr.bf16.mxu0 %v4217
    %6049 = vmatpush2.bf16.msra.mxu0 %v4216
    %6050 = vmatprep.subr.bf16.mxu0 %v4199
    %6051 = vmatpush2.bf16.msra.mxu0 %v4198
    %6052 = vmatprep.subr.bf16.mxu0 %v4181
    %6053 = vmatpush2.bf16.msra.mxu0 %v4180
    %6054 = vmatprep.subr.bf16.mxu0 %v4163
    %6055 = vmatpush2.bf16.msra.mxu0 %v4162
    %6056 = vmatprep.subr.bf16.mxu0 %v4145
    %6057 = vmatpush2.bf16.msra.mxu0 %v4144
    %6058 = vmatprep.subr.bf16.mxu0 %v4127
    %6059 = vmatpush2.bf16.msra.mxu0 %v4126
    %6060 = vmatprep.subr.bf16.mxu0 %v4109
    %6061 = vmatpush2.bf16.msra.mxu0 %v4108
    %6062 = vmatprep.subr.bf16.mxu0 %v4091
    %6063 = vmatpush2.bf16.msra.mxu0 %v4090
    %6064 = vmatprep.mubr.bf16.mxu0 %v93
    %6065 = vmatmul.mubr.bf16.gmra.mxu0 %v92
    %v6066 = vpop.f32.mrf.mxu0
    %v6067 = vadd.f32 %v6026, %v6066
    %v6068 = vpop.f32.mrf.mxu0
    %v6069 = vadd.f32 %v6028, %v6068
    %v6070 = vpop.f32.mrf.mxu0
    %v6071 = vpop.f32.mrf.mxu0
    %6072 = vdwg.mxu0
    %6073 = vmatprep.subr.bf16.mxu0 %v4361
    %6074 = vmatpush1.bf16.msra.mxu0 %v4360
    %6075 = vmatprep.subr.bf16.mxu0 %v4343
    %6076 = vmatpush1.bf16.msra.mxu0 %v4342
    %6077 = vmatprep.subr.bf16.mxu0 %v4325
    %6078 = vmatpush1.bf16.msra.mxu0 %v4324
    %6079 = vmatprep.subr.bf16.mxu0 %v4307
    %6080 = vmatpush1.bf16.msra.mxu0 %v4306
    %6081 = vmatprep.subr.bf16.mxu0 %v4289
    %6082 = vmatpush1.bf16.msra.mxu0 %v4288
    %6083 = vmatprep.subr.bf16.mxu0 %v4271
    %6084 = vmatpush1.bf16.msra.mxu0 %v4270
    %6085 = vmatprep.subr.bf16.mxu0 %v4253
    %6086 = vmatpush1.bf16.msra.mxu0 %v4252
    %6087 = vmatprep.subr.bf16.mxu0 %v4235
    %6088 = vmatpush1.bf16.msra.mxu0 %v4234
    %6089 = vmatprep.subr.bf16.mxu0 %v4505
    %6090 = vmatpush2.bf16.msra.mxu0 %v4504
    %6091 = vmatprep.subr.bf16.mxu0 %v4487
    %6092 = vmatpush2.bf16.msra.mxu0 %v4486
    %6093 = vmatprep.subr.bf16.mxu0 %v4469
    %6094 = vmatpush2.bf16.msra.mxu0 %v4468
    %6095 = vmatprep.subr.bf16.mxu0 %v4451
    %6096 = vmatpush2.bf16.msra.mxu0 %v4450
    %6097 = vmatprep.subr.bf16.mxu0 %v4433
    %6098 = vmatpush2.bf16.msra.mxu0 %v4432
    %6099 = vmatprep.subr.bf16.mxu0 %v4415
    %6100 = vmatpush2.bf16.msra.mxu0 %v4414
    %6101 = vmatprep.subr.bf16.mxu0 %v4397
    %6102 = vmatpush2.bf16.msra.mxu0 %v4396
    %6103 = vmatprep.subr.bf16.mxu0 %v4379
    %6104 = vmatpush2.bf16.msra.mxu0 %v4378
    %6105 = vmatprep.mubr.bf16.mxu0 %v95
    %6106 = vmatmul.mubr.bf16.gmra.mxu0 %v94
    %v6107 = vpop.f32.mrf.mxu0
    %v6108 = vadd.f32 %v6067, %v6107
    %v6109 = vpop.f32.mrf.mxu0
    %v6110 = vadd.f32 %v6069, %v6109
    %v6111 = vpop.f32.mrf.mxu0
    %v6112 = vpop.f32.mrf.mxu0
    %6113 = vdwg.mxu0
    %6114 = vmatprep.subr.bf16.mxu0 %v3787
    %6115 = vmatpush1.bf16.msra.mxu0 %v3786
    %6116 = vmatprep.subr.bf16.mxu0 %v3769
    %6117 = vmatpush1.bf16.msra.mxu0 %v3768
    %6118 = vmatprep.subr.bf16.mxu0 %v3751
    %6119 = vmatpush1.bf16.msra.mxu0 %v3750
    %6120 = vmatprep.subr.bf16.mxu0 %v3733
    %6121 = vmatpush1.bf16.msra.mxu0 %v3732
    %6122 = vmatprep.subr.bf16.mxu0 %v3715
    %6123 = vmatpush1.bf16.msra.mxu0 %v3714
    %6124 = vmatprep.subr.bf16.mxu0 %v3697
    %6125 = vmatpush1.bf16.msra.mxu0 %v3696
    %6126 = vmatprep.subr.bf16.mxu0 %v3679
    %6127 = vmatpush1.bf16.msra.mxu0 %v3678
    %6128 = vmatprep.subr.bf16.mxu0 %v3661
    %6129 = vmatpush1.bf16.msra.mxu0 %v3660
    %6130 = vmatprep.subr.bf16.mxu0 %v3931
    %6131 = vmatpush2.bf16.msra.mxu0 %v3930
    %6132 = vmatprep.subr.bf16.mxu0 %v3913
    %6133 = vmatpush2.bf16.msra.mxu0 %v3912
    %6134 = vmatprep.subr.bf16.mxu0 %v3895
    %6135 = vmatpush2.bf16.msra.mxu0 %v3894
    %6136 = vmatprep.subr.bf16.mxu0 %v3877
    %6137 = vmatpush2.bf16.msra.mxu0 %v3876
    %6138 = vmatprep.subr.bf16.mxu0 %v3859
    %6139 = vmatpush2.bf16.msra.mxu0 %v3858
    %6140 = vmatprep.subr.bf16.mxu0 %v3841
    %6141 = vmatpush2.bf16.msra.mxu0 %v3840
    %6142 = vmatprep.subr.bf16.mxu0 %v3823
    %6143 = vmatpush2.bf16.msra.mxu0 %v3822
    %6144 = vmatprep.subr.bf16.mxu0 %v3805
    %6145 = vmatpush2.bf16.msra.mxu0 %v3804
    %6146 = vmatprep.mubr.bf16.mxu0 %v91
    %6147 = vmatmul.mubr.bf16.gmra.mxu0 %v90
    %v6148 = vpop.f32.mrf.mxu0
    %v6149 = vadd.f32 %v1017, %v6148
    %v6150 = vpop.f32.mrf.mxu0
    %v6151 = vadd.f32 %v1021, %v6150
    %v6152 = vpop.f32.mrf.mxu0
    %v6153 = vpop.f32.mrf.mxu0
    %6154 = vdwg.mxu0
    %6155 = vmatprep.subr.bf16.mxu0 %v4075
    %6156 = vmatpush1.bf16.msra.mxu0 %v4074
    %6157 = vmatprep.subr.bf16.mxu0 %v4057
    %6158 = vmatpush1.bf16.msra.mxu0 %v4056
    %6159 = vmatprep.subr.bf16.mxu0 %v4039
    %6160 = vmatpush1.bf16.msra.mxu0 %v4038
    %6161 = vmatprep.subr.bf16.mxu0 %v4021
    %6162 = vmatpush1.bf16.msra.mxu0 %v4020
    %6163 = vmatprep.subr.bf16.mxu0 %v4003
    %6164 = vmatpush1.bf16.msra.mxu0 %v4002
    %6165 = vmatprep.subr.bf16.mxu0 %v3985
    %6166 = vmatpush1.bf16.msra.mxu0 %v3984
    %6167 = vmatprep.subr.bf16.mxu0 %v3967
    %6168 = vmatpush1.bf16.msra.mxu0 %v3966
    %6169 = vmatprep.subr.bf16.mxu0 %v3949
    %6170 = vmatpush1.bf16.msra.mxu0 %v3948
    %6171 = vmatprep.subr.bf16.mxu0 %v4219
    %6172 = vmatpush2.bf16.msra.mxu0 %v4218
    %6173 = vmatprep.subr.bf16.mxu0 %v4201
    %6174 = vmatpush2.bf16.msra.mxu0 %v4200
    %6175 = vmatprep.subr.bf16.mxu0 %v4183
    %6176 = vmatpush2.bf16.msra.mxu0 %v4182
    %6177 = vmatprep.subr.bf16.mxu0 %v4165
    %6178 = vmatpush2.bf16.msra.mxu0 %v4164
    %6179 = vmatprep.subr.bf16.mxu0 %v4147
    %6180 = vmatpush2.bf16.msra.mxu0 %v4146
    %6181 = vmatprep.subr.bf16.mxu0 %v4129
    %6182 = vmatpush2.bf16.msra.mxu0 %v4128
    %6183 = vmatprep.subr.bf16.mxu0 %v4111
    %6184 = vmatpush2.bf16.msra.mxu0 %v4110
    %6185 = vmatprep.subr.bf16.mxu0 %v4093
    %6186 = vmatpush2.bf16.msra.mxu0 %v4092
    %6187 = vmatprep.mubr.bf16.mxu0 %v93
    %6188 = vmatmul.mubr.bf16.gmra.mxu0 %v92
    %v6189 = vpop.f32.mrf.mxu0
    %v6190 = vadd.f32 %v6149, %v6189
    %v6191 = vpop.f32.mrf.mxu0
    %v6192 = vadd.f32 %v6151, %v6191
    %v6193 = vpop.f32.mrf.mxu0
    %v6194 = vpop.f32.mrf.mxu0
    %6195 = vdwg.mxu0
    %6196 = vmatprep.subr.bf16.mxu0 %v4363
    %6197 = vmatpush1.bf16.msra.mxu0 %v4362
    %6198 = vmatprep.subr.bf16.mxu0 %v4345
    %6199 = vmatpush1.bf16.msra.mxu0 %v4344
    %6200 = vmatprep.subr.bf16.mxu0 %v4327
    %6201 = vmatpush1.bf16.msra.mxu0 %v4326
    %6202 = vmatprep.subr.bf16.mxu0 %v4309
    %6203 = vmatpush1.bf16.msra.mxu0 %v4308
    %6204 = vmatprep.subr.bf16.mxu0 %v4291
    %6205 = vmatpush1.bf16.msra.mxu0 %v4290
    %6206 = vmatprep.subr.bf16.mxu0 %v4273
    %6207 = vmatpush1.bf16.msra.mxu0 %v4272
    %6208 = vmatprep.subr.bf16.mxu0 %v4255
    %6209 = vmatpush1.bf16.msra.mxu0 %v4254
    %6210 = vmatprep.subr.bf16.mxu0 %v4237
    %6211 = vmatpush1.bf16.msra.mxu0 %v4236
    %6212 = vmatprep.subr.bf16.mxu0 %v4507
    %6213 = vmatpush2.bf16.msra.mxu0 %v4506
    %6214 = vmatprep.subr.bf16.mxu0 %v4489
    %6215 = vmatpush2.bf16.msra.mxu0 %v4488
    %6216 = vmatprep.subr.bf16.mxu0 %v4471
    %6217 = vmatpush2.bf16.msra.mxu0 %v4470
    %6218 = vmatprep.subr.bf16.mxu0 %v4453
    %6219 = vmatpush2.bf16.msra.mxu0 %v4452
    %6220 = vmatprep.subr.bf16.mxu0 %v4435
    %6221 = vmatpush2.bf16.msra.mxu0 %v4434
    %6222 = vmatprep.subr.bf16.mxu0 %v4417
    %6223 = vmatpush2.bf16.msra.mxu0 %v4416
    %6224 = vmatprep.subr.bf16.mxu0 %v4399
    %6225 = vmatpush2.bf16.msra.mxu0 %v4398
    %6226 = vmatprep.subr.bf16.mxu0 %v4381
    %6227 = vmatpush2.bf16.msra.mxu0 %v4380
    %6228 = vmatprep.mubr.bf16.mxu0 %v95
    %6229 = vmatmul.mubr.bf16.gmra.mxu0 %v94
    %v6230 = vpop.f32.mrf.mxu0
    %v6231 = vadd.f32 %v6190, %v6230
    %v6232 = vpop.f32.mrf.mxu0
    %v6233 = vadd.f32 %v6192, %v6232
    %v6234 = vpop.f32.mrf.mxu0
    %v6235 = vpop.f32.mrf.mxu0
    %6236 = vdwg.mxu0
    %6237 = vmatprep.subr.bf16.mxu0 %v3789
    %6238 = vmatpush1.bf16.msra.mxu0 %v3788
    %6239 = vmatprep.subr.bf16.mxu0 %v3771
    %6240 = vmatpush1.bf16.msra.mxu0 %v3770
    %6241 = vmatprep.subr.bf16.mxu0 %v3753
    %6242 = vmatpush1.bf16.msra.mxu0 %v3752
    %6243 = vmatprep.subr.bf16.mxu0 %v3735
    %6244 = vmatpush1.bf16.msra.mxu0 %v3734
    %6245 = vmatprep.subr.bf16.mxu0 %v3717
    %6246 = vmatpush1.bf16.msra.mxu0 %v3716
    %6247 = vmatprep.subr.bf16.mxu0 %v3699
    %6248 = vmatpush1.bf16.msra.mxu0 %v3698
    %6249 = vmatprep.subr.bf16.mxu0 %v3681
    %6250 = vmatpush1.bf16.msra.mxu0 %v3680
    %6251 = vmatprep.subr.bf16.mxu0 %v3663
    %6252 = vmatpush1.bf16.msra.mxu0 %v3662
    %6253 = vmatprep.subr.bf16.mxu0 %v3933
    %6254 = vmatpush2.bf16.msra.mxu0 %v3932
    %6255 = vmatprep.subr.bf16.mxu0 %v3915
    %6256 = vmatpush2.bf16.msra.mxu0 %v3914
    %6257 = vmatprep.subr.bf16.mxu0 %v3897
    %6258 = vmatpush2.bf16.msra.mxu0 %v3896
    %6259 = vmatprep.subr.bf16.mxu0 %v3879
    %6260 = vmatpush2.bf16.msra.mxu0 %v3878
    %6261 = vmatprep.subr.bf16.mxu0 %v3861
    %6262 = vmatpush2.bf16.msra.mxu0 %v3860
    %6263 = vmatprep.subr.bf16.mxu0 %v3843
    %6264 = vmatpush2.bf16.msra.mxu0 %v3842
    %6265 = vmatprep.subr.bf16.mxu0 %v3825
    %6266 = vmatpush2.bf16.msra.mxu0 %v3824
    %6267 = vmatprep.subr.bf16.mxu0 %v3807
    %6268 = vmatpush2.bf16.msra.mxu0 %v3806
    %6269 = vmatprep.mubr.bf16.mxu0 %v91
    %6270 = vmatmul.mubr.bf16.gmra.mxu0 %v90
    %v6271 = vpop.f32.mrf.mxu0
    %v6272 = vadd.f32 %v1025, %v6271
    %v6273 = vpop.f32.mrf.mxu0
    %v6274 = vadd.f32 %v1029, %v6273
    %v6275 = vpop.f32.mrf.mxu0
    %v6276 = vpop.f32.mrf.mxu0
    %6277 = vdwg.mxu0
    %6278 = vmatprep.subr.bf16.mxu0 %v4077
    %6279 = vmatpush1.bf16.msra.mxu0 %v4076
    %6280 = vmatprep.subr.bf16.mxu0 %v4059
    %6281 = vmatpush1.bf16.msra.mxu0 %v4058
    %6282 = vmatprep.subr.bf16.mxu0 %v4041
    %6283 = vmatpush1.bf16.msra.mxu0 %v4040
    %6284 = vmatprep.subr.bf16.mxu0 %v4023
    %6285 = vmatpush1.bf16.msra.mxu0 %v4022
    %6286 = vmatprep.subr.bf16.mxu0 %v4005
    %6287 = vmatpush1.bf16.msra.mxu0 %v4004
    %6288 = vmatprep.subr.bf16.mxu0 %v3987
    %6289 = vmatpush1.bf16.msra.mxu0 %v3986
    %6290 = vmatprep.subr.bf16.mxu0 %v3969
    %6291 = vmatpush1.bf16.msra.mxu0 %v3968
    %6292 = vmatprep.subr.bf16.mxu0 %v3951
    %6293 = vmatpush1.bf16.msra.mxu0 %v3950
    %6294 = vmatprep.subr.bf16.mxu0 %v4221
    %6295 = vmatpush2.bf16.msra.mxu0 %v4220
    %6296 = vmatprep.subr.bf16.mxu0 %v4203
    %6297 = vmatpush2.bf16.msra.mxu0 %v4202
    %6298 = vmatprep.subr.bf16.mxu0 %v4185
    %6299 = vmatpush2.bf16.msra.mxu0 %v4184
    %6300 = vmatprep.subr.bf16.mxu0 %v4167
    %6301 = vmatpush2.bf16.msra.mxu0 %v4166
    %6302 = vmatprep.subr.bf16.mxu0 %v4149
    %6303 = vmatpush2.bf16.msra.mxu0 %v4148
    %6304 = vmatprep.subr.bf16.mxu0 %v4131
    %6305 = vmatpush2.bf16.msra.mxu0 %v4130
    %6306 = vmatprep.subr.bf16.mxu0 %v4113
    %6307 = vmatpush2.bf16.msra.mxu0 %v4112
    %6308 = vmatprep.subr.bf16.mxu0 %v4095
    %6309 = vmatpush2.bf16.msra.mxu0 %v4094
    %6310 = vmatprep.mubr.bf16.mxu0 %v93
    %6311 = vmatmul.mubr.bf16.gmra.mxu0 %v92
    %v6312 = vpop.f32.mrf.mxu0
    %v6313 = vadd.f32 %v6272, %v6312
    %v6314 = vpop.f32.mrf.mxu0
    %v6315 = vadd.f32 %v6274, %v6314
    %v6316 = vpop.f32.mrf.mxu0
    %v6317 = vpop.f32.mrf.mxu0
    %6318 = vdwg.mxu0
    %6319 = vmatprep.subr.bf16.mxu0 %v4365
    %6320 = vmatpush1.bf16.msra.mxu0 %v4364
    %6321 = vmatprep.subr.bf16.mxu0 %v4347
    %6322 = vmatpush1.bf16.msra.mxu0 %v4346
    %6323 = vmatprep.subr.bf16.mxu0 %v4329
    %6324 = vmatpush1.bf16.msra.mxu0 %v4328
    %6325 = vmatprep.subr.bf16.mxu0 %v4311
    %6326 = vmatpush1.bf16.msra.mxu0 %v4310
    %6327 = vmatprep.subr.bf16.mxu0 %v4293
    %6328 = vmatpush1.bf16.msra.mxu0 %v4292
    %6329 = vmatprep.subr.bf16.mxu0 %v4275
    %6330 = vmatpush1.bf16.msra.mxu0 %v4274
    %6331 = vmatprep.subr.bf16.mxu0 %v4257
    %6332 = vmatpush1.bf16.msra.mxu0 %v4256
    %6333 = vmatprep.subr.bf16.mxu0 %v4239
    %6334 = vmatpush1.bf16.msra.mxu0 %v4238
    %6335 = vmatprep.subr.bf16.mxu0 %v4509
    %6336 = vmatpush2.bf16.msra.mxu0 %v4508
    %6337 = vmatprep.subr.bf16.mxu0 %v4491
    %6338 = vmatpush2.bf16.msra.mxu0 %v4490
    %6339 = vmatprep.subr.bf16.mxu0 %v4473
    %6340 = vmatpush2.bf16.msra.mxu0 %v4472
    %6341 = vmatprep.subr.bf16.mxu0 %v4455
    %6342 = vmatpush2.bf16.msra.mxu0 %v4454
    %6343 = vmatprep.subr.bf16.mxu0 %v4437
    %6344 = vmatpush2.bf16.msra.mxu0 %v4436
    %6345 = vmatprep.subr.bf16.mxu0 %v4419
    %6346 = vmatpush2.bf16.msra.mxu0 %v4418
    %6347 = vmatprep.subr.bf16.mxu0 %v4401
    %6348 = vmatpush2.bf16.msra.mxu0 %v4400
    %6349 = vmatprep.subr.bf16.mxu0 %v4383
    %6350 = vmatpush2.bf16.msra.mxu0 %v4382
    %6351 = vmatprep.mubr.bf16.mxu0 %v95
    %6352 = vmatmul.mubr.bf16.gmra.mxu0 %v94
    %v6353 = vpop.f32.mrf.mxu0
    %v6354 = vadd.f32 %v6313, %v6353
    %v6355 = vpop.f32.mrf.mxu0
    %v6356 = vadd.f32 %v6315, %v6355
    %v6357 = vpop.f32.mrf.mxu0
    %v6358 = vpop.f32.mrf.mxu0
    %6359 = vdwg.mxu0
    %6360 = vmatprep.subr.bf16.mxu0 %v3791
    %6361 = vmatpush1.bf16.msra.mxu0 %v3790
    %6362 = vmatprep.subr.bf16.mxu0 %v3773
    %6363 = vmatpush1.bf16.msra.mxu0 %v3772
    %6364 = vmatprep.subr.bf16.mxu0 %v3755
    %6365 = vmatpush1.bf16.msra.mxu0 %v3754
    %6366 = vmatprep.subr.bf16.mxu0 %v3737
    %6367 = vmatpush1.bf16.msra.mxu0 %v3736
    %6368 = vmatprep.subr.bf16.mxu0 %v3719
    %6369 = vmatpush1.bf16.msra.mxu0 %v3718
    %6370 = vmatprep.subr.bf16.mxu0 %v3701
    %6371 = vmatpush1.bf16.msra.mxu0 %v3700
    %6372 = vmatprep.subr.bf16.mxu0 %v3683
    %6373 = vmatpush1.bf16.msra.mxu0 %v3682
    %6374 = vmatprep.subr.bf16.mxu0 %v3665
    %6375 = vmatpush1.bf16.msra.mxu0 %v3664
    %6376 = vmatprep.subr.bf16.mxu0 %v3935
    %6377 = vmatpush2.bf16.msra.mxu0 %v3934
    %6378 = vmatprep.subr.bf16.mxu0 %v3917
    %6379 = vmatpush2.bf16.msra.mxu0 %v3916
    %6380 = vmatprep.subr.bf16.mxu0 %v3899
    %6381 = vmatpush2.bf16.msra.mxu0 %v3898
    %6382 = vmatprep.subr.bf16.mxu0 %v3881
    %6383 = vmatpush2.bf16.msra.mxu0 %v3880
    %6384 = vmatprep.subr.bf16.mxu0 %v3863
    %6385 = vmatpush2.bf16.msra.mxu0 %v3862
    %6386 = vmatprep.subr.bf16.mxu0 %v3845
    %6387 = vmatpush2.bf16.msra.mxu0 %v3844
    %6388 = vmatprep.subr.bf16.mxu0 %v3827
    %6389 = vmatpush2.bf16.msra.mxu0 %v3826
    %6390 = vmatprep.subr.bf16.mxu0 %v3809
    %6391 = vmatpush2.bf16.msra.mxu0 %v3808
    %6392 = vmatprep.mubr.bf16.mxu0 %v91
    %6393 = vmatmul.mubr.bf16.gmra.mxu0 %v90
    %v6394 = vpop.f32.mrf.mxu0
    %v6395 = vadd.f32 %v1033, %v6394
    %v6396 = vpop.f32.mrf.mxu0
    %v6397 = vadd.f32 %v1037, %v6396
    %v6398 = vpop.f32.mrf.mxu0
    %v6399 = vpop.f32.mrf.mxu0
    %6400 = vdwg.mxu0
    %6401 = vmatprep.subr.bf16.mxu0 %v4079
    %6402 = vmatpush1.bf16.msra.mxu0 %v4078
    %6403 = vmatprep.subr.bf16.mxu0 %v4061
    %6404 = vmatpush1.bf16.msra.mxu0 %v4060
    %6405 = vmatprep.subr.bf16.mxu0 %v4043
    %6406 = vmatpush1.bf16.msra.mxu0 %v4042
    %6407 = vmatprep.subr.bf16.mxu0 %v4025
    %6408 = vmatpush1.bf16.msra.mxu0 %v4024
    %6409 = vmatprep.subr.bf16.mxu0 %v4007
    %6410 = vmatpush1.bf16.msra.mxu0 %v4006
    %6411 = vmatprep.subr.bf16.mxu0 %v3989
    %6412 = vmatpush1.bf16.msra.mxu0 %v3988
    %6413 = vmatprep.subr.bf16.mxu0 %v3971
    %6414 = vmatpush1.bf16.msra.mxu0 %v3970
    %6415 = vmatprep.subr.bf16.mxu0 %v3953
    %6416 = vmatpush1.bf16.msra.mxu0 %v3952
    %6417 = vmatprep.subr.bf16.mxu0 %v4223
    %6418 = vmatpush2.bf16.msra.mxu0 %v4222
    %6419 = vmatprep.subr.bf16.mxu0 %v4205
    %6420 = vmatpush2.bf16.msra.mxu0 %v4204
    %6421 = vmatprep.subr.bf16.mxu0 %v4187
    %6422 = vmatpush2.bf16.msra.mxu0 %v4186
    %6423 = vmatprep.subr.bf16.mxu0 %v4169
    %6424 = vmatpush2.bf16.msra.mxu0 %v4168
    %6425 = vmatprep.subr.bf16.mxu0 %v4151
    %6426 = vmatpush2.bf16.msra.mxu0 %v4150
    %6427 = vmatprep.subr.bf16.mxu0 %v4133
    %6428 = vmatpush2.bf16.msra.mxu0 %v4132
    %6429 = vmatprep.subr.bf16.mxu0 %v4115
    %6430 = vmatpush2.bf16.msra.mxu0 %v4114
    %6431 = vmatprep.subr.bf16.mxu0 %v4097
    %6432 = vmatpush2.bf16.msra.mxu0 %v4096
    %6433 = vmatprep.mubr.bf16.mxu0 %v93
    %6434 = vmatmul.mubr.bf16.gmra.mxu0 %v92
    %v6435 = vpop.f32.mrf.mxu0
    %v6436 = vadd.f32 %v6395, %v6435
    %v6437 = vpop.f32.mrf.mxu0
    %v6438 = vadd.f32 %v6397, %v6437
    %v6439 = vpop.f32.mrf.mxu0
    %v6440 = vpop.f32.mrf.mxu0
    %6441 = vdwg.mxu0
    %6442 = vmatprep.subr.bf16.mxu0 %v4367
    %6443 = vmatpush1.bf16.msra.mxu0 %v4366
    %6444 = vmatprep.subr.bf16.mxu0 %v4349
    %6445 = vmatpush1.bf16.msra.mxu0 %v4348
    %6446 = vmatprep.subr.bf16.mxu0 %v4331
    %6447 = vmatpush1.bf16.msra.mxu0 %v4330
    %6448 = vmatprep.subr.bf16.mxu0 %v4313
    %6449 = vmatpush1.bf16.msra.mxu0 %v4312
    %6450 = vmatprep.subr.bf16.mxu0 %v4295
    %6451 = vmatpush1.bf16.msra.mxu0 %v4294
    %6452 = vmatprep.subr.bf16.mxu0 %v4277
    %6453 = vmatpush1.bf16.msra.mxu0 %v4276
    %6454 = vmatprep.subr.bf16.mxu0 %v4259
    %6455 = vmatpush1.bf16.msra.mxu0 %v4258
    %6456 = vmatprep.subr.bf16.mxu0 %v4241
    %6457 = vmatpush1.bf16.msra.mxu0 %v4240
    %6458 = vmatprep.subr.bf16.mxu0 %v4511
    %6459 = vmatpush2.bf16.msra.mxu0 %v4510
    %6460 = vmatprep.subr.bf16.mxu0 %v4493
    %6461 = vmatpush2.bf16.msra.mxu0 %v4492
    %6462 = vmatprep.subr.bf16.mxu0 %v4475
    %6463 = vmatpush2.bf16.msra.mxu0 %v4474
    %6464 = vmatprep.subr.bf16.mxu0 %v4457
    %6465 = vmatpush2.bf16.msra.mxu0 %v4456
    %6466 = vmatprep.subr.bf16.mxu0 %v4439
    %6467 = vmatpush2.bf16.msra.mxu0 %v4438
    %6468 = vmatprep.subr.bf16.mxu0 %v4421
    %6469 = vmatpush2.bf16.msra.mxu0 %v4420
    %6470 = vmatprep.subr.bf16.mxu0 %v4403
    %6471 = vmatpush2.bf16.msra.mxu0 %v4402
    %6472 = vmatprep.subr.bf16.mxu0 %v4385
    %6473 = vmatpush2.bf16.msra.mxu0 %v4384
    %6474 = vmatprep.mubr.bf16.mxu0 %v95
    %6475 = vmatmul.mubr.bf16.gmra.mxu0 %v94
    %v6476 = vpop.f32.mrf.mxu0
    %v6477 = vadd.f32 %v6436, %v6476
    %v6478 = vpop.f32.mrf.mxu0
    %v6479 = vadd.f32 %v6438, %v6478
    %v6480 = vpop.f32.mrf.mxu0
    %v6481 = vpop.f32.mrf.mxu0
    %6482 = vdwg.mxu0
    %v6483 = vxor.u32 %v5493, 2147483648
    %v6484 = vxor.u32 %v5495, 2147483648
    %v6485 = vxor.u32 %v5616, 2147483648
    %v6486 = vxor.u32 %v5618, 2147483648
    %v6487 = vxor.u32 %v5739, 2147483648
    %v6488 = vxor.u32 %v5741, 2147483648
    %v6489 = vmul.f32 %v6483, 1.442695
    %v6490 = vpow.pop %v6489
    %v6491 = vmul.f32 %v6484, 1.442695
    %v6492 = vpow.pop %v6491
    %v6493 = vmul.f32 %v6485, 1.442695
    %v6494 = vpow.pop %v6493
    %v6495 = vmul.f32 %v6486, 1.442695
    %v6496 = vpow.pop %v6495
    %v6497 = vmul.f32 %v6487, 1.442695
    %v6498 = vpow.pop %v6497
    %v6499 = vmul.f32 %v6488, 1.442695
    %v6500 = vpow.pop %v6499
    %v6501 = vadd.f32 %v6490, 1.0
    %v6502 = vadd.f32 %v6492, 1.0
    %v6503 = vadd.f32 %v6494, 1.0
    %v6504 = vadd.f32 %v6496, 1.0
    %v6505 = vadd.f32 %v6498, 1.0
    %v6506 = vadd.f32 %v6500, 1.0
    %v6507 = vrcp.pop %v6501
    %v6508 = vmul.f32 1.0, %v6507
    %v6509 = vrcp.pop %v6502
    %v6510 = vmul.f32 1.0, %v6509
    %v6511 = vrcp.pop %v6503
    %v6512 = vmul.f32 1.0, %v6511
    %v6513 = vrcp.pop %v6504
    %v6514 = vmul.f32 1.0, %v6513
    %v6515 = vrcp.pop %v6505
    %v6516 = vmul.f32 1.0, %v6515
    %v6517 = vrcp.pop %v6506
    %v6518 = vmul.f32 1.0, %v6517
    %v6519 = vtanh.pop %v5862
    %v6520 = vtanh.pop %v5864
    %v6521 = vtanh.pop %v5985
    %v6522 = vtanh.pop %v5987
    %v6523 = vtanh.pop %v6108
    %v6524 = vtanh.pop %v6110
    %v6525 = vxor.u32 %v6231, 2147483648
    %v6526 = vxor.u32 %v6233, 2147483648
    %v6527 = vxor.u32 %v6354, 2147483648
    %v6528 = vxor.u32 %v6356, 2147483648
    %v6529 = vxor.u32 %v6477, 2147483648
    %v6530 = vxor.u32 %v6479, 2147483648
    %v6531 = vmul.f32 %v6525, 1.442695
    %v6532 = vpow.pop %v6531
    %v6533 = vmul.f32 %v6526, 1.442695
    %v6534 = vpow.pop %v6533
    %v6535 = vmul.f32 %v6527, 1.442695
    %v6536 = vpow.pop %v6535
    %v6537 = vmul.f32 %v6528, 1.442695
    %v6538 = vpow.pop %v6537
    %v6539 = vmul.f32 %v6529, 1.442695
    %v6540 = vpow.pop %v6539
    %v6541 = vmul.f32 %v6530, 1.442695
    %v6542 = vpow.pop %v6541
    %v6543 = vadd.f32 %v6532, 1.0
    %v6544 = vadd.f32 %v6534, 1.0
    %v6545 = vadd.f32 %v6536, 1.0
    %v6546 = vadd.f32 %v6538, 1.0
    %v6547 = vadd.f32 %v6540, 1.0
    %v6548 = vadd.f32 %v6542, 1.0
    %v6549 = vrcp.pop %v6543
    %v6550 = vmul.f32 1.0, %v6549
    %v6551 = vrcp.pop %v6544
    %v6552 = vmul.f32 1.0, %v6551
    %v6553 = vrcp.pop %v6545
    %v6554 = vmul.f32 1.0, %v6553
    %v6555 = vrcp.pop %v6546
    %v6556 = vmul.f32 1.0, %v6555
    %v6557 = vrcp.pop %v6547
    %v6558 = vmul.f32 1.0, %v6557
    %v6559 = vrcp.pop %v6548
    %v6560 = vmul.f32 1.0, %v6559
    %v6561 = vmul.f32 %v6508, %v6519
    %v6562 = vmul.f32 %v6510, %v6520
    %v6563 = vmul.f32 %v6512, %v6521
    %v6564 = vmul.f32 %v6514, %v6522
    %v6565 = vmul.f32 %v6516, %v6523
    %v6566 = vmul.f32 %v6518, %v6524
    %v6567 = vtanh.pop %v6561
    %v6568 = vtanh.pop %v6562
    %v6569 = vtanh.pop %v6563
    %v6570 = vtanh.pop %v6564
    %v6571 = vtanh.pop %v6565
    %v6572 = vtanh.pop %v6566
    %v6573 = vmul.f32 %v6550, %v6567
    %v6574 = vmul.f32 %v6552, %v6568
    %v6575 = vmul.f32 %v6554, %v6569
    %v6576 = vmul.f32 %v6556, %v6570
    %v6577 = vmul.f32 %v6558, %v6571
    %v6578 = vmul.f32 %v6560, %v6572
    %v6579 = vpack.c.bf16 %v6573, %v6573
    %v6580 = vpack.c.bf16 %v6574, %v6574
    %v6581 = vpack.c.bf16 %v6575, %v6575
    %v6582 = vpack.c.bf16 %v6576, %v6576
    %v6583 = vpack.c.bf16 %v6577, %v6577
    %v6584 = vpack.c.bf16 %v6578, %v6578
    %v6585 = vld [vmem:[#allocation8] sm:$0xf]
    %v6586 = vld [vmem:[#allocation8 + $0x4] sm:$0xf]
    %v6587 = vld [vmem:[#allocation8 + $0x8] sm:$0xf]
    %v6588 = vld [vmem:[#allocation8 + $0xc] sm:$0xf]
    %v6589 = vld [vmem:[#allocation8 + $0x10] sm:$0xf]
    %v6590 = vld [vmem:[#allocation8 + $0x14] sm:$0xf]
    %v6591 = vld [vmem:[#allocation8 + $0x18] sm:$0xf]
    %v6592 = vld [vmem:[#allocation8 + $0x1c] sm:$0xf]
    %v6593 = vld [vmem:[#allocation8 + $0x20] sm:$0xf]
    %v6594 = vld [vmem:[#allocation8 + $0x24] sm:$0xf]
    %v6595 = vld [vmem:[#allocation8 + $0x28] sm:$0xf]
    %v6596 = vld [vmem:[#allocation8 + $0x2c] sm:$0xf]
    %v6597 = vld [vmem:[#allocation8 + $0x30] sm:$0xf]
    %v6598 = vld [vmem:[#allocation8 + $0x34] sm:$0xf]
    %v6599 = vld [vmem:[#allocation8 + $0x38] sm:$0xf]
    %v6600 = vld [vmem:[#allocation8 + $0x3c] sm:$0xf]
    %v6601 = vld [vmem:[#allocation8 + $0x40] sm:$0xf]
    %v6602 = vld [vmem:[#allocation8 + $0x44] sm:$0xf]
    %v6603 = vld [vmem:[#allocation8 + $0x48] sm:$0xf]
    %v6604 = vld [vmem:[#allocation8 + $0x4c] sm:$0xf]
    %v6605 = vld [vmem:[#allocation8 + $0x50] sm:$0xf]
    %v6606 = vld [vmem:[#allocation8 + $0x54] sm:$0xf]
    %v6607 = vld [vmem:[#allocation8 + $0x58] sm:$0xf]
    %v6608 = vld [vmem:[#allocation8 + $0x5c] sm:$0xf]
    %v6609 = vld [vmem:[#allocation8 + $0x60] sm:$0xf]
    %v6610 = vld [vmem:[#allocation8 + $0x64] sm:$0xf]
    %v6611 = vld [vmem:[#allocation8 + $0x68] sm:$0xf]
    %v6612 = vld [vmem:[#allocation8 + $0x6c] sm:$0xf]
    %v6613 = vld [vmem:[#allocation8 + $0x70] sm:$0xf]
    %v6614 = vld [vmem:[#allocation8 + $0x74] sm:$0xf]
    %v6615 = vld [vmem:[#allocation8 + $0x78] sm:$0xf]
    %v6616 = vld [vmem:[#allocation8 + $0x7c] sm:$0xf]
    %v6617 = vld [vmem:[#allocation8 + $0x80] sm:$0xf]
    %v6618 = vld [vmem:[#allocation8 + $0x84] sm:$0xf]
    %v6619 = vld [vmem:[#allocation8 + $0x88] sm:$0xf]
    %v6620 = vld [vmem:[#allocation8 + $0x8c] sm:$0xf]
    %v6621 = vld [vmem:[#allocation8 + $0x90] sm:$0xf]
    %v6622 = vld [vmem:[#allocation8 + $0x94] sm:$0xf]
    %v6623 = vld [vmem:[#allocation8 + $0x98] sm:$0xf]
    %v6624 = vld [vmem:[#allocation8 + $0x9c] sm:$0xf]
    %v6625 = vld [vmem:[#allocation8 + $0xa0] sm:$0xf]
    %v6626 = vld [vmem:[#allocation8 + $0xa4] sm:$0xf]
    %v6627 = vld [vmem:[#allocation8 + $0xa8] sm:$0xf]
    %v6628 = vld [vmem:[#allocation8 + $0xac] sm:$0xf]
    %v6629 = vld [vmem:[#allocation8 + $0xb0] sm:$0xf]
    %v6630 = vld [vmem:[#allocation8 + $0xb4] sm:$0xf]
    %v6631 = vld [vmem:[#allocation8 + $0xb8] sm:$0xf]
    %v6632 = vld [vmem:[#allocation8 + $0xbc] sm:$0xf]
    %v6633 = vld [vmem:[#allocation8 + $0xc0] sm:$0xf]
    %v6634 = vld [vmem:[#allocation8 + $0xc4] sm:$0xf]
    %v6635 = vld [vmem:[#allocation8 + $0xc8] sm:$0xf]
    %v6636 = vld [vmem:[#allocation8 + $0xcc] sm:$0xf]
    %v6637 = vld [vmem:[#allocation8 + $0xd0] sm:$0xf]
    %v6638 = vld [vmem:[#allocation8 + $0xd4] sm:$0xf]
    %v6639 = vld [vmem:[#allocation8 + $0xd8] sm:$0xf]
    %v6640 = vld [vmem:[#allocation8 + $0xdc] sm:$0xf]
    %v6641 = vld [vmem:[#allocation8 + $0xe0] sm:$0xf]
    %v6642 = vld [vmem:[#allocation8 + $0xe4] sm:$0xf]
    %v6643 = vld [vmem:[#allocation8 + $0xe8] sm:$0xf]
    %v6644 = vld [vmem:[#allocation8 + $0xec] sm:$0xf]
    %v6645 = vld [vmem:[#allocation8 + $0xf0] sm:$0xf]
    %v6646 = vld [vmem:[#allocation8 + $0xf4] sm:$0xf]
    %v6647 = vld [vmem:[#allocation8 + $0xf8] sm:$0xf]
    %v6648 = vld [vmem:[#allocation8 + $0xfc] sm:$0xf]
    %v6649 = vld [vmem:[#allocation8 + $0x100] sm:$0xf]
    %v6650 = vld [vmem:[#allocation8 + $0x104] sm:$0xf]
    %v6651 = vld [vmem:[#allocation8 + $0x108] sm:$0xf]
    %v6652 = vld [vmem:[#allocation8 + $0x10c] sm:$0xf]
    %v6653 = vld [vmem:[#allocation8 + $0x110] sm:$0xf]
    %v6654 = vld [vmem:[#allocation8 + $0x114] sm:$0xf]
    %v6655 = vld [vmem:[#allocation8 + $0x118] sm:$0xf]
    %v6656 = vld [vmem:[#allocation8 + $0x11c] sm:$0xf]
    %v6657 = vld [vmem:[#allocation8 + $0x120] sm:$0xf]
    %v6658 = vld [vmem:[#allocation8 + $0x124] sm:$0xf]
    %v6659 = vld [vmem:[#allocation8 + $0x128] sm:$0xf]
    %v6660 = vld [vmem:[#allocation8 + $0x12c] sm:$0xf]
    %v6661 = vld [vmem:[#allocation8 + $0x130] sm:$0xf]
    %v6662 = vld [vmem:[#allocation8 + $0x134] sm:$0xf]
    %v6663 = vld [vmem:[#allocation8 + $0x138] sm:$0xf]
    %v6664 = vld [vmem:[#allocation8 + $0x13c] sm:$0xf]
    %v6665 = vld [vmem:[#allocation8 + $0x140] sm:$0xf]
    %v6666 = vld [vmem:[#allocation8 + $0x144] sm:$0xf]
    %v6667 = vld [vmem:[#allocation8 + $0x148] sm:$0xf]
    %v6668 = vld [vmem:[#allocation8 + $0x14c] sm:$0xf]
    %v6669 = vld [vmem:[#allocation8 + $0x150] sm:$0xf]
    %v6670 = vld [vmem:[#allocation8 + $0x154] sm:$0xf]
    %v6671 = vld [vmem:[#allocation8 + $0x158] sm:$0xf]
    %v6672 = vld [vmem:[#allocation8 + $0x15c] sm:$0xf]
    %v6673 = vld [vmem:[#allocation8 + $0x160] sm:$0xf]
    %v6674 = vld [vmem:[#allocation8 + $0x164] sm:$0xf]
    %v6675 = vld [vmem:[#allocation8 + $0x168] sm:$0xf]
    %v6676 = vld [vmem:[#allocation8 + $0x16c] sm:$0xf]
    %v6677 = vld [vmem:[#allocation8 + $0x170] sm:$0xf]
    %v6678 = vld [vmem:[#allocation8 + $0x174] sm:$0xf]
    %v6679 = vld [vmem:[#allocation8 + $0x178] sm:$0xf]
    %v6680 = vld [vmem:[#allocation8 + $0x17c] sm:$0xf]
    %v6681 = vld [vmem:[#allocation10] sm:$0x1]
    %v6683 = vlaneseq
    %v6684 = vshrl.u32 %v6683, 7
    %v6685 = vsub.s32 0, %v6684
    %v6686 = vrot.slane %v6681, %v6685
    %v6784 = vunpack.c.l.b16 %v6585
    %v6785 = vunpack.c.l.b16 %v6586
    %v6786 = vunpack.c.l.b16 %v6587
    %v6787 = vunpack.c.l.b16 %v6588
    %v6788 = vunpack.c.l.b16 %v6589
    %v6789 = vunpack.c.l.b16 %v6590
    %v6790 = vunpack.c.l.b16 %v6591
    %v6791 = vunpack.c.l.b16 %v6592
    %v6792 = vunpack.c.l.b16 %v6593
    %v6793 = vunpack.c.l.b16 %v6594
    %v6794 = vunpack.c.l.b16 %v6595
    %v6795 = vunpack.c.l.b16 %v6596
    %v6796 = vunpack.c.l.b16 %v6597
    %v6797 = vunpack.c.l.b16 %v6598
    %v6798 = vunpack.c.l.b16 %v6599
    %v6799 = vunpack.c.l.b16 %v6600
    %v6800 = vunpack.c.l.b16 %v6601
    %v6801 = vunpack.c.l.b16 %v6602
    %v6802 = vunpack.c.l.b16 %v6603
    %v6803 = vunpack.c.l.b16 %v6604
    %v6804 = vunpack.c.l.b16 %v6605
    %v6805 = vunpack.c.l.b16 %v6606
    %v6806 = vunpack.c.l.b16 %v6607
    %v6807 = vunpack.c.l.b16 %v6608
    %v6808 = vunpack.c.l.b16 %v6609
    %v6809 = vunpack.c.l.b16 %v6610
    %v6810 = vunpack.c.l.b16 %v6611
    %v6811 = vunpack.c.l.b16 %v6612
    %v6812 = vunpack.c.l.b16 %v6613
    %v6813 = vunpack.c.l.b16 %v6614
    %v6814 = vunpack.c.l.b16 %v6615
    %v6815 = vunpack.c.l.b16 %v6616
    %v6816 = vunpack.c.l.b16 %v6617
    %v6817 = vunpack.c.l.b16 %v6618
    %v6818 = vunpack.c.l.b16 %v6619
    %v6819 = vunpack.c.l.b16 %v6620
    %v6820 = vunpack.c.l.b16 %v6621
    %v6821 = vunpack.c.l.b16 %v6622
    %v6822 = vunpack.c.l.b16 %v6623
    %v6823 = vunpack.c.l.b16 %v6624
    %v6824 = vunpack.c.l.b16 %v6625
    %v6825 = vunpack.c.l.b16 %v6626
    %v6826 = vunpack.c.l.b16 %v6627
    %v6827 = vunpack.c.l.b16 %v6628
    %v6828 = vunpack.c.l.b16 %v6629
    %v6829 = vunpack.c.l.b16 %v6630
    %v6830 = vunpack.c.l.b16 %v6631
    %v6831 = vunpack.c.l.b16 %v6632
    %v6832 = vunpack.c.l.b16 %v6633
    %v6833 = vunpack.c.l.b16 %v6634
    %v6834 = vunpack.c.l.b16 %v6635
    %v6835 = vunpack.c.l.b16 %v6636
    %v6836 = vunpack.c.l.b16 %v6637
    %v6837 = vunpack.c.l.b16 %v6638
    %v6838 = vunpack.c.l.b16 %v6639
    %v6839 = vunpack.c.l.b16 %v6640
    %v6840 = vunpack.c.l.b16 %v6641
    %v6841 = vunpack.c.l.b16 %v6642
    %v6842 = vunpack.c.l.b16 %v6643
    %v6843 = vunpack.c.l.b16 %v6644
    %v6844 = vunpack.c.l.b16 %v6645
    %v6845 = vunpack.c.l.b16 %v6646
    %v6846 = vunpack.c.l.b16 %v6647
    %v6847 = vunpack.c.l.b16 %v6648
    %v6848 = vunpack.c.l.b16 %v6649
    %v6849 = vunpack.c.l.b16 %v6650
    %v6850 = vunpack.c.l.b16 %v6651
    %v6851 = vunpack.c.l.b16 %v6652
    %v6852 = vunpack.c.l.b16 %v6653
    %v6853 = vunpack.c.l.b16 %v6654
    %v6854 = vunpack.c.l.b16 %v6655
    %v6855 = vunpack.c.l.b16 %v6656
    %v6856 = vunpack.c.l.b16 %v6657
    %v6857 = vunpack.c.l.b16 %v6658
    %v6858 = vunpack.c.l.b16 %v6659
    %v6859 = vunpack.c.l.b16 %v6660
    %v6860 = vunpack.c.l.b16 %v6661
    %v6861 = vunpack.c.l.b16 %v6662
    %v6862 = vunpack.c.l.b16 %v6663
    %v6863 = vunpack.c.l.b16 %v6664
    %v6864 = vunpack.c.l.b16 %v6665
    %v6865 = vunpack.c.l.b16 %v6666
    %v6866 = vunpack.c.l.b16 %v6667
    %v6867 = vunpack.c.l.b16 %v6668
    %v6868 = vunpack.c.l.b16 %v6669
    %v6869 = vunpack.c.l.b16 %v6670
    %v6870 = vunpack.c.l.b16 %v6671
    %v6871 = vunpack.c.l.b16 %v6672
    %v6872 = vunpack.c.l.b16 %v6673
    %v6873 = vunpack.c.l.b16 %v6674
    %v6874 = vunpack.c.l.b16 %v6675
    %v6875 = vunpack.c.l.b16 %v6676
    %v6876 = vunpack.c.l.b16 %v6677
    %v6877 = vunpack.c.l.b16 %v6678
    %v6878 = vunpack.c.l.b16 %v6679
    %v6879 = vunpack.c.l.b16 %v6680
    %v6880 = vpack.c.b16 %v6785, %v6784
    %v6881 = vpack.c.b16 %v6787, %v6786
    %v6882 = vpack.c.b16 %v6789, %v6788
    %v6883 = vpack.c.b16 %v6791, %v6790
    %v6884 = vpack.c.b16 %v6793, %v6792
    %v6885 = vpack.c.b16 %v6795, %v6794
    %v6886 = vpack.c.b16 %v6797, %v6796
    %v6887 = vpack.c.b16 %v6799, %v6798
    %v6888 = vpack.c.b16 %v6801, %v6800
    %v6889 = vpack.c.b16 %v6803, %v6802
    %v6890 = vpack.c.b16 %v6805, %v6804
    %v6891 = vpack.c.b16 %v6807, %v6806
    %v6892 = vpack.c.b16 %v6809, %v6808
    %v6893 = vpack.c.b16 %v6811, %v6810
    %v6894 = vpack.c.b16 %v6813, %v6812
    %v6895 = vpack.c.b16 %v6815, %v6814
    %v6896 = vpack.c.b16 %v6817, %v6816
    %v6897 = vpack.c.b16 %v6819, %v6818
    %v6898 = vpack.c.b16 %v6821, %v6820
    %v6899 = vpack.c.b16 %v6823, %v6822
    %v6900 = vpack.c.b16 %v6825, %v6824
    %v6901 = vpack.c.b16 %v6827, %v6826
    %v6902 = vpack.c.b16 %v6829, %v6828
    %v6903 = vpack.c.b16 %v6831, %v6830
    %v6904 = vpack.c.b16 %v6833, %v6832
    %v6905 = vpack.c.b16 %v6835, %v6834
    %v6906 = vpack.c.b16 %v6837, %v6836
    %v6907 = vpack.c.b16 %v6839, %v6838
    %v6908 = vpack.c.b16 %v6841, %v6840
    %v6909 = vpack.c.b16 %v6843, %v6842
    %v6910 = vpack.c.b16 %v6845, %v6844
    %v6911 = vpack.c.b16 %v6847, %v6846
    %v6912 = vpack.c.b16 %v6849, %v6848
    %v6913 = vpack.c.b16 %v6851, %v6850
    %v6914 = vpack.c.b16 %v6853, %v6852
    %v6915 = vpack.c.b16 %v6855, %v6854
    %v6916 = vpack.c.b16 %v6857, %v6856
    %v6917 = vpack.c.b16 %v6859, %v6858
    %v6918 = vpack.c.b16 %v6861, %v6860
    %v6919 = vpack.c.b16 %v6863, %v6862
    %v6920 = vpack.c.b16 %v6865, %v6864
    %v6921 = vpack.c.b16 %v6867, %v6866
    %v6922 = vpack.c.b16 %v6869, %v6868
    %v6923 = vpack.c.b16 %v6871, %v6870
    %v6924 = vpack.c.b16 %v6873, %v6872
    %v6925 = vpack.c.b16 %v6875, %v6874
    %v6926 = vpack.c.b16 %v6877, %v6876
    %v6927 = vpack.c.b16 %v6879, %v6878
    %6976 = vmatprep.subr.bf16.mxu0 0
    %6977 = vmatpush1.bf16.msra.mxu0 %v6887
    %6978 = vmatprep.subr.bf16.mxu0 0
    %6979 = vmatpush1.bf16.msra.mxu0 %v6886
    %6980 = vmatprep.subr.bf16.mxu0 0
    %6981 = vmatpush1.bf16.msra.mxu0 %v6885
    %6982 = vmatprep.subr.bf16.mxu0 0
    %6983 = vmatpush1.bf16.msra.mxu0 %v6884
    %6984 = vmatprep.subr.bf16.mxu0 0
    %6985 = vmatpush1.bf16.msra.mxu0 %v6883
    %6986 = vmatprep.subr.bf16.mxu0 0
    %6987 = vmatpush1.bf16.msra.mxu0 %v6882
    %6988 = vmatprep.subr.bf16.mxu0 0
    %6989 = vmatpush1.bf16.msra.mxu0 %v6881
    %6990 = vmatprep.subr.bf16.mxu0 0
    %6991 = vmatpush1.bf16.msra.mxu0 %v6880
    %6992 = vmatprep.subr.bf16.mxu0 0
    %6993 = vmatpush2.bf16.msra.mxu0 %v6895
    %6994 = vmatprep.subr.bf16.mxu0 0
    %6995 = vmatpush2.bf16.msra.mxu0 %v6894
    %6996 = vmatprep.subr.bf16.mxu0 0
    %6997 = vmatpush2.bf16.msra.mxu0 %v6893
    %6998 = vmatprep.subr.bf16.mxu0 0
    %6999 = vmatpush2.bf16.msra.mxu0 %v6892
    %7000 = vmatprep.subr.bf16.mxu0 0
    %7001 = vmatpush2.bf16.msra.mxu0 %v6891
    %7002 = vmatprep.subr.bf16.mxu0 0
    %7003 = vmatpush2.bf16.msra.mxu0 %v6890
    %7004 = vmatprep.subr.bf16.mxu0 0
    %7005 = vmatpush2.bf16.msra.mxu0 %v6889
    %7006 = vmatprep.subr.bf16.mxu0 0
    %7007 = vmatpush2.bf16.msra.mxu0 %v6888
    %7008 = vmatprep.mubr.bf16.mxu0 %v6580
    %7009 = vmatmul.mubr.bf16.gmra.mxu0 %v6579
    %v7010 = vpop.f32.mrf.mxu0
    %v7011 = vadd.f32 %v6686, %v7010
    %v7012 = vpop.f32.mrf.mxu0
    %v7013 = vpop.f32.mrf.mxu0
    %v7014 = vpop.f32.mrf.mxu0
    %7015 = vdwg.mxu0
    %7016 = vmatprep.subr.bf16.mxu0 0
    %7017 = vmatpush1.bf16.msra.mxu0 %v6903
    %7018 = vmatprep.subr.bf16.mxu0 0
    %7019 = vmatpush1.bf16.msra.mxu0 %v6902
    %7020 = vmatprep.subr.bf16.mxu0 0
    %7021 = vmatpush1.bf16.msra.mxu0 %v6901
    %7022 = vmatprep.subr.bf16.mxu0 0
    %7023 = vmatpush1.bf16.msra.mxu0 %v6900
    %7024 = vmatprep.subr.bf16.mxu0 0
    %7025 = vmatpush1.bf16.msra.mxu0 %v6899
    %7026 = vmatprep.subr.bf16.mxu0 0
    %7027 = vmatpush1.bf16.msra.mxu0 %v6898
    %7028 = vmatprep.subr.bf16.mxu0 0
    %7029 = vmatpush1.bf16.msra.mxu0 %v6897
    %7030 = vmatprep.subr.bf16.mxu0 0
    %7031 = vmatpush1.bf16.msra.mxu0 %v6896
    %7032 = vmatprep.subr.bf16.mxu0 0
    %7033 = vmatpush2.bf16.msra.mxu0 %v6911
    %7034 = vmatprep.subr.bf16.mxu0 0
    %7035 = vmatpush2.bf16.msra.mxu0 %v6910
    %7036 = vmatprep.subr.bf16.mxu0 0
    %7037 = vmatpush2.bf16.msra.mxu0 %v6909
    %7038 = vmatprep.subr.bf16.mxu0 0
    %7039 = vmatpush2.bf16.msra.mxu0 %v6908
    %7040 = vmatprep.subr.bf16.mxu0 0
    %7041 = vmatpush2.bf16.msra.mxu0 %v6907
    %7042 = vmatprep.subr.bf16.mxu0 0
    %7043 = vmatpush2.bf16.msra.mxu0 %v6906
    %7044 = vmatprep.subr.bf16.mxu0 0
    %7045 = vmatpush2.bf16.msra.mxu0 %v6905
    %7046 = vmatprep.subr.bf16.mxu0 0
    %7047 = vmatpush2.bf16.msra.mxu0 %v6904
    %7048 = vmatprep.mubr.bf16.mxu0 %v6582
    %7049 = vmatmul.mubr.bf16.gmra.mxu0 %v6581
    %v7050 = vpop.f32.mrf.mxu0
    %v7051 = vadd.f32 %v7011, %v7050
    %v7052 = vpop.f32.mrf.mxu0
    %v7053 = vpop.f32.mrf.mxu0
    %v7054 = vpop.f32.mrf.mxu0
    %7055 = vdwg.mxu0
    %7056 = vmatprep.subr.bf16.mxu0 0
    %7057 = vmatpush1.bf16.msra.mxu0 %v6919
    %7058 = vmatprep.subr.bf16.mxu0 0
    %7059 = vmatpush1.bf16.msra.mxu0 %v6918
    %7060 = vmatprep.subr.bf16.mxu0 0
    %7061 = vmatpush1.bf16.msra.mxu0 %v6917
    %7062 = vmatprep.subr.bf16.mxu0 0
    %7063 = vmatpush1.bf16.msra.mxu0 %v6916
    %7064 = vmatprep.subr.bf16.mxu0 0
    %7065 = vmatpush1.bf16.msra.mxu0 %v6915
    %7066 = vmatprep.subr.bf16.mxu0 0
    %7067 = vmatpush1.bf16.msra.mxu0 %v6914
    %7068 = vmatprep.subr.bf16.mxu0 0
    %7069 = vmatpush1.bf16.msra.mxu0 %v6913
    %7070 = vmatprep.subr.bf16.mxu0 0
    %7071 = vmatpush1.bf16.msra.mxu0 %v6912
    %7072 = vmatprep.subr.bf16.mxu0 0
    %7073 = vmatpush2.bf16.msra.mxu0 %v6927
    %7074 = vmatprep.subr.bf16.mxu0 0
    %7075 = vmatpush2.bf16.msra.mxu0 %v6926
    %7076 = vmatprep.subr.bf16.mxu0 0
    %7077 = vmatpush2.bf16.msra.mxu0 %v6925
    %7078 = vmatprep.subr.bf16.mxu0 0
    %7079 = vmatpush2.bf16.msra.mxu0 %v6924
    %7080 = vmatprep.subr.bf16.mxu0 0
    %7081 = vmatpush2.bf16.msra.mxu0 %v6923
    %7082 = vmatprep.subr.bf16.mxu0 0
    %7083 = vmatpush2.bf16.msra.mxu0 %v6922
    %7084 = vmatprep.subr.bf16.mxu0 0
    %7085 = vmatpush2.bf16.msra.mxu0 %v6921
    %7086 = vmatprep.subr.bf16.mxu0 0
    %7087 = vmatpush2.bf16.msra.mxu0 %v6920
    %7088 = vmatprep.mubr.bf16.mxu0 %v6584
    %7089 = vmatmul.mubr.bf16.gmra.mxu0 %v6583
    %v7090 = vpop.f32.mrf.mxu0
    %v7091 = vadd.f32 %v7051, %v7090
    %v7092 = vpop.f32.mrf.mxu0
    %v7093 = vpop.f32.mrf.mxu0
    %v7094 = vpop.f32.mrf.mxu0
    %7095 = vdwg.mxu0
    %7096 = vst [vmem:[#allocation11] sm:$0xff] %v7091
    // Predicated region
    $region42: #{tpu_custom_call.1} parent=1 // pred_check
      _
    $region43: #{tpu_custom_call.1} parent=1 // pred_check_branch
      %7098 = sbr.rel (0) target = $region45
    $region44: #{tpu_custom_call.1} parent=1 // pred_region
      %s7100 = ssub.s32 128, 128
      %7101 = vsyncadd [#allocation4], %s7100
      %s7103 = sshll.u32 [#allocation11], 4
      %s7104 = int_to_ptr.vmem [resolvable:$true] %s7103
      %7106 = dma.vmem_to_hbm [thread:$0]  %s7104, 128, %s5, [#allocation4]
    $region45: #{tpu_custom_call.1} parent=1 // pred_fallthru
      _
    // Predicated region
    $region46: #{tpu_custom_call.1} parent=1 // pred_check
      _
    $region47: #{tpu_custom_call.1} parent=1 // pred_check_branch
      %7108 = sbr.rel (0) target = $region49
    $region48: #{tpu_custom_call.1} parent=1 // pred_region
      %7109 = dma.done [#allocation4], 128
    $region49: #{tpu_custom_call.1} parent=1 // pred_fallthru
      _
    %7110 = vsyncpa [#allocation3], 1
    %7111 = vsyncpa [#allocation6], 1
    %7112 = vsyncpa [#allocation9], 1
    %7113 = vsyncpa [#allocation4], 1

</llo_original>
